<compile_context>
chip_gen: v7x
topology: tpu7x:2x2x1
jax: 0.10.0
libtpu: 0.0.40
codegen_flags: <defaults>
</compile_context>

<pallas_src>
import jax
import jax.numpy as jnp
import numpy as np
from jax.experimental import pallas as pl
from jax.experimental.pallas import tpu as pltpu

_LANE = 128


# ------------------------------ small helpers ------------------------------ #

def _round_up(x, m):
    return (x + m - 1) // m * m


def _pad_to(arr, shape):
    return jnp.pad(arr, [(0, t - s) for s, t in zip(arr.shape, shape)])


def _fold_bn(gamma, beta, mean, var, eps=1e-5):
    scale = gamma / jnp.sqrt(var + eps)
    bias = beta - mean * scale
    return scale, bias


def _tpu_defaults():
    """Generation-gated (TM, scoped-VMEM-budget).  Conservative fallback."""
    try:
        info = pltpu.get_tpu_info()
        vmem_cap = int(getattr(info, "vmem_capacity_bytes", 0))
    except Exception:
        vmem_cap = 0
    if vmem_cap >= 100 * 1024 * 1024:        # v5e / v6e: 128 MiB physical VMEM
        return 512, 64 * 1024 * 1024
    return 256, 32 * 1024 * 1024             # v7x-class (64 MiB / TC) or unknown


def _pick_tn(cout):
    """Largest 128-multiple divisor of cout (<=512), or full extent if cout<128."""
    if cout % _LANE != 0:
        return cout
    for t in (512, 384, 256, 128):
        if cout % t == 0:
            return t
    return _LANE


def _pick_th(h):
    """Largest divisor of H that is <= 8 (row-tile height for conv2)."""
    for t in range(min(8, h), 0, -1):
        if h % t == 0:
            return t
    return 1


# ----------------------------- Pallas kernels ------------------------------ #

def _mm_bias_relu_kernel(x_ref, w_ref, b_ref, o_ref):
    # y = relu(x @ w_folded + bias)          (BN scale pre-folded into w)
    acc = jnp.dot(x_ref[...], w_ref[...], preferred_element_type=jnp.float32)
    o_ref[...] = jnp.maximum(acc + b_ref[...], 0.0).astype(o_ref.dtype)


def _mm_bias_add_relu_kernel(x_ref, w_ref, b_ref, r_ref, o_ref):
    # y = relu(x @ w_folded + bias + residual)   (f32 math, bf16 store)
    acc = jnp.dot(x_ref[...], w_ref[...], preferred_element_type=jnp.float32)
    y = acc + b_ref[...] + r_ref[...].astype(jnp.float32)
    o_ref[...] = jnp.maximum(y, 0.0).astype(o_ref.dtype)


def _conv3x3_kernel(x_ref, w_ref, b_ref, o_ref, halo_ref, acc_ref):
    # 3x3 conv, stride 1, pad 1, over one (TH, W) output-row tile.
    #   x_ref   : (H, W, C)    resident input image (this batch element)
    #   w_ref   : (3, 3, C, Co) folded weights
    #   b_ref   : (1, Co)       folded BN bias (f32)
    #   o_ref   : (TH, W, Co)   output row tile
    #   halo_ref: (TH+2, W, C)  bf16 scratch (zero rows at image boundary)
    #   acc_ref : (TH*W, Co)    f32 accumulator scratch
    i = pl.program_id(1)
    nt = pl.num_programs(1)
    TH, W, Co = o_ref.shape
    H, _, C = x_ref.shape
    r0 = i * TH

    # Assemble the halo slab: rows 1..TH are the tile's rows, rows 0 / TH+1 are
    # the neighbours (or zeros at the image boundary -> implements padding=1 in H).
    halo_ref[pl.ds(1, TH)] = x_ref[pl.ds(r0, TH)]
    top = x_ref[jnp.maximum(r0 - 1, 0)]
    halo_ref[0] = jnp.where(i > 0, top, jnp.zeros_like(top))
    bot = x_ref[jnp.minimum(r0 + TH, H - 1)]
    halo_ref[TH + 1] = jnp.where(i < nt - 1, bot, jnp.zeros_like(bot))

    rows = halo_ref[...]                                    # (TH+2, W, C)
    # W-shifted copies built once per tile (padding=1 in W): x[.., w-1] / x[.., w+1].
    zcol = jnp.zeros((TH + 2, 1, C), rows.dtype)
    x_m1 = jnp.concatenate([zcol, rows[:, :W - 1, :]], axis=1)
    x_p1 = jnp.concatenate([rows[:, 1:, :], zcol], axis=1)

    # 9-tap shift-and-accumulate: only free leading-row slices per ky, all MXU.
    for ky in range(3):
        lhs_m = x_m1[ky:ky + TH].reshape(TH * W, C)
        lhs_c = rows[ky:ky + TH].reshape(TH * W, C)
        lhs_p = x_p1[ky:ky + TH].reshape(TH * W, C)
        part = (jnp.dot(lhs_m, w_ref[ky, 0], preferred_element_type=jnp.float32)
                + jnp.dot(lhs_c, w_ref[ky, 1], preferred_element_type=jnp.float32)
                + jnp.dot(lhs_p, w_ref[ky, 2], preferred_element_type=jnp.float32))
        if ky == 0:
            acc_ref[...] = part
        else:
            acc_ref[...] += part

    y = jnp.maximum(acc_ref[...] + b_ref[...], 0.0)
    o_ref[...] = y.reshape(TH, W, Co).astype(o_ref.dtype)


# ----------------------------- kernel wrappers ------------------------------ #

def _matmul_bias_act(x2d, w2d, bias, residual=None, out_dtype=jnp.bfloat16,
                     tm=256, vmem_limit=32 * 1024 * 1024):
    """x2d: (M, K) bf16, w2d: (K, Cout) scale-folded bf16, bias: (1, Cout) f32,
    residual: (M, Cout) bf16 or None."""
    M, K = x2d.shape
    Cout = w2d.shape[1]

    TM = tm if M >= tm else _round_up(M, 16)   # keep bf16 sublanes fully packed
    Mp = _round_up(M, TM)
    TN = _pick_tn(Cout)

    if Mp != M:
        x2d = _pad_to(x2d, (Mp, K))
        if residual is not None:
            residual = _pad_to(residual, (Mp, Cout))

    # Weight block index varies slowest -> folded weights stay VMEM-resident
    # across the whole M sweep (no redundant weight DMA).
    grid = (Cout // TN, Mp // TM)

    in_specs = [
        pl.BlockSpec((TM, K), lambda j, i: (i, 0)),
        pl.BlockSpec((K, TN), lambda j, i: (0, j)),
        pl.BlockSpec((1, TN), lambda j, i: (0, j)),
    ]
    args = [x2d, w2d, bias]
    if residual is None:
        kernel = _mm_bias_relu_kernel
    else:
        kernel = _mm_bias_add_relu_kernel
        in_specs.append(pl.BlockSpec((TM, TN), lambda j, i: (i, j)))
        args.append(residual)

    bytes_accessed = (x2d.size * x2d.dtype.itemsize
                      + w2d.size * w2d.dtype.itemsize
                      + bias.size * bias.dtype.itemsize
                      + Mp * Cout * jnp.dtype(out_dtype).itemsize)
    if residual is not None:
        bytes_accessed += residual.size * residual.dtype.itemsize
    cost = pl.CostEstimate(flops=2 * Mp * K * Cout, transcendentals=0,
                           bytes_accessed=int(bytes_accessed))

    out = pl.pallas_call(
        kernel,
        out_shape=jax.ShapeDtypeStruct((Mp, Cout), out_dtype),
        grid=grid,
        in_specs=in_specs,
        out_specs=pl.BlockSpec((TM, TN), lambda j, i: (i, j)),
        compiler_params=pltpu.CompilerParams(
            dimension_semantics=("parallel", "parallel"),
            vmem_limit_bytes=vmem_limit),
        cost_estimate=cost,
    )(*args)
    return out[:M] if Mp != M else out


def _conv3x3_bn_relu(x_nhwc, w_taps, bias, out_dtype=jnp.bfloat16,
                     vmem_limit=32 * 1024 * 1024):
    """x_nhwc: (N, H, W, C) bf16, w_taps: (3, 3, C, Co) scale-folded bf16,
    bias: (1, Co) f32.  stride=1, pad=1 handled entirely in-kernel (no XLA pad)."""
    N, H, W, C = x_nhwc.shape
    Co = w_taps.shape[-1]
    TH = _pick_th(H)
    nt = H // TH

    bytes_accessed = (x_nhwc.size * x_nhwc.dtype.itemsize
                      + w_taps.size * w_taps.dtype.itemsize
                      + bias.size * bias.dtype.itemsize
                      + N * H * W * Co * jnp.dtype(out_dtype).itemsize)
    cost = pl.CostEstimate(flops=2 * N * H * W * 9 * C * Co, transcendentals=0,
                           bytes_accessed=int(bytes_accessed))

    return pl.pallas_call(
        _conv3x3_kernel,
        out_shape=jax.ShapeDtypeStruct((N, H, W, Co), out_dtype),
        grid=(N, nt),
        in_specs=[
            # Full image block; block index constant along the row-tile axis so
            # it is DMA'd once per image and stays resident for all row tiles.
            pl.BlockSpec((None, H, W, C), lambda n, i: (n, 0, 0, 0)),
            pl.BlockSpec((3, 3, C, Co), lambda n, i: (0, 0, 0, 0)),
            pl.BlockSpec((1, Co), lambda n, i: (0, 0)),
        ],
        out_specs=pl.BlockSpec((None, TH, W, Co), lambda n, i: (n, i, 0, 0)),
        scratch_shapes=[
            pltpu.VMEM((TH + 2, W, C), x_nhwc.dtype),     # halo slab
            pltpu.VMEM((TH * W, Co), jnp.float32),        # row-tile accumulator
        ],
        compiler_params=pltpu.CompilerParams(
            dimension_semantics=("parallel", "parallel"),
            vmem_limit_bytes=vmem_limit),
        cost_estimate=cost,
    )(x_nhwc, w_taps, bias)


# ------------------------------- forward pass ------------------------------- #

def bottleneck_forward(x_nchw, params, stride=1, eps=1e-5):
    """ResNet Bottleneck forward (downsample=None), NCHW in / NCHW out."""
    if stride != 1:
        # TODO(synk): stride>1 needs the downsample branch (not part of this config).
        raise NotImplementedError("Bottleneck with downsample=None requires stride == 1")

    N, Cin, H, W = x_nchw.shape
    planes = params["w1"].shape[0]
    C4 = 4 * planes
    if Cin != C4:
        raise NotImplementedError("identity residual requires inplanes == 4 * planes")

    tm_default, vmem_limit = _tpu_defaults()

    Cin_p = _round_up(Cin, _LANE)      # 4*planes channel dim, lane-padded
    Cm = planes                        # inner channels kept UNPADDED

    x_nhwc = jnp.transpose(x_nchw, (0, 2, 3, 1)).astype(jnp.float32)
    M = N * H * W
    x2d = _pad_to(x_nhwc.reshape(M, Cin), (M, Cin_p)).astype(jnp.bfloat16)

    # ---- conv1 (1x1) + bn1 + relu ----
    s1, b1 = _fold_bn(*params["bn1"], eps=eps)
    w1 = params["w1"][:, :, 0, 0]                         # (planes, Cin)
    w1f = jnp.transpose(w1 * s1[:, None], (1, 0))         # (Cin, planes), scale folded
    w1f = _pad_to(w1f, (Cin_p, Cm)).astype(jnp.bfloat16)
    b1p = b1.reshape(1, Cm).astype(jnp.float32)
    out1 = _matmul_bias_act(x2d, w1f, b1p, tm=tm_default, vmem_limit=vmem_limit)
    out1 = out1.reshape(N, H, W, Cm)                      # bf16, NHWC

    # ---- conv2 (3x3, stride=1, pad=1) + bn2 + relu : row-tiled in-kernel taps ----
    s2, b2 = _fold_bn(*params["bn2"], eps=eps)
    w2 = jnp.transpose(params["w2"], (2, 3, 1, 0)) * s2[None, None, None, :]  # (3,3,Cin,Cout)
    w2 = w2.astype(jnp.bfloat16)
    b2p = b2.reshape(1, Cm).astype(jnp.float32)
    out2 = _conv3x3_bn_relu(out1, w2, b2p, vmem_limit=vmem_limit)  # (N,H,W,Cm) bf16

    # ---- conv3 (1x1) + bn3 + identity residual + relu ----
    s3, b3 = _fold_bn(*params["bn3"], eps=eps)
    w3 = params["w3"][:, :, 0, 0]                         # (4*planes, planes)
    w3f = jnp.transpose(w3 * s3[:, None], (1, 0))         # (planes, 4*planes), scale folded
    w3f = _pad_to(w3f, (Cm, Cin_p)).astype(jnp.bfloat16)
    b3p = _pad_to(b3.reshape(1, C4), (1, Cin_p)).astype(jnp.float32)
    # NOTE: the identity residual is the bf16, channel-padded copy of x (one
    # extra rounding of the skip path vs the f32 reference; within tolerance).
    out3 = _matmul_bias_act(out2.reshape(M, Cm), w3f, b3p, residual=x2d,
                            out_dtype=jnp.bfloat16, tm=tm_default,
                            vmem_limit=vmem_limit)        # (M, Cin_p) bf16

    out = out3[:, :C4].reshape(N, H, W, C4)
    return jnp.transpose(out, (0, 3, 1, 2)).astype(jnp.float32)   # back to NCHW


# --------------------------- pure-JAX reference ----------------------------- #

def _ref_bottleneck(x, params, stride=1, eps=1e-5):
    def conv(x, w, stride, pad):
        return jax.lax.conv_general_dilated(
            x, w, (stride, stride), [(pad, pad), (pad, pad)],
            dimension_numbers=("NCHW", "OIHW", "NCHW"))

    def bn(y, p):
        g, b, m, v = p
        return (y - m[None, :, None, None]) / jnp.sqrt(v[None, :, None, None] + eps) \
            * g[None, :, None, None] + b[None, :, None, None]

    out = jax.nn.relu(bn(conv(x, params["w1"], 1, 0), params["bn1"]))
    out = jax.nn.relu(bn(conv(out, params["w2"], stride, 1), params["bn2"]))
    out = bn(conv(out, params["w3"], 1, 0), params["bn3"])
    out = out + x
    return jax.nn.relu(out)


# ---------------------------------- main ------------------------------------ #

if __name__ == "__main__":
    # Small shapes consistent with the module: inplanes = planes * expansion so
    # the identity residual (downsample=None) is shape-compatible.
    N, planes, HW = 2, 32, 16
    inplanes = planes * 4          # 128
    stride = 1

    key = jax.random.PRNGKey(0)
    ks = jax.random.split(key, 10)

    def bn_params(k, c):
        k1, k2, k3, k4 = jax.random.split(k, 4)
        gamma = 1.0 + 0.1 * jax.random.normal(k1, (c,), jnp.float32)
        beta = 0.1 * jax.random.normal(k2, (c,), jnp.float32)
        mean = 0.1 * jax.random.normal(k3, (c,), jnp.float32)
        var = jnp.abs(jax.random.normal(k4, (c,), jnp.float32)) + 0.5
        return (gamma, beta, mean, var)

    params = {
        "w1": 0.1 * jax.random.normal(ks[0], (planes, inplanes, 1, 1), jnp.float32),
        "bn1": bn_params(ks[1], planes),
        "w2": 0.1 * jax.random.normal(ks[2], (planes, planes, 3, 3), jnp.float32),
        "bn2": bn_params(ks[3], planes),
        "w3": 0.1 * jax.random.normal(ks[4], (planes * 4, planes, 1, 1), jnp.float32),
        "bn3": bn_params(ks[5], planes * 4),
    }

    x = jax.random.normal(ks[6], (N, inplanes, HW, HW), jnp.float32)

    fwd = jax.jit(bottleneck_forward, static_argnames=("stride",))
    out = jax.block_until_ready(fwd(x, params, stride=stride))

    ref = jax.block_until_ready(_ref_bottleneck(x, params, stride=stride))
    # bf16 activations/weights internally (f32 accumulation) -> relaxed tolerance.
    np.testing.assert_allclose(np.asarray(out), np.asarray(ref), atol=5e-2, rtol=5e-2)

    print("KERNEL_OK")
</pallas_src>

<mosaic_0001>
module attributes {stable_mosaic.version = 11 : i64} {
  func.func @_mm_bias_relu_kernel(%arg0: i32, %arg1: i32, %arg2: memref<256x128xbf16, #tpu.memory_space<vmem>>, %arg3: memref<128x32xbf16, #tpu.memory_space<vmem>>, %arg4: memref<1x32xf32, #tpu.memory_space<vmem>>, %arg5: memref<256x32xbf16, #tpu.memory_space<vmem>>) attributes {dimension_semantics = [#tpu.dimension_semantics<parallel>, #tpu.dimension_semantics<parallel>], iteration_bounds = array<i64: 1, 2>, scalar_prefetch = 0 : i64, scratch_operands = 0 : i64, tpu.core_type = #tpu.core_type<tc>, window_params = [{transform_indices = @transform_0, window_bounds = array<i64: 256, 128>}, {transform_indices = @transform_1, window_bounds = array<i64: 128, 32>}, {transform_indices = @transform_2, window_bounds = array<i64: 1, 32>}, {transform_indices = @transform_3, window_bounds = array<i64: 256, 32>}]} {
    %c0 = arith.constant 0 : index
    %c0_0 = arith.constant 0 : index
    %0 = vector.load %arg2[%c0, %c0_0] : memref<256x128xbf16, #tpu.memory_space<vmem>>, vector<256x128xbf16>
    %c0_1 = arith.constant 0 : index
    %c0_2 = arith.constant 0 : index
    %1 = vector.load %arg3[%c0_1, %c0_2] : memref<128x32xbf16, #tpu.memory_space<vmem>>, vector<128x32xbf16>
    %cst = arith.constant dense<0.000000e+00> : vector<256x32xf32>
    %2 = tpu.matmul %0, %1, %cst {dimension_numbers = #tpu.dot_dimension_numbers<[1], [0], [0], [1], [0, 0, 1, 1], [], []>} : vector<256x128xbf16>, vector<128x32xbf16>, vector<256x32xf32> -> vector<256x32xf32>
    %c0_3 = arith.constant 0 : index
    %c0_4 = arith.constant 0 : index
    %3 = vector.load %arg4[%c0_3, %c0_4] : memref<1x32xf32, #tpu.memory_space<vmem>>, vector<1x32xf32>
    %4 = vector.broadcast %3 : vector<1x32xf32> to vector<256x32xf32>
    %5 = arith.addf %2, %4 : vector<256x32xf32>
    %cst_5 = arith.constant 0.000000e+00 : f32
    %6 = vector.broadcast %cst_5 : f32 to vector<256x32xf32>
    %7 = arith.maximumf %5, %6 : vector<256x32xf32>
    %8 = arith.truncf %7 : vector<256x32xf32> to vector<256x32xbf16>
    %c0_6 = arith.constant 0 : index
    %c0_7 = arith.constant 0 : index
    %9 = vector.load %arg5[%c0_6, %c0_7] : memref<256x32xbf16, #tpu.memory_space<vmem>>, vector<256x32xbf16>
    tpu.vector_store %arg5[%c0_6, %c0_7], %8 {strides = array<i32>} : memref<256x32xbf16, #tpu.memory_space<vmem>>, vector<256x32xbf16>,
    return
  }
  func.func @transform_0(%arg0: i32, %arg1: i32) -> (i32, i32) {
    %c0_i32 = arith.constant 0 : i32
    %c0_i32_0 = arith.constant 0 : i32
    return %arg1, %c0_i32 : i32, i32
  }
  func.func @transform_1(%arg0: i32, %arg1: i32) -> (i32, i32) {
    %c0_i32 = arith.constant 0 : i32
    %c0_i32_0 = arith.constant 0 : i32
    return %c0_i32, %arg0 : i32, i32
  }
  func.func @transform_2(%arg0: i32, %arg1: i32) -> (i32, i32) {
    %c0_i32 = arith.constant 0 : i32
    %c0_i32_0 = arith.constant 0 : i32
    return %c0_i32, %arg0 : i32, i32
  }
  func.func @transform_3(%arg0: i32, %arg1: i32) -> (i32, i32) {
    %c0_i32 = arith.constant 0 : i32
    return %arg1, %arg0 : i32, i32
  }
}

module attributes {stable_mosaic.version = 11 : i64} {
  func.func @_conv3x3_kernel(%arg0: i32, %arg1: i32, %arg2: memref<1x16x16x32xbf16, #tpu.memory_space<vmem>>, %arg3: memref<3x3x32x32xbf16, #tpu.memory_space<vmem>>, %arg4: memref<1x32xf32, #tpu.memory_space<vmem>>, %arg5: memref<1x8x16x32xbf16, #tpu.memory_space<vmem>>, %arg6: memref<10x16x32xbf16, #tpu.memory_space<vmem>>, %arg7: memref<128x32xf32, #tpu.memory_space<vmem>>) attributes {dimension_semantics = [#tpu.dimension_semantics<parallel>, #tpu.dimension_semantics<parallel>], iteration_bounds = array<i64: 2, 2>, scalar_prefetch = 0 : i64, scratch_operands = 2 : i64, tpu.core_type = #tpu.core_type<tc>, window_params = [{transform_indices = @transform_0, window_bounds = array<i64: 1, 16, 16, 32>}, {pipeline_mode = #tpu.pipeline_mode<synchronous>, transform_indices = @transform_1, window_bounds = array<i64: 3, 3, 32, 32>}, {pipeline_mode = #tpu.pipeline_mode<synchronous>, transform_indices = @transform_2, window_bounds = array<i64: 1, 32>}, {transform_indices = @transform_3, window_bounds = array<i64: 1, 8, 16, 32>}]} {
    %c8_i32 = arith.constant 8 : i32
    %0 = arith.muli %arg1, %c8_i32 : i32
    %c0 = arith.constant 0 : index
    %1 = arith.index_cast %0 : i32 to index
    %c0_0 = arith.constant 0 : index
    %c0_1 = arith.constant 0 : index
    %2 = vector.load %arg2[%c0, %1, %c0_0, %c0_1] : memref<1x16x16x32xbf16, #tpu.memory_space<vmem>>, vector<1x8x16x32xbf16>
    %3 = vector.shape_cast %2 : vector<1x8x16x32xbf16> to vector<8x16x32xbf16>
    %c1 = arith.constant 1 : index
    %c0_2 = arith.constant 0 : index
    %c0_3 = arith.constant 0 : index
    %4 = vector.load %arg6[%c1, %c0_2, %c0_3] : memref<10x16x32xbf16, #tpu.memory_space<vmem>>, vector<8x16x32xbf16>
    tpu.vector_store %arg6[%c1, %c0_2, %c0_3], %3 {strides = array<i32>} : memref<10x16x32xbf16, #tpu.memory_space<vmem>>, vector<8x16x32xbf16>,
    %c1_i32 = arith.constant 1 : i32
    %5 = arith.subi %0, %c1_i32 : i32
    %c0_i32 = arith.constant 0 : i32
    %6 = arith.maxsi %5, %c0_i32 : i32
    %c0_4 = arith.constant 0 : index
    %7 = arith.index_cast %6 : i32 to index
    %c0_5 = arith.constant 0 : index
    %c0_6 = arith.constant 0 : index
    %8 = vector.load %arg2[%c0_4, %7, %c0_5, %c0_6] : memref<1x16x16x32xbf16, #tpu.memory_space<vmem>>, vector<1x1x16x32xbf16>
    %9 = vector.shape_cast %8 : vector<1x1x16x32xbf16> to vector<16x32xbf16>
    %c0_i32_7 = arith.constant 0 : i32
    %10 = arith.cmpi sgt, %arg1, %c0_i32_7 : i32
    %cst = arith.constant 0.000000e+00 : bf16
    %11 = vector.broadcast %cst : bf16 to vector<16x32xbf16>
    %12 = arith.select %10, %9, %11 : vector<16x32xbf16>
    %c0_8 = arith.constant 0 : index
    %c0_9 = arith.constant 0 : index
    %c0_10 = arith.constant 0 : index
    %13 = vector.load %arg6[%c0_8, %c0_9, %c0_10] : memref<10x16x32xbf16, #tpu.memory_space<vmem>>, vector<1x16x32xbf16>
    %14 = vector.shape_cast %13 : vector<1x16x32xbf16> to vector<16x32xbf16>
    %15 = vector.shape_cast %12 : vector<16x32xbf16> to vector<1x16x32xbf16>
    tpu.vector_store %arg6[%c0_8, %c0_9, %c0_10], %15 {strides = array<i32>} : memref<10x16x32xbf16, #tpu.memory_space<vmem>>, vector<1x16x32xbf16>,
    %c8_i32_11 = arith.constant 8 : i32
    %16 = arith.addi %0, %c8_i32_11 : i32
    %c15_i32 = arith.constant 15 : i32
    %17 = arith.minsi %16, %c15_i32 : i32
    %c0_12 = arith.constant 0 : index
    %18 = arith.index_cast %17 : i32 to index
    %c0_13 = arith.constant 0 : index
    %c0_14 = arith.constant 0 : index
    %19 = vector.load %arg2[%c0_12, %18, %c0_13, %c0_14] : memref<1x16x16x32xbf16, #tpu.memory_space<vmem>>, vector<1x1x16x32xbf16>
    %20 = vector.shape_cast %19 : vector<1x1x16x32xbf16> to vector<16x32xbf16>
    %c1_i32_15 = arith.constant 1 : i32
    %21 = arith.cmpi slt, %arg1, %c1_i32_15 : i32
    %cst_16 = arith.constant 0.000000e+00 : bf16
    %22 = vector.broadcast %cst_16 : bf16 to vector<16x32xbf16>
    %23 = arith.select %21, %20, %22 : vector<16x32xbf16>
    %c9 = arith.constant 9 : index
    %c0_17 = arith.constant 0 : index
    %c0_18 = arith.constant 0 : index
    %24 = vector.load %arg6[%c9, %c0_17, %c0_18] : memref<10x16x32xbf16, #tpu.memory_space<vmem>>, vector<1x16x32xbf16>
    %25 = vector.shape_cast %24 : vector<1x16x32xbf16> to vector<16x32xbf16>
    %26 = vector.shape_cast %23 : vector<16x32xbf16> to vector<1x16x32xbf16>
    tpu.vector_store %arg6[%c9, %c0_17, %c0_18], %26 {strides = array<i32>} : memref<10x16x32xbf16, #tpu.memory_space<vmem>>, vector<1x16x32xbf16>,
    %c0_19 = arith.constant 0 : index
    %c0_20 = arith.constant 0 : index
    %c0_21 = arith.constant 0 : index
    %27 = vector.load %arg6[%c0_19, %c0_20, %c0_21] : memref<10x16x32xbf16, #tpu.memory_space<vmem>>, vector<10x16x32xbf16>
    %cst_22 = arith.constant 0.000000e+00 : bf16
    %28 = vector.broadcast %cst_22 : bf16 to vector<10x1x32xbf16>
    %29 = vector.extract_strided_slice %27 {offsets = [0, 0, 0], sizes = [10, 15, 32], strides = [1, 1, 1]} : vector<10x16x32xbf16> to vector<10x15x32xbf16>
    %30 = tpu.concatenate %28, %29 in 1 : vector<10x1x32xbf16>, vector<10x15x32xbf16> -> vector<10x16x32xbf16>
    %31 = vector.extract_strided_slice %27 {offsets = [0, 1, 0], sizes = [10, 15, 32], strides = [1, 1, 1]} : vector<10x16x32xbf16> to vector<10x15x32xbf16>
    %32 = tpu.concatenate %31, %28 in 1 : vector<10x15x32xbf16>, vector<10x1x32xbf16> -> vector<10x16x32xbf16>
    %33 = vector.extract_strided_slice %30 {offsets = [0, 0, 0], sizes = [8, 16, 32], strides = [1, 1, 1]} : vector<10x16x32xbf16> to vector<8x16x32xbf16>
    %34 = vector.shape_cast %33 : vector<8x16x32xbf16> to vector<128x32xbf16>
    %35 = vector.extract_strided_slice %27 {offsets = [0, 0, 0], sizes = [8, 16, 32], strides = [1, 1, 1]} : vector<10x16x32xbf16> to vector<8x16x32xbf16>
    %36 = vector.shape_cast %35 : vector<8x16x32xbf16> to vector<128x32xbf16>
    %37 = vector.extract_strided_slice %32 {offsets = [0, 0, 0], sizes = [8, 16, 32], strides = [1, 1, 1]} : vector<10x16x32xbf16> to vector<8x16x32xbf16>
    %38 = vector.shape_cast %37 : vector<8x16x32xbf16> to vector<128x32xbf16>
    %c0_23 = arith.constant 0 : index
    %c0_24 = arith.constant 0 : index
    %c0_25 = arith.constant 0 : index
    %c0_26 = arith.constant 0 : index
    %39 = vector.load %arg3[%c0_23, %c0_24, %c0_25, %c0_26] : memref<3x3x32x32xbf16, #tpu.memory_space<vmem>>, vector<1x1x32x32xbf16>
    %40 = vector.shape_cast %39 : vector<1x1x32x32xbf16> to vector<32x32xbf16>
    %cst_27 = arith.constant dense<0.000000e+00> : vector<128x32xf32>
    %41 = tpu.matmul %34, %40, %cst_27 {dimension_numbers = #tpu.dot_dimension_numbers<[1], [0], [0], [1], [0, 0, 1, 1], [], []>} : vector<128x32xbf16>, vector<32x32xbf16>, vector<128x32xf32> -> vector<128x32xf32>
    %c0_28 = arith.constant 0 : index
    %c1_29 = arith.constant 1 : index
    %c0_30 = arith.constant 0 : index
    %c0_31 = arith.constant 0 : index
    %42 = vector.load %arg3[%c0_28, %c1_29, %c0_30, %c0_31] : memref<3x3x32x32xbf16, #tpu.memory_space<vmem>>, vector<1x1x32x32xbf16>
    %43 = vector.shape_cast %42 : vector<1x1x32x32xbf16> to vector<32x32xbf16>
    %cst_32 = arith.constant dense<0.000000e+00> : vector<128x32xf32>
    %44 = tpu.matmul %36, %43, %cst_32 {dimension_numbers = #tpu.dot_dimension_numbers<[1], [0], [0], [1], [0, 0, 1, 1], [], []>} : vector<128x32xbf16>, vector<32x32xbf16>, vector<128x32xf32> -> vector<128x32xf32>
    %45 = arith.addf %41, %44 : vector<128x32xf32>
    %c0_33 = arith.constant 0 : index
    %c2 = arith.constant 2 : index
    %c0_34 = arith.constant 0 : index
    %c0_35 = arith.constant 0 : index
    %46 = vector.load %arg3[%c0_33, %c2, %c0_34, %c0_35] : memref<3x3x32x32xbf16, #tpu.memory_space<vmem>>, vector<1x1x32x32xbf16>
    %47 = vector.shape_cast %46 : vector<1x1x32x32xbf16> to vector<32x32xbf16>
    %cst_36 = arith.constant dense<0.000000e+00> : vector<128x32xf32>
    %48 = tpu.matmul %38, %47, %cst_36 {dimension_numbers = #tpu.dot_dimension_numbers<[1], [0], [0], [1], [0, 0, 1, 1], [], []>} : vector<128x32xbf16>, vector<32x32xbf16>, vector<128x32xf32> -> vector<128x32xf32>
    %49 = arith.addf %45, %48 : vector<128x32xf32>
    %c0_37 = arith.constant 0 : index
    %c0_38 = arith.constant 0 : index
    %50 = vector.load %arg7[%c0_37, %c0_38] : memref<128x32xf32, #tpu.memory_space<vmem>>, vector<128x32xf32>
    tpu.vector_store %arg7[%c0_37, %c0_38], %49 {strides = array<i32>} : memref<128x32xf32, #tpu.memory_space<vmem>>, vector<128x32xf32>,
    %51 = vector.extract_strided_slice %30 {offsets = [1, 0, 0], sizes = [8, 16, 32], strides = [1, 1, 1]} : vector<10x16x32xbf16> to vector<8x16x32xbf16>
    %52 = vector.shape_cast %51 : vector<8x16x32xbf16> to vector<128x32xbf16>
    %53 = vector.extract_strided_slice %27 {offsets = [1, 0, 0], sizes = [8, 16, 32], strides = [1, 1, 1]} : vector<10x16x32xbf16> to vector<8x16x32xbf16>
    %54 = vector.shape_cast %53 : vector<8x16x32xbf16> to vector<128x32xbf16>
    %55 = vector.extract_strided_slice %32 {offsets = [1, 0, 0], sizes = [8, 16, 32], strides = [1, 1, 1]} : vector<10x16x32xbf16> to vector<8x16x32xbf16>
    %56 = vector.shape_cast %55 : vector<8x16x32xbf16> to vector<128x32xbf16>
    %c1_39 = arith.constant 1 : index
    %c0_40 = arith.constant 0 : index
    %c0_41 = arith.constant 0 : index
    %c0_42 = arith.constant 0 : index
    %57 = vector.load %arg3[%c1_39, %c0_40, %c0_41, %c0_42] : memref<3x3x32x32xbf16, #tpu.memory_space<vmem>>, vector<1x1x32x32xbf16>
    %58 = vector.shape_cast %57 : vector<1x1x32x32xbf16> to vector<32x32xbf16>
    %cst_43 = arith.constant dense<0.000000e+00> : vector<128x32xf32>
    %59 = tpu.matmul %52, %58, %cst_43 {dimension_numbers = #tpu.dot_dimension_numbers<[1], [0], [0], [1], [0, 0, 1, 1], [], []>} : vector<128x32xbf16>, vector<32x32xbf16>, vector<128x32xf32> -> vector<128x32xf32>
    %c1_44 = arith.constant 1 : index
    %c1_45 = arith.constant 1 : index
    %c0_46 = arith.constant 0 : index
    %c0_47 = arith.constant 0 : index
    %60 = vector.load %arg3[%c1_44, %c1_45, %c0_46, %c0_47] : memref<3x3x32x32xbf16, #tpu.memory_space<vmem>>, vector<1x1x32x32xbf16>
    %61 = vector.shape_cast %60 : vector<1x1x32x32xbf16> to vector<32x32xbf16>
    %cst_48 = arith.constant dense<0.000000e+00> : vector<128x32xf32>
    %62 = tpu.matmul %54, %61, %cst_48 {dimension_numbers = #tpu.dot_dimension_numbers<[1], [0], [0], [1], [0, 0, 1, 1], [], []>} : vector<128x32xbf16>, vector<32x32xbf16>, vector<128x32xf32> -> vector<128x32xf32>
    %63 = arith.addf %59, %62 : vector<128x32xf32>
    %c1_49 = arith.constant 1 : index
    %c2_50 = arith.constant 2 : index
    %c0_51 = arith.constant 0 : index
    %c0_52 = arith.constant 0 : index
    %64 = vector.load %arg3[%c1_49, %c2_50, %c0_51, %c0_52] : memref<3x3x32x32xbf16, #tpu.memory_space<vmem>>, vector<1x1x32x32xbf16>
    %65 = vector.shape_cast %64 : vector<1x1x32x32xbf16> to vector<32x32xbf16>
    %cst_53 = arith.constant dense<0.000000e+00> : vector<128x32xf32>
    %66 = tpu.matmul %56, %65, %cst_53 {dimension_numbers = #tpu.dot_dimension_numbers<[1], [0], [0], [1], [0, 0, 1, 1], [], []>} : vector<128x32xbf16>, vector<32x32xbf16>, vector<128x32xf32> -> vector<128x32xf32>
    %67 = arith.addf %63, %66 : vector<128x32xf32>
    %c0_54 = arith.constant 0 : index
    %c0_55 = arith.constant 0 : index
    %68 = vector.load %arg7[%c0_54, %c0_55] : memref<128x32xf32, #tpu.memory_space<vmem>>, vector<128x32xf32>
    %69 = arith.addf %68, %67 : vector<128x32xf32>
    %c0_56 = arith.constant 0 : index
    %c0_57 = arith.constant 0 : index
    %70 = vector.load %arg7[%c0_56, %c0_57] : memref<128x32xf32, #tpu.memory_space<vmem>>, vector<128x32xf32>
    tpu.vector_store %arg7[%c0_56, %c0_57], %69 {strides = array<i32>} : memref<128x32xf32, #tpu.memory_space<vmem>>, vector<128x32xf32>,
    %71 = vector.extract_strided_slice %30 {offsets = [2, 0, 0], sizes = [8, 16, 32], strides = [1, 1, 1]} : vector<10x16x32xbf16> to vector<8x16x32xbf16>
    %72 = vector.shape_cast %71 : vector<8x16x32xbf16> to vector<128x32xbf16>
    %73 = vector.extract_strided_slice %27 {offsets = [2, 0, 0], sizes = [8, 16, 32], strides = [1, 1, 1]} : vector<10x16x32xbf16> to vector<8x16x32xbf16>
    %74 = vector.shape_cast %73 : vector<8x16x32xbf16> to vector<128x32xbf16>
    %75 = vector.extract_strided_slice %32 {offsets = [2, 0, 0], sizes = [8, 16, 32], strides = [1, 1, 1]} : vector<10x16x32xbf16> to vector<8x16x32xbf16>
    %76 = vector.shape_cast %75 : vector<8x16x32xbf16> to vector<128x32xbf16>
    %c2_58 = arith.constant 2 : index
    %c0_59 = arith.constant 0 : index
    %c0_60 = arith.constant 0 : index
    %c0_61 = arith.constant 0 : index
    %77 = vector.load %arg3[%c2_58, %c0_59, %c0_60, %c0_61] : memref<3x3x32x32xbf16, #tpu.memory_space<vmem>>, vector<1x1x32x32xbf16>
    %78 = vector.shape_cast %77 : vector<1x1x32x32xbf16> to vector<32x32xbf16>
    %cst_62 = arith.constant dense<0.000000e+00> : vector<128x32xf32>
    %79 = tpu.matmul %72, %78, %cst_62 {dimension_numbers = #tpu.dot_dimension_numbers<[1], [0], [0], [1], [0, 0, 1, 1], [], []>} : vector<128x32xbf16>, vector<32x32xbf16>, vector<128x32xf32> -> vector<128x32xf32>
    %c2_63 = arith.constant 2 : index
    %c1_64 = arith.constant 1 : index
    %c0_65 = arith.constant 0 : index
    %c0_66 = arith.constant 0 : index
    %80 = vector.load %arg3[%c2_63, %c1_64, %c0_65, %c0_66] : memref<3x3x32x32xbf16, #tpu.memory_space<vmem>>, vector<1x1x32x32xbf16>
    %81 = vector.shape_cast %80 : vector<1x1x32x32xbf16> to vector<32x32xbf16>
    %cst_67 = arith.constant dense<0.000000e+00> : vector<128x32xf32>
    %82 = tpu.matmul %74, %81, %cst_67 {dimension_numbers = #tpu.dot_dimension_numbers<[1], [0], [0], [1], [0, 0, 1, 1], [], []>} : vector<128x32xbf16>, vector<32x32xbf16>, vector<128x32xf32> -> vector<128x32xf32>
    %83 = arith.addf %79, %82 : vector<128x32xf32>
    %c2_68 = arith.constant 2 : index
    %c2_69 = arith.constant 2 : index
    %c0_70 = arith.constant 0 : index
    %c0_71 = arith.constant 0 : index
    %84 = vector.load %arg3[%c2_68, %c2_69, %c0_70, %c0_71] : memref<3x3x32x32xbf16, #tpu.memory_space<vmem>>, vector<1x1x32x32xbf16>
    %85 = vector.shape_cast %84 : vector<1x1x32x32xbf16> to vector<32x32xbf16>
    %cst_72 = arith.constant dense<0.000000e+00> : vector<128x32xf32>
    %86 = tpu.matmul %76, %85, %cst_72 {dimension_numbers = #tpu.dot_dimension_numbers<[1], [0], [0], [1], [0, 0, 1, 1], [], []>} : vector<128x32xbf16>, vector<32x32xbf16>, vector<128x32xf32> -> vector<128x32xf32>
    %87 = arith.addf %83, %86 : vector<128x32xf32>
    %c0_73 = arith.constant 0 : index
    %c0_74 = arith.constant 0 : index
    %88 = vector.load %arg7[%c0_73, %c0_74] : memref<128x32xf32, #tpu.memory_space<vmem>>, vector<128x32xf32>
    %89 = arith.addf %88, %87 : vector<128x32xf32>
    %c0_75 = arith.constant 0 : index
    %c0_76 = arith.constant 0 : index
    %90 = vector.load %arg7[%c0_75, %c0_76] : memref<128x32xf32, #tpu.memory_space<vmem>>, vector<128x32xf32>
    tpu.vector_store %arg7[%c0_75, %c0_76], %89 {strides = array<i32>} : memref<128x32xf32, #tpu.memory_space<vmem>>, vector<128x32xf32>,
    %c0_77 = arith.constant 0 : index
    %c0_78 = arith.constant 0 : index
    %91 = vector.load %arg7[%c0_77, %c0_78] : memref<128x32xf32, #tpu.memory_space<vmem>>, vector<128x32xf32>
    %c0_79 = arith.constant 0 : index
    %c0_80 = arith.constant 0 : index
    %92 = vector.load %arg4[%c0_79, %c0_80] : memref<1x32xf32, #tpu.memory_space<vmem>>, vector<1x32xf32>
    %93 = vector.broadcast %92 : vector<1x32xf32> to vector<128x32xf32>
    %94 = arith.addf %91, %93 : vector<128x32xf32>
    %cst_81 = arith.constant 0.000000e+00 : f32
    %95 = vector.broadcast %cst_81 : f32 to vector<128x32xf32>
    %96 = arith.maximumf %94, %95 : vector<128x32xf32>
    %97 = vector.shape_cast %96 : vector<128x32xf32> to vector<8x16x32xf32>
    %98 = arith.truncf %97 : vector<8x16x32xf32> to vector<8x16x32xbf16>
    %c0_82 = arith.constant 0 : index
    %c0_83 = arith.constant 0 : index
    %c0_84 = arith.constant 0 : index
    %c0_85 = arith.constant 0 : index
    %99 = vector.load %arg5[%c0_82, %c0_83, %c0_84, %c0_85] : memref<1x8x16x32xbf16, #tpu.memory_space<vmem>>, vector<1x8x16x32xbf16>
    %100 = vector.shape_cast %99 : vector<1x8x16x32xbf16> to vector<8x16x32xbf16>
    %101 = vector.shape_cast %98 : vector<8x16x32xbf16> to vector<1x8x16x32xbf16>
    tpu.vector_store %arg5[%c0_82, %c0_83, %c0_84, %c0_85], %101 {strides = array<i32>} : memref<1x8x16x32xbf16, #tpu.memory_space<vmem>>, vector<1x8x16x32xbf16>,
    return
  }
  func.func @transform_0(%arg0: i32, %arg1: i32) -> (i32, i32, i32, i32) {
    %c0_i32 = arith.constant 0 : i32
    %c0_i32_0 = arith.constant 0 : i32
    %c0_i32_1 = arith.constant 0 : i32
    %c0_i32_2 = arith.constant 0 : i32
    return %arg0, %c0_i32, %c0_i32_0, %c0_i32_1 : i32, i32, i32, i32
  }
  func.func @transform_1(%arg0: i32, %arg1: i32) -> (i32, i32, i32, i32) {
    %c0_i32 = arith.constant 0 : i32
    %c0_i32_0 = arith.constant 0 : i32
    %c0_i32_1 = arith.constant 0 : i32
    %c0_i32_2 = arith.constant 0 : i32
    %c0_i32_3 = arith.constant 0 : i32
    return %c0_i32, %c0_i32_0, %c0_i32_1, %c0_i32_2 : i32, i32, i32, i32
  }
  func.func @transform_2(%arg0: i32, %arg1: i32) -> (i32, i32) {
    %c0_i32 = arith.constant 0 : i32
    %c0_i32_0 = arith.constant 0 : i32
    %c0_i32_1 = arith.constant 0 : i32
    return %c0_i32, %c0_i32_0 : i32, i32
  }
  func.func @transform_3(%arg0: i32, %arg1: i32) -> (i32, i32, i32, i32) {
    %c0_i32 = arith.constant 0 : i32
    %c0_i32_0 = arith.constant 0 : i32
    %c0_i32_1 = arith.constant 0 : i32
    return %arg0, %arg1, %c0_i32, %c0_i32_0 : i32, i32, i32, i32
  }
}

module attributes {stable_mosaic.version = 11 : i64} {
  func.func @_mm_bias_add_relu_kernel(%arg0: i32, %arg1: i32, %arg2: memref<256x32xbf16, #tpu.memory_space<vmem>>, %arg3: memref<32x128xbf16, #tpu.memory_space<vmem>>, %arg4: memref<1x128xf32, #tpu.memory_space<vmem>>, %arg5: memref<256x128xbf16, #tpu.memory_space<vmem>>, %arg6: memref<256x128xbf16, #tpu.memory_space<vmem>>) attributes {dimension_semantics = [#tpu.dimension_semantics<parallel>, #tpu.dimension_semantics<parallel>], iteration_bounds = array<i64: 1, 2>, scalar_prefetch = 0 : i64, scratch_operands = 0 : i64, tpu.core_type = #tpu.core_type<tc>, window_params = [{transform_indices = @transform_0, window_bounds = array<i64: 256, 32>}, {transform_indices = @transform_1, window_bounds = array<i64: 32, 128>}, {transform_indices = @transform_2, window_bounds = array<i64: 1, 128>}, {transform_indices = @transform_3, window_bounds = array<i64: 256, 128>}, {transform_indices = @transform_4, window_bounds = array<i64: 256, 128>}]} {
    %c0 = arith.constant 0 : index
    %c0_0 = arith.constant 0 : index
    %0 = vector.load %arg2[%c0, %c0_0] : memref<256x32xbf16, #tpu.memory_space<vmem>>, vector<256x32xbf16>
    %c0_1 = arith.constant 0 : index
    %c0_2 = arith.constant 0 : index
    %1 = vector.load %arg3[%c0_1, %c0_2] : memref<32x128xbf16, #tpu.memory_space<vmem>>, vector<32x128xbf16>
    %cst = arith.constant dense<0.000000e+00> : vector<256x128xf32>
    %2 = tpu.matmul %0, %1, %cst {dimension_numbers = #tpu.dot_dimension_numbers<[1], [0], [0], [1], [0, 0, 1, 1], [], []>} : vector<256x32xbf16>, vector<32x128xbf16>, vector<256x128xf32> -> vector<256x128xf32>
    %c0_3 = arith.constant 0 : index
    %c0_4 = arith.constant 0 : index
    %3 = vector.load %arg4[%c0_3, %c0_4] : memref<1x128xf32, #tpu.memory_space<vmem>>, vector<1x128xf32>
    %4 = vector.broadcast %3 : vector<1x128xf32> to vector<256x128xf32>
    %5 = arith.addf %2, %4 : vector<256x128xf32>
    %c0_5 = arith.constant 0 : index
    %c0_6 = arith.constant 0 : index
    %6 = vector.load %arg5[%c0_5, %c0_6] : memref<256x128xbf16, #tpu.memory_space<vmem>>, vector<256x128xbf16>
    %7 = arith.extf %6 : vector<256x128xbf16> to vector<256x128xf32>
    %8 = arith.addf %5, %7 : vector<256x128xf32>
    %cst_7 = arith.constant 0.000000e+00 : f32
    %9 = vector.broadcast %cst_7 : f32 to vector<256x128xf32>
    %10 = arith.maximumf %8, %9 : vector<256x128xf32>
    %11 = arith.truncf %10 : vector<256x128xf32> to vector<256x128xbf16>
    %c0_8 = arith.constant 0 : index
    %c0_9 = arith.constant 0 : index
    %12 = vector.load %arg6[%c0_8, %c0_9] : memref<256x128xbf16, #tpu.memory_space<vmem>>, vector<256x128xbf16>
    tpu.vector_store %arg6[%c0_8, %c0_9], %11 {strides = array<i32>} : memref<256x128xbf16, #tpu.memory_space<vmem>>, vector<256x128xbf16>,
    return
  }
  func.func @transform_0(%arg0: i32, %arg1: i32) -> (i32, i32) {
    %c0_i32 = arith.constant 0 : i32
    %c0_i32_0 = arith.constant 0 : i32
    return %arg1, %c0_i32 : i32, i32
  }
  func.func @transform_1(%arg0: i32, %arg1: i32) -> (i32, i32) {
    %c0_i32 = arith.constant 0 : i32
    %c0_i32_0 = arith.constant 0 : i32
    return %c0_i32, %arg0 : i32, i32
  }
  func.func @transform_2(%arg0: i32, %arg1: i32) -> (i32, i32) {
    %c0_i32 = arith.constant 0 : i32
    %c0_i32_0 = arith.constant 0 : i32
    return %c0_i32, %arg0 : i32, i32
  }
  func.func @transform_3(%arg0: i32, %arg1: i32) -> (i32, i32) {
    %c0_i32 = arith.constant 0 : i32
    return %arg1, %arg0 : i32, i32
  }
  func.func @transform_4(%arg0: i32, %arg1: i32) -> (i32, i32) {
    %c0_i32 = arith.constant 0 : i32
    return %arg1, %arg0 : i32, i32
  }
}

</mosaic_0001>

<llo_original>
// kernel: bottleneck_forward.3
$region0: #{bottleneck_forward.3}
  #allocation0 [shape = 'u32[]', space=smem, size = 0x4, offset = 0x4, fixed_abs, tag = 'smem constant byte address 0x4 - core index']
  #allocation1 [shape = 'u32[144,128]{1,0:T(1,128)}', space=vmem, size = 0x12000, scoped, tag = 'internal scratch']
  %s0 = inlined_call_operand.vmem [shape: bf16[512,128], index: 0, kind: input, shape index: {}]
  %s1 = inlined_call_operand.vmem [shape: bf16[128,32], index: 1, kind: input, shape index: {}]
  %s2 = inlined_call_operand.vmem [shape: f32[1,32], index: 2, kind: input, shape index: {}]
  %s3 = inlined_call_operand.vmem [shape: bf16[512,32], index: 3, kind: output, shape index: {}]
  %s4 = sld [smem:[#allocation0]]
  $region45: #{bottleneck_forward.3} parent=0
    _
  %s6 = ssub.s32 1, %s4
  %s7 = scalar_select 0, %s6, %s4
  loop: start=0, step=1, limit=4
  $region2: #{bottleneck_forward.3} parent=0 // loop_pre_header
    _
  $region3: #{bottleneck_forward.3} parent=0 // loop_header
    %s9 = sphi 0, %s13
    %p10 = scmp.ge.s32.totalorder %s9, 4
    %s16 = sphi 0, %s28
    %s17 = sphi 0, %s24
    %s18 = sphi 0, %s16
    %s19 = sphi 0, %s17
    %s20 = sphi 0, %s18
    %s21 = sphi 0, %s19
    %s31 = sphi 0, %s33
    %s34 = sphi 0, %s31
    %s35 = sphi 0, %s34
    %s51 = sphi 0, %s35
    %s57 = sphi 0, %s59
    %s60 = sphi 0, %s57
    %s61 = sphi 0, %s60
    %s77 = sphi 0, %s61
    %s83 = sphi 0, %s85
    %s86 = sphi 0, %s83
    %s87 = sphi 0, %s86
    %s103 = sphi 0, %s87
    %s111 = sphi 0, %s113
    %s114 = sphi 0, %s111
    %s115 = sphi 0, %s114
    %s131 = sphi 0, %s115
  $region4: #{bottleneck_forward.3} parent=0 // loop_header_branch
    %12 = sbr.rel (%p10) target = $region8
  $region5: #{bottleneck_forward.3} parent=0 // loop_body
    %s14 = ssub.s32 %s9, 1
    %s15 = ssub.s32 %s9, 2
    %s22 = sadd.s32 1, %s17
    %p23 = scmp.ge.s32.totalorder %s22, 2
    %s24 = scalar_select %p23, 0, %s22
    %s25 = sadd.s32 1, %s16
    %s26 = scalar_select %p23, %s25, %s16
    %p27 = scmp.ge.s32.totalorder %s26, 1
    %s28 = scalar_select %p27, 0, %s26
    %s29 = ssub.s32 %s17, %s24
    %p30 = scmp.eq.s32.totalorder %s29, 0
    %s32 = sadd.s32 %s31, 1
    %s33 = scalar_select %p30, %s31, %s32
    %p36 = pneg %p30
    %p37 = scmp.eq.s32.totalorder %s9, 1
    %p38 = por %p36, %p37
    %p39 = scmp.ne.s32.totalorder %s31, %s34
    %p40 = scmp.eq.s32.totalorder %s9, 0
    %p41 = por %p39, %p40
    %p42 = scmp.ne.s32.totalorder %s31, %s34
    %p43 = scmp.eq.s32.totalorder %s14, 1
    %p44 = por %p42, %p43
    %p45 = scmp.ne.s32.totalorder %s34, %s35
    %p46 = scmp.eq.s32.totalorder %s14, 0
    %p47 = por %p45, %p46
    %p48 = scmp.ne.s32.totalorder %s34, %s35
    %p49 = scmp.eq.s32.totalorder %s15, 1
    %p50 = por %p48, %p49
    %p52 = scmp.ne.s32.totalorder %s35, %s51
    %p53 = scmp.eq.s32.totalorder %s15, 0
    %p54 = por %p52, %p53
    %s55 = ssub.s32 %s16, %s28
    %p56 = scmp.eq.s32.totalorder %s55, 0
    %s58 = sadd.s32 %s57, 1
    %s59 = scalar_select %p56, %s57, %s58
    %p62 = pneg %p56
    %p63 = scmp.eq.s32.totalorder %s9, 1
    %p64 = por %p62, %p63
    %p65 = scmp.ne.s32.totalorder %s57, %s60
    %p66 = scmp.eq.s32.totalorder %s9, 0
    %p67 = por %p65, %p66
    %p68 = scmp.ne.s32.totalorder %s57, %s60
    %p69 = scmp.eq.s32.totalorder %s14, 1
    %p70 = por %p68, %p69
    %p71 = scmp.ne.s32.totalorder %s60, %s61
    %p72 = scmp.eq.s32.totalorder %s14, 0
    %p73 = por %p71, %p72
    %p74 = scmp.ne.s32.totalorder %s60, %s61
    %p75 = scmp.eq.s32.totalorder %s15, 1
    %p76 = por %p74, %p75
    %p78 = scmp.ne.s32.totalorder %s61, %s77
    %p79 = scmp.eq.s32.totalorder %s15, 0
    %p80 = por %p78, %p79
    %s81 = ssub.s32 %s16, %s28
    %p82 = scmp.eq.s32.totalorder %s81, 0
    %s84 = sadd.s32 %s83, 1
    %s85 = scalar_select %p82, %s83, %s84
    %p88 = pneg %p82
    %p89 = scmp.eq.s32.totalorder %s9, 1
    %p90 = por %p88, %p89
    %p91 = scmp.ne.s32.totalorder %s83, %s86
    %p92 = scmp.eq.s32.totalorder %s9, 0
    %p93 = por %p91, %p92
    %p94 = scmp.ne.s32.totalorder %s83, %s86
    %p95 = scmp.eq.s32.totalorder %s14, 1
    %p96 = por %p94, %p95
    %p97 = scmp.ne.s32.totalorder %s86, %s87
    %p98 = scmp.eq.s32.totalorder %s14, 0
    %p99 = por %p97, %p98
    %p100 = scmp.ne.s32.totalorder %s86, %s87
    %p101 = scmp.eq.s32.totalorder %s15, 1
    %p102 = por %p100, %p101
    %p104 = scmp.ne.s32.totalorder %s87, %s103
    %p105 = scmp.eq.s32.totalorder %s15, 0
    %p106 = por %p104, %p105
    %s107 = ssub.s32 %s17, %s24
    %s108 = ssub.s32 %s16, %s28
    %s109 = sor.u32 %s107, %s108
    %p110 = scmp.eq.s32.totalorder %s109, 0
    %s112 = sadd.s32 %s111, 1
    %s113 = scalar_select %p110, %s111, %s112
    %p116 = pneg %p110
    %p117 = scmp.eq.s32.totalorder %s9, 1
    %p118 = por %p116, %p117
    %p119 = scmp.ne.s32.totalorder %s111, %s114
    %p120 = scmp.eq.s32.totalorder %s9, 0
    %p121 = por %p119, %p120
    %p122 = scmp.ne.s32.totalorder %s111, %s114
    %p123 = scmp.eq.s32.totalorder %s14, 1
    %p124 = por %p122, %p123
    %p125 = scmp.ne.s32.totalorder %s114, %s115
    %p126 = scmp.eq.s32.totalorder %s14, 0
    %p127 = por %p125, %p126
    %p128 = scmp.ne.s32.totalorder %s114, %s115
    %p129 = scmp.eq.s32.totalorder %s15, 1
    %p130 = por %p128, %p129
    %p132 = scmp.ne.s32.totalorder %s115, %s131
    %p133 = scmp.eq.s32.totalorder %s15, 0
    %p134 = por %p132, %p133
    %p135 = scmp.le.s32.totalorder 1, %s9
    %p136 = scmp.lt.s32.totalorder %s9, 3
    %p137 = pnand %p135, %p136
    %p138 = pneg %p137
    // Predicated region
    $region9: #{bottleneck_forward.3} parent=5 // pred_check
      _
    $region10: #{bottleneck_forward.3} parent=5 // pred_check_branch
      %140 = sbr.rel (%p137) target = $region12
    $region11: #{bottleneck_forward.3} parent=5 // pred_region
      %s141 = ssub.s32 %s9, 1
      // Predicated region
      $region13: #{bottleneck_forward.3} parent=11 // pred_check
        %p142 = pneg %p73
      $region14: #{bottleneck_forward.3} parent=11 // pred_check_branch
        %144 = sbr.rel (%p142) target = $region16
      $region15: #{bottleneck_forward.3} parent=11 // pred_region
        %p145 = scmp.lt.s32.totalorder %s18, 0
        %s146 = scalar_select %p145, %s18, 0
        %s147 = smul.addr %s146, 4
        %s148 = scalar_lea.vmem %s1, %s147
      $region16: #{bottleneck_forward.3} parent=11 // pred_fallthru
        _
      // Predicated region
      $region17: #{bottleneck_forward.3} parent=11 // pred_check
        %p149 = pneg %p99
      $region18: #{bottleneck_forward.3} parent=11 // pred_check_branch
        %151 = sbr.rel (%p149) target = $region20
      $region19: #{bottleneck_forward.3} parent=11 // pred_region
        %p152 = scmp.lt.s32.totalorder %s18, 0
        %s153 = scalar_select %p152, %s18, 0
        %s154 = scalar_lea.vmem %s2, %s153
      $region20: #{bottleneck_forward.3} parent=11 // pred_fallthru
        _
    $region12: #{bottleneck_forward.3} parent=5 // pred_fallthru
      _
    %p155 = scmp.lt.s32.totalorder %s9, 2
    // Predicated region
    $region21: #{bottleneck_forward.3} parent=5 // pred_check
      %p156 = pneg %p155
    $region22: #{bottleneck_forward.3} parent=5 // pred_check_branch
      %158 = sbr.rel (%p156) target = $region24
    $region23: #{bottleneck_forward.3} parent=5 // pred_region
      // Predicated region
      $region25: #{bottleneck_forward.3} parent=23 // pred_check
        %p159 = pneg %p41
      $region26: #{bottleneck_forward.3} parent=23 // pred_check_branch
        %161 = sbr.rel (%p159) target = $region28
      $region27: #{bottleneck_forward.3} parent=23 // pred_region
        %s162 = smul.u32 32, %s17
        %p163 = scmp.lt.s32.totalorder %s162, 63
        %s164 = scalar_select %p163, %s162, 63
        %s165 = smul.addr %s164, 4
        %s166 = scalar_lea.vmem %s0, %s165
        %s167 = smul.u32 32, %s17
      $region28: #{bottleneck_forward.3} parent=23 // pred_fallthru
        _
    $region24: #{bottleneck_forward.3} parent=5 // pred_fallthru
      _
    %p168 = scmp.le.s32.totalorder 1, %s9
    %p169 = scmp.lt.s32.totalorder %s9, 3
    %p170 = pnand %p168, %p169
    %p171 = pneg %p170
    // Predicated region
    $region29: #{bottleneck_forward.3} parent=5 // pred_check
      _
    $region30: #{bottleneck_forward.3} parent=5 // pred_check_branch
      %173 = sbr.rel (%p170) target = $region32
    $region31: #{bottleneck_forward.3} parent=5 // pred_region
      %s174 = ssub.s32 %s9, 1
      %s175 = smul.u32 32, %s19
      %p176 = scmp.lt.s32.totalorder %s175, 63
      %s177 = scalar_select %p176, %s175, 63
      %s178 = smul.addr %s177, 4
      %s179 = scalar_lea.vmem %s0, %s178
      %p180 = pneg %p47
      %p181 = pneg %p44
      %p182 = scmp.lt.s32.totalorder %s18, 0
      %s183 = scalar_select %p182, %s18, 0
      %s184 = smul.addr %s183, 4
      %s185 = scalar_lea.vmem %s1, %s184
      %p186 = pneg %p73
      %p187 = pneg %p70
      %p188 = scmp.lt.s32.totalorder %s18, 0
      %s189 = scalar_select %p188, %s18, 0
      %s190 = scalar_lea.vmem %s2, %s189
      %p191 = pneg %p99
      %p192 = pneg %p96
      %p193 = pneg %p127
      %p194 = pneg %p124
      %s195 = smul.u32 32, %s19
      %p196 = scmp.lt.s32.totalorder %s195, 63
      %s197 = scalar_select %p196, %s195, 63
      %p198 = scmp.lt.s32.totalorder %s18, 0
      %s199 = scalar_select %p198, %s18, 0
      %s200 = sadd.s32 %s199, %s197
      %s201 = smul.addr %s200, 4
      %s202 = scalar_lea.vmem %s3, %s201
      %s203 = smul.u32 32, %s19
      %p204 = scmp.lt.s32.totalorder %s203, 63
      %s205 = scalar_select %p204, %s203, 63
      %s206 = smul.addr %s205, 4
      %s207 = scalar_lea.vmem %s0, %s206
      %s208 = smul.u32 32, %s19
      %p209 = scmp.lt.s32.totalorder %s18, 0
      %s210 = scalar_select %p209, %s18, 0
      %s211 = smul.addr %s210, 4
      %s212 = scalar_lea.vmem %s1, %s211
      %p213 = scmp.lt.s32.totalorder %s18, 0
      %s214 = scalar_select %p213, %s18, 0
      %s215 = scalar_lea.vmem %s2, %s214
      %s216 = smul.u32 32, %s19
      %p217 = scmp.lt.s32.totalorder %s216, 63
      %s218 = scalar_select %p217, %s216, 63
      %p219 = scmp.lt.s32.totalorder %s18, 0
      %s220 = scalar_select %p219, %s18, 0
      %s221 = sadd.s32 %s220, %s218
      %s222 = smul.addr %s221, 4
      %s223 = scalar_lea.vmem %s3, %s222
      %s224 = smul.u32 32, %s19
      %v226 = vld [vmem:[%s207] sm:$0xf]
      %v227 = vld [vmem:[%s207 + $0x4] sm:$0xf]
      %v228 = vld [vmem:[%s207 + $0x8] sm:$0xf]
      %v229 = vld [vmem:[%s207 + $0xc] sm:$0xf]
      %v230 = vld [vmem:[%s207 + $0x10] sm:$0xf]
      %v231 = vld [vmem:[%s207 + $0x14] sm:$0xf]
      %v232 = vld [vmem:[%s207 + $0x18] sm:$0xf]
      %v233 = vld [vmem:[%s207 + $0x1c] sm:$0xf]
      %v234 = vld [vmem:[%s207 + $0x20] sm:$0xf]
      %v235 = vld [vmem:[%s207 + $0x24] sm:$0xf]
      %v236 = vld [vmem:[%s207 + $0x28] sm:$0xf]
      %v237 = vld [vmem:[%s207 + $0x2c] sm:$0xf]
      %v238 = vld [vmem:[%s207 + $0x30] sm:$0xf]
      %v239 = vld [vmem:[%s207 + $0x34] sm:$0xf]
      %v240 = vld [vmem:[%s207 + $0x38] sm:$0xf]
      %v241 = vld [vmem:[%s207 + $0x3c] sm:$0xf]
      %v242 = vld [vmem:[%s207 + $0x40] sm:$0xf]
      %v243 = vld [vmem:[%s207 + $0x44] sm:$0xf]
      %v244 = vld [vmem:[%s207 + $0x48] sm:$0xf]
      %v245 = vld [vmem:[%s207 + $0x4c] sm:$0xf]
      %v246 = vld [vmem:[%s207 + $0x50] sm:$0xf]
      %v247 = vld [vmem:[%s207 + $0x54] sm:$0xf]
      %v248 = vld [vmem:[%s207 + $0x58] sm:$0xf]
      %v249 = vld [vmem:[%s207 + $0x5c] sm:$0xf]
      %v250 = vld [vmem:[%s207 + $0x60] sm:$0xf]
      %v251 = vld [vmem:[%s207 + $0x64] sm:$0xf]
      %v252 = vld [vmem:[%s207 + $0x68] sm:$0xf]
      %v253 = vld [vmem:[%s207 + $0x6c] sm:$0xf]
      %v254 = vld [vmem:[%s207 + $0x70] sm:$0xf]
      %v255 = vld [vmem:[%s207 + $0x74] sm:$0xf]
      %v256 = vld [vmem:[%s207 + $0x78] sm:$0xf]
      %v257 = vld [vmem:[%s207 + $0x7c] sm:$0xf]
      %v258 = vld [vmem:[%s212] sm:$0xf]
      %v259 = vld [vmem:[%s212 + $0x4] sm:$0xf]
      %v260 = vld [vmem:[%s212 + $0x8] sm:$0xf]
      %v261 = vld [vmem:[%s212 + $0xc] sm:$0xf]
      %v262 = vld [vmem:[%s212 + $0x10] sm:$0xf]
      %v263 = vld [vmem:[%s212 + $0x14] sm:$0xf]
      %v264 = vld [vmem:[%s212 + $0x18] sm:$0xf]
      %v265 = vld [vmem:[%s212 + $0x1c] sm:$0xf]
      %v266 = vld [vmem:[%s212 + $0x20] sm:$0xf]
      %v267 = vld [vmem:[%s212 + $0x24] sm:$0xf]
      %v268 = vld [vmem:[%s212 + $0x28] sm:$0xf]
      %v269 = vld [vmem:[%s212 + $0x2c] sm:$0xf]
      %v270 = vld [vmem:[%s212 + $0x30] sm:$0xf]
      %v271 = vld [vmem:[%s212 + $0x34] sm:$0xf]
      %v272 = vld [vmem:[%s212 + $0x38] sm:$0xf]
      %v273 = vld [vmem:[%s212 + $0x3c] sm:$0xf]
      %v274 = vld [vmem:[%s215] sm:$0x1]
      %v276 = vlaneseq
      %v277 = vshrl.u32 %v276, 7
      %v278 = vsub.s32 0, %v277
      %v279 = vrot.slane %v274, %v278
      %v313 = vunpack.c.l.b16 %v226
      %v314 = vunpack.c.l.b16 %v227
      %v315 = vunpack.c.l.b16 %v228
      %v316 = vunpack.c.l.b16 %v229
      %v317 = vunpack.c.l.b16 %v230
      %v318 = vunpack.c.l.b16 %v231
      %v319 = vunpack.c.l.b16 %v232
      %v320 = vunpack.c.l.b16 %v233
      %v321 = vunpack.c.l.b16 %v234
      %v322 = vunpack.c.l.b16 %v235
      %v323 = vunpack.c.l.b16 %v236
      %v324 = vunpack.c.l.b16 %v237
      %v325 = vunpack.c.l.b16 %v238
      %v326 = vunpack.c.l.b16 %v239
      %v327 = vunpack.c.l.b16 %v240
      %v328 = vunpack.c.l.b16 %v241
      %v329 = vunpack.c.l.b16 %v242
      %v330 = vunpack.c.l.b16 %v243
      %v331 = vunpack.c.l.b16 %v244
      %v332 = vunpack.c.l.b16 %v245
      %v333 = vunpack.c.l.b16 %v246
      %v334 = vunpack.c.l.b16 %v247
      %v335 = vunpack.c.l.b16 %v248
      %v336 = vunpack.c.l.b16 %v249
      %v337 = vunpack.c.l.b16 %v250
      %v338 = vunpack.c.l.b16 %v251
      %v339 = vunpack.c.l.b16 %v252
      %v340 = vunpack.c.l.b16 %v253
      %v341 = vunpack.c.l.b16 %v254
      %v342 = vunpack.c.l.b16 %v255
      %v343 = vunpack.c.l.b16 %v256
      %v344 = vunpack.c.l.b16 %v257
      %v345 = vpack.c.b16 %v314, %v313
      %v346 = vpack.c.b16 %v316, %v315
      %v347 = vpack.c.b16 %v318, %v317
      %v348 = vpack.c.b16 %v320, %v319
      %v349 = vpack.c.b16 %v322, %v321
      %v350 = vpack.c.b16 %v324, %v323
      %v351 = vpack.c.b16 %v326, %v325
      %v352 = vpack.c.b16 %v328, %v327
      %v353 = vpack.c.b16 %v330, %v329
      %v354 = vpack.c.b16 %v332, %v331
      %v355 = vpack.c.b16 %v334, %v333
      %v356 = vpack.c.b16 %v336, %v335
      %v357 = vpack.c.b16 %v338, %v337
      %v358 = vpack.c.b16 %v340, %v339
      %v359 = vpack.c.b16 %v342, %v341
      %v360 = vpack.c.b16 %v344, %v343
      %v393 = vunpack.c.l.b16 %v258
      %v394 = vunpack.c.l.b16 %v259
      %v395 = vunpack.c.l.b16 %v260
      %v396 = vunpack.c.l.b16 %v261
      %v397 = vunpack.c.l.b16 %v262
      %v398 = vunpack.c.l.b16 %v263
      %v399 = vunpack.c.l.b16 %v264
      %v400 = vunpack.c.l.b16 %v265
      %v401 = vunpack.c.l.b16 %v266
      %v402 = vunpack.c.l.b16 %v267
      %v403 = vunpack.c.l.b16 %v268
      %v404 = vunpack.c.l.b16 %v269
      %v405 = vunpack.c.l.b16 %v270
      %v406 = vunpack.c.l.b16 %v271
      %v407 = vunpack.c.l.b16 %v272
      %v408 = vunpack.c.l.b16 %v273
      %v409 = vpack.c.b16 %v394, %v393
      %v410 = vpack.c.b16 %v396, %v395
      %v411 = vpack.c.b16 %v398, %v397
      %v412 = vpack.c.b16 %v400, %v399
      %v413 = vpack.c.b16 %v402, %v401
      %v414 = vpack.c.b16 %v404, %v403
      %v415 = vpack.c.b16 %v406, %v405
      %v416 = vpack.c.b16 %v408, %v407
      %425 = vmatprep.subr.bf16.mxu0 0
      %426 = vmatpush1.bf16.msra.mxu0 %v409
      %427 = vmatprep.subr.bf16.mxu0 0
      %428 = vmatpush1.bf16.msra.mxu0 %v410
      %429 = vmatprep.subr.bf16.mxu0 0
      %430 = vmatpush1.bf16.msra.mxu0 %v411
      %431 = vmatprep.subr.bf16.mxu0 0
      %432 = vmatpush1.bf16.msra.mxu0 %v412
      %433 = vmatprep.subr.bf16.mxu0 0
      %434 = vmatpush1.bf16.msra.mxu0 %v413
      %435 = vmatprep.subr.bf16.mxu0 0
      %436 = vmatpush1.bf16.msra.mxu0 %v414
      %437 = vmatprep.subr.bf16.mxu0 0
      %438 = vmatpush1.bf16.msra.mxu0 %v415
      %439 = vmatprep.subr.bf16.mxu0 0
      %440 = vmatpush1.bf16.msra.mxu0 %v416
      %441 = vmatprep.subr.bf16.mxu0 0
      %442 = vmatpush1.bf16.msra.mxu0 0
      %443 = vmatprep.subr.bf16.mxu0 0
      %444 = vmatpush1.bf16.msra.mxu0 0
      %445 = vmatprep.subr.bf16.mxu0 0
      %446 = vmatpush1.bf16.msra.mxu0 0
      %447 = vmatprep.subr.bf16.mxu0 0
      %448 = vmatpush1.bf16.msra.mxu0 0
      %449 = vmatprep.subr.bf16.mxu0 0
      %450 = vmatpush1.bf16.msra.mxu0 0
      %451 = vmatprep.subr.bf16.mxu0 0
      %452 = vmatpush1.bf16.msra.mxu0 0
      %453 = vmatprep.subr.bf16.mxu0 0
      %454 = vmatpush1.bf16.msra.mxu0 0
      %455 = vmatprep.subr.bf16.mxu0 0
      %456 = vmatpush1.bf16.msra.mxu0 0
      %457 = vmatprep.mubr.bf16.mxu0 0
      %458 = vmatmul.mubr.bf16.gmra.mrb[0].mxu0 %v345
      %v459 = vpop.f32.mrb[0].mxu0
      %v460 = vadd.f32 %v279, %v459
      %v461 = vpop.f32.mrb[0].mxu0
      %v462 = vpop.f32.mrb[0].mxu0
      %v463 = vadd.f32 %v279, %v462
      %v464 = vpop.f32.mrb[0].mxu0
      %465 = vmatprep.mubr.bf16.mxu0 0
      %466 = vmatmul.mubr.bf16.gmra.mrb[0].mxu0 %v346
      %v467 = vpop.f32.mrb[0].mxu0
      %v468 = vadd.f32 %v279, %v467
      %v469 = vpop.f32.mrb[0].mxu0
      %v470 = vpop.f32.mrb[0].mxu0
      %v471 = vadd.f32 %v279, %v470
      %v472 = vpop.f32.mrb[0].mxu0
      %473 = vmatprep.mubr.bf16.mxu0 0
      %474 = vmatmul.mubr.bf16.gmra.mrb[0].mxu0 %v347
      %v475 = vpop.f32.mrb[0].mxu0
      %v476 = vadd.f32 %v279, %v475
      %v477 = vpop.f32.mrb[0].mxu0
      %v478 = vpop.f32.mrb[0].mxu0
      %v479 = vadd.f32 %v279, %v478
      %v480 = vpop.f32.mrb[0].mxu0
      %481 = vmatprep.mubr.bf16.mxu0 0
      %482 = vmatmul.mubr.bf16.gmra.mrb[0].mxu0 %v348
      %v483 = vpop.f32.mrb[0].mxu0
      %v484 = vadd.f32 %v279, %v483
      %v485 = vpop.f32.mrb[0].mxu0
      %v486 = vpop.f32.mrb[0].mxu0
      %v487 = vadd.f32 %v279, %v486
      %v488 = vpop.f32.mrb[0].mxu0
      %489 = vmatprep.mubr.bf16.mxu0 0
      %490 = vmatmul.mubr.bf16.gmra.mrb[0].mxu0 %v349
      %v491 = vpop.f32.mrb[0].mxu0
      %v492 = vadd.f32 %v279, %v491
      %v493 = vpop.f32.mrb[0].mxu0
      %v494 = vpop.f32.mrb[0].mxu0
      %v495 = vadd.f32 %v279, %v494
      %v496 = vpop.f32.mrb[0].mxu0
      %497 = vmatprep.mubr.bf16.mxu0 0
      %498 = vmatmul.mubr.bf16.gmra.mrb[0].mxu0 %v350
      %v499 = vpop.f32.mrb[0].mxu0
      %v500 = vadd.f32 %v279, %v499
      %v501 = vpop.f32.mrb[0].mxu0
      %v502 = vpop.f32.mrb[0].mxu0
      %v503 = vadd.f32 %v279, %v502
      %v504 = vpop.f32.mrb[0].mxu0
      %505 = vmatprep.mubr.bf16.mxu0 0
      %506 = vmatmul.mubr.bf16.gmra.mrb[0].mxu0 %v351
      %v507 = vpop.f32.mrb[0].mxu0
      %v508 = vadd.f32 %v279, %v507
      %v509 = vpop.f32.mrb[0].mxu0
      %v510 = vpop.f32.mrb[0].mxu0
      %v511 = vadd.f32 %v279, %v510
      %v512 = vpop.f32.mrb[0].mxu0
      %513 = vmatprep.mubr.bf16.mxu0 0
      %514 = vmatmul.mubr.bf16.gmra.mrb[0].mxu0 %v352
      %v515 = vpop.f32.mrb[0].mxu0
      %v516 = vadd.f32 %v279, %v515
      %v517 = vpop.f32.mrb[0].mxu0
      %v518 = vpop.f32.mrb[0].mxu0
      %v519 = vadd.f32 %v279, %v518
      %v520 = vpop.f32.mrb[0].mxu0
      %521 = vmatprep.mubr.bf16.mxu0 0
      %522 = vmatmul.mubr.bf16.gmra.mrb[0].mxu0 %v353
      %v523 = vpop.f32.mrb[0].mxu0
      %v524 = vadd.f32 %v279, %v523
      %v525 = vpop.f32.mrb[0].mxu0
      %v526 = vpop.f32.mrb[0].mxu0
      %v527 = vadd.f32 %v279, %v526
      %v528 = vpop.f32.mrb[0].mxu0
      %529 = vmatprep.mubr.bf16.mxu0 0
      %530 = vmatmul.mubr.bf16.gmra.mrb[0].mxu0 %v354
      %v531 = vpop.f32.mrb[0].mxu0
      %v532 = vadd.f32 %v279, %v531
      %v533 = vpop.f32.mrb[0].mxu0
      %v534 = vpop.f32.mrb[0].mxu0
      %v535 = vadd.f32 %v279, %v534
      %v536 = vpop.f32.mrb[0].mxu0
      %537 = vmatprep.mubr.bf16.mxu0 0
      %538 = vmatmul.mubr.bf16.gmra.mrb[0].mxu0 %v355
      %v539 = vpop.f32.mrb[0].mxu0
      %v540 = vadd.f32 %v279, %v539
      %v541 = vpop.f32.mrb[0].mxu0
      %v542 = vpop.f32.mrb[0].mxu0
      %v543 = vadd.f32 %v279, %v542
      %v544 = vpop.f32.mrb[0].mxu0
      %545 = vmatprep.mubr.bf16.mxu0 0
      %546 = vmatmul.mubr.bf16.gmra.mrb[0].mxu0 %v356
      %v547 = vpop.f32.mrb[0].mxu0
      %v548 = vadd.f32 %v279, %v547
      %v549 = vpop.f32.mrb[0].mxu0
      %v550 = vpop.f32.mrb[0].mxu0
      %v551 = vadd.f32 %v279, %v550
      %v552 = vpop.f32.mrb[0].mxu0
      %553 = vmatprep.mubr.bf16.mxu0 0
      %554 = vmatmul.mubr.bf16.gmra.mrb[0].mxu0 %v357
      %v555 = vpop.f32.mrb[0].mxu0
      %v556 = vadd.f32 %v279, %v555
      %v557 = vpop.f32.mrb[0].mxu0
      %v558 = vpop.f32.mrb[0].mxu0
      %v559 = vadd.f32 %v279, %v558
      %v560 = vpop.f32.mrb[0].mxu0
      %561 = vmatprep.mubr.bf16.mxu0 0
      %562 = vmatmul.mubr.bf16.gmra.mrb[0].mxu0 %v358
      %v563 = vpop.f32.mrb[0].mxu0
      %v564 = vadd.f32 %v279, %v563
      %v565 = vpop.f32.mrb[0].mxu0
      %v566 = vpop.f32.mrb[0].mxu0
      %v567 = vadd.f32 %v279, %v566
      %v568 = vpop.f32.mrb[0].mxu0
      %569 = vmatprep.mubr.bf16.mxu0 0
      %570 = vmatmul.mubr.bf16.gmra.mrb[0].mxu0 %v359
      %v571 = vpop.f32.mrb[0].mxu0
      %v572 = vadd.f32 %v279, %v571
      %v573 = vpop.f32.mrb[0].mxu0
      %v574 = vpop.f32.mrb[0].mxu0
      %v575 = vadd.f32 %v279, %v574
      %v576 = vpop.f32.mrb[0].mxu0
      %577 = vmatprep.mubr.bf16.mxu0 0
      %578 = vmatmul.mubr.bf16.gmra.mrb[0].mxu0 %v360
      %v579 = vpop.f32.mrb[0].mxu0
      %v580 = vadd.f32 %v279, %v579
      %v581 = vpop.f32.mrb[0].mxu0
      %v582 = vpop.f32.mrb[0].mxu0
      %v583 = vadd.f32 %v279, %v582
      %v584 = vpop.f32.mrb[0].mxu0
      %585 = vdwg.mxu0
      %v586 = vmax.f32 %v460, 0.0
      %v587 = vmax.f32 %v463, 0.0
      %v588 = vmax.f32 %v468, 0.0
      %v589 = vmax.f32 %v471, 0.0
      %v590 = vmax.f32 %v476, 0.0
      %v591 = vmax.f32 %v479, 0.0
      %v592 = vmax.f32 %v484, 0.0
      %v593 = vmax.f32 %v487, 0.0
      %v594 = vmax.f32 %v492, 0.0
      %v595 = vmax.f32 %v495, 0.0
      %v596 = vmax.f32 %v500, 0.0
      %v597 = vmax.f32 %v503, 0.0
      %v598 = vmax.f32 %v508, 0.0
      %v599 = vmax.f32 %v511, 0.0
      %v600 = vmax.f32 %v516, 0.0
      %v601 = vmax.f32 %v519, 0.0
      %v602 = vmax.f32 %v524, 0.0
      %v603 = vmax.f32 %v527, 0.0
      %v604 = vmax.f32 %v532, 0.0
      %v605 = vmax.f32 %v535, 0.0
      %v606 = vmax.f32 %v540, 0.0
      %v607 = vmax.f32 %v543, 0.0
      %v608 = vmax.f32 %v548, 0.0
      %v609 = vmax.f32 %v551, 0.0
      %v610 = vmax.f32 %v556, 0.0
      %v611 = vmax.f32 %v559, 0.0
      %v612 = vmax.f32 %v564, 0.0
      %v613 = vmax.f32 %v567, 0.0
      %v614 = vmax.f32 %v572, 0.0
      %v615 = vmax.f32 %v575, 0.0
      %v616 = vmax.f32 %v580, 0.0
      %v617 = vmax.f32 %v583, 0.0
      %v618 = vpack.c.bf16 %v587, %v586
      %v619 = vpack.c.bf16 %v589, %v588
      %v620 = vpack.c.bf16 %v591, %v590
      %v621 = vpack.c.bf16 %v593, %v592
      %v622 = vpack.c.bf16 %v595, %v594
      %v623 = vpack.c.bf16 %v597, %v596
      %v624 = vpack.c.bf16 %v599, %v598
      %v625 = vpack.c.bf16 %v601, %v600
      %v626 = vpack.c.bf16 %v603, %v602
      %v627 = vpack.c.bf16 %v605, %v604
      %v628 = vpack.c.bf16 %v607, %v606
      %v629 = vpack.c.bf16 %v609, %v608
      %v630 = vpack.c.bf16 %v611, %v610
      %v631 = vpack.c.bf16 %v613, %v612
      %v632 = vpack.c.bf16 %v615, %v614
      %v633 = vpack.c.bf16 %v617, %v616
      %v650 = vunpack.c.l.b16 %v618
      %v651 = vunpack.c.h.b16 %v618
      %v652 = vunpack.c.l.b16 %v619
      %v653 = vunpack.c.h.b16 %v619
      %v654 = vunpack.c.l.b16 %v620
      %v655 = vunpack.c.h.b16 %v620
      %v656 = vunpack.c.l.b16 %v621
      %v657 = vunpack.c.h.b16 %v621
      %v658 = vunpack.c.l.b16 %v622
      %v659 = vunpack.c.h.b16 %v622
      %v660 = vunpack.c.l.b16 %v623
      %v661 = vunpack.c.h.b16 %v623
      %v662 = vunpack.c.l.b16 %v624
      %v663 = vunpack.c.h.b16 %v624
      %v664 = vunpack.c.l.b16 %v625
      %v665 = vunpack.c.h.b16 %v625
      %v666 = vunpack.c.l.b16 %v626
      %v667 = vunpack.c.h.b16 %v626
      %v668 = vunpack.c.l.b16 %v627
      %v669 = vunpack.c.h.b16 %v627
      %v670 = vunpack.c.l.b16 %v628
      %v671 = vunpack.c.h.b16 %v628
      %v672 = vunpack.c.l.b16 %v629
      %v673 = vunpack.c.h.b16 %v629
      %v674 = vunpack.c.l.b16 %v630
      %v675 = vunpack.c.h.b16 %v630
      %v676 = vunpack.c.l.b16 %v631
      %v677 = vunpack.c.h.b16 %v631
      %v678 = vunpack.c.l.b16 %v632
      %v679 = vunpack.c.h.b16 %v632
      %v680 = vunpack.c.l.b16 %v633
      %v681 = vunpack.c.h.b16 %v633
      %v682 = vpack.c.b16 %v650, %v650
      %v683 = vpack.c.b16 %v651, %v651
      %v684 = vpack.c.b16 %v652, %v652
      %v685 = vpack.c.b16 %v653, %v653
      %v686 = vpack.c.b16 %v654, %v654
      %v687 = vpack.c.b16 %v655, %v655
      %v688 = vpack.c.b16 %v656, %v656
      %v689 = vpack.c.b16 %v657, %v657
      %v690 = vpack.c.b16 %v658, %v658
      %v691 = vpack.c.b16 %v659, %v659
      %v692 = vpack.c.b16 %v660, %v660
      %v693 = vpack.c.b16 %v661, %v661
      %v694 = vpack.c.b16 %v662, %v662
      %v695 = vpack.c.b16 %v663, %v663
      %v696 = vpack.c.b16 %v664, %v664
      %v697 = vpack.c.b16 %v665, %v665
      %v698 = vpack.c.b16 %v666, %v666
      %v699 = vpack.c.b16 %v667, %v667
      %v700 = vpack.c.b16 %v668, %v668
      %v701 = vpack.c.b16 %v669, %v669
      %v702 = vpack.c.b16 %v670, %v670
      %v703 = vpack.c.b16 %v671, %v671
      %v704 = vpack.c.b16 %v672, %v672
      %v705 = vpack.c.b16 %v673, %v673
      %v706 = vpack.c.b16 %v674, %v674
      %v707 = vpack.c.b16 %v675, %v675
      %v708 = vpack.c.b16 %v676, %v676
      %v709 = vpack.c.b16 %v677, %v677
      %v710 = vpack.c.b16 %v678, %v678
      %v711 = vpack.c.b16 %v679, %v679
      %v712 = vpack.c.b16 %v680, %v680
      %v713 = vpack.c.b16 %v681, %v681
      %vm746 = vcmask 257024
      %747 = vst.msk [vmem:[%s223] sm:$0xf] %vm746, %v682
      %748 = vst.msk [vmem:[%s223 + $0x4] sm:$0xf] %vm746, %v683
      %749 = vst.msk [vmem:[%s223 + $0x8] sm:$0xf] %vm746, %v684
      %750 = vst.msk [vmem:[%s223 + $0xc] sm:$0xf] %vm746, %v685
      %751 = vst.msk [vmem:[%s223 + $0x10] sm:$0xf] %vm746, %v686
      %752 = vst.msk [vmem:[%s223 + $0x14] sm:$0xf] %vm746, %v687
      %753 = vst.msk [vmem:[%s223 + $0x18] sm:$0xf] %vm746, %v688
      %754 = vst.msk [vmem:[%s223 + $0x1c] sm:$0xf] %vm746, %v689
      %755 = vst.msk [vmem:[%s223 + $0x20] sm:$0xf] %vm746, %v690
      %756 = vst.msk [vmem:[%s223 + $0x24] sm:$0xf] %vm746, %v691
      %757 = vst.msk [vmem:[%s223 + $0x28] sm:$0xf] %vm746, %v692
      %758 = vst.msk [vmem:[%s223 + $0x2c] sm:$0xf] %vm746, %v693
      %759 = vst.msk [vmem:[%s223 + $0x30] sm:$0xf] %vm746, %v694
      %760 = vst.msk [vmem:[%s223 + $0x34] sm:$0xf] %vm746, %v695
      %761 = vst.msk [vmem:[%s223 + $0x38] sm:$0xf] %vm746, %v696
      %762 = vst.msk [vmem:[%s223 + $0x3c] sm:$0xf] %vm746, %v697
      %763 = vst.msk [vmem:[%s223 + $0x40] sm:$0xf] %vm746, %v698
      %764 = vst.msk [vmem:[%s223 + $0x44] sm:$0xf] %vm746, %v699
      %765 = vst.msk [vmem:[%s223 + $0x48] sm:$0xf] %vm746, %v700
      %766 = vst.msk [vmem:[%s223 + $0x4c] sm:$0xf] %vm746, %v701
      %767 = vst.msk [vmem:[%s223 + $0x50] sm:$0xf] %vm746, %v702
      %768 = vst.msk [vmem:[%s223 + $0x54] sm:$0xf] %vm746, %v703
      %769 = vst.msk [vmem:[%s223 + $0x58] sm:$0xf] %vm746, %v704
      %770 = vst.msk [vmem:[%s223 + $0x5c] sm:$0xf] %vm746, %v705
      %771 = vst.msk [vmem:[%s223 + $0x60] sm:$0xf] %vm746, %v706
      %772 = vst.msk [vmem:[%s223 + $0x64] sm:$0xf] %vm746, %v707
      %773 = vst.msk [vmem:[%s223 + $0x68] sm:$0xf] %vm746, %v708
      %774 = vst.msk [vmem:[%s223 + $0x6c] sm:$0xf] %vm746, %v709
      %775 = vst.msk [vmem:[%s223 + $0x70] sm:$0xf] %vm746, %v710
      %776 = vst.msk [vmem:[%s223 + $0x74] sm:$0xf] %vm746, %v711
      %777 = vst.msk [vmem:[%s223 + $0x78] sm:$0xf] %vm746, %v712
      %778 = vst.msk [vmem:[%s223 + $0x7c] sm:$0xf] %vm746, %v713
      %s779 = smul.u32 32, %s19
      %p780 = scmp.lt.s32.totalorder %s779, 63
      %s781 = scalar_select %p780, %s779, 63
      %p782 = scmp.lt.s32.totalorder %s18, 0
      %s783 = scalar_select %p782, %s18, 0
      %s784 = sadd.s32 %s783, %s781
      %s785 = smul.addr %s784, 4
      %s786 = scalar_lea.vmem %s3, %s785
      // Predicated region
      $region33: #{bottleneck_forward.3} parent=31 // pred_check
        %p787 = pneg %p124
      $region34: #{bottleneck_forward.3} parent=31 // pred_check_branch
        %789 = sbr.rel (%p787) target = $region36
      $region35: #{bottleneck_forward.3} parent=31 // pred_region
        %s790 = smul.u32 32, %s19
      $region36: #{bottleneck_forward.3} parent=31 // pred_fallthru
        _
    $region32: #{bottleneck_forward.3} parent=5 // pred_fallthru
      _
    %p791 = scmp.le.s32.totalorder 2, %s9
    // Predicated region
    $region37: #{bottleneck_forward.3} parent=5 // pred_check
      %p792 = pneg %p791
    $region38: #{bottleneck_forward.3} parent=5 // pred_check_branch
      %794 = sbr.rel (%p792) target = $region40
    $region39: #{bottleneck_forward.3} parent=5 // pred_region
      %s795 = ssub.s32 %s9, 2
      // Predicated region
      $region41: #{bottleneck_forward.3} parent=39 // pred_check
        %p796 = pneg %p130
      $region42: #{bottleneck_forward.3} parent=39 // pred_check_branch
        %798 = sbr.rel (%p796) target = $region44
      $region43: #{bottleneck_forward.3} parent=39 // pred_region
        %s799 = smul.u32 32, %s21
        %p800 = scmp.lt.s32.totalorder %s799, 63
        %s801 = scalar_select %p800, %s799, 63
        %p802 = scmp.lt.s32.totalorder %s20, 0
        %s803 = scalar_select %p802, %s20, 0
        %s804 = sadd.s32 %s803, %s801
        %s805 = smul.addr %s804, 4
        %s806 = scalar_lea.vmem %s3, %s805
      $region44: #{bottleneck_forward.3} parent=39 // pred_fallthru
        _
    $region40: #{bottleneck_forward.3} parent=5 // pred_fallthru
      _
  $region6: #{bottleneck_forward.3} parent=0 // loop_footer
    %s13 = sadd.s32 1, %s9
  $region7: #{bottleneck_forward.3} parent=0 // loop_footer_branch
    %8 = sbr.rel target = $region3
  $region8: #{bottleneck_forward.3} parent=0 // loop_exit
    _

// kernel: bottleneck_forward.5
$region0: #{bottleneck_forward.5}
  #allocation0 [shape = 'u32[]', space=smem, size = 0x4, offset = 0x4, fixed_abs, tag = 'smem constant byte address 0x4 - core index']
  #allocation1 [shape = 'u32[144,128]{1,0:T(1,128)}', space=vmem, size = 0x12000, scoped, tag = 'internal scratch']
  %s0 = inlined_call_operand.vmem [shape: bf16[512,32], index: 0, kind: input, shape index: {}]
  %s1 = inlined_call_operand.vmem [shape: bf16[32,128], index: 1, kind: input, shape index: {}]
  %s2 = inlined_call_operand.vmem [shape: f32[1,128], index: 2, kind: input, shape index: {}]
  %s3 = inlined_call_operand.vmem [shape: bf16[512,128], index: 3, kind: input, shape index: {}]
  %s4 = inlined_call_operand.vmem [shape: bf16[512,128], index: 4, kind: output, shape index: {}]
  %s5 = sld [smem:[#allocation0]]
  $region49: #{bottleneck_forward.5} parent=0
    _
  %s7 = ssub.s32 1, %s5
  %s8 = scalar_select 0, %s7, %s5
  loop: start=0, step=1, limit=4
  $region2: #{bottleneck_forward.5} parent=0 // loop_pre_header
    _
  $region3: #{bottleneck_forward.5} parent=0 // loop_header
    %s10 = sphi 0, %s14
    %p11 = scmp.ge.s32.totalorder %s10, 4
    %s17 = sphi 0, %s29
    %s18 = sphi 0, %s25
    %s19 = sphi 0, %s17
    %s20 = sphi 0, %s18
    %s21 = sphi 0, %s19
    %s22 = sphi 0, %s20
    %s32 = sphi 0, %s34
    %s35 = sphi 0, %s32
    %s36 = sphi 0, %s35
    %s52 = sphi 0, %s36
    %s58 = sphi 0, %s60
    %s61 = sphi 0, %s58
    %s62 = sphi 0, %s61
    %s78 = sphi 0, %s62
    %s84 = sphi 0, %s86
    %s87 = sphi 0, %s84
    %s88 = sphi 0, %s87
    %s104 = sphi 0, %s88
    %s112 = sphi 0, %s114
    %s115 = sphi 0, %s112
    %s116 = sphi 0, %s115
    %s132 = sphi 0, %s116
    %s140 = sphi 0, %s142
    %s143 = sphi 0, %s140
    %s144 = sphi 0, %s143
    %s160 = sphi 0, %s144
  $region4: #{bottleneck_forward.5} parent=0 // loop_header_branch
    %13 = sbr.rel (%p11) target = $region8
  $region5: #{bottleneck_forward.5} parent=0 // loop_body
    %s15 = ssub.s32 %s10, 1
    %s16 = ssub.s32 %s10, 2
    %s23 = sadd.s32 1, %s18
    %p24 = scmp.ge.s32.totalorder %s23, 2
    %s25 = scalar_select %p24, 0, %s23
    %s26 = sadd.s32 1, %s17
    %s27 = scalar_select %p24, %s26, %s17
    %p28 = scmp.ge.s32.totalorder %s27, 1
    %s29 = scalar_select %p28, 0, %s27
    %s30 = ssub.s32 %s18, %s25
    %p31 = scmp.eq.s32.totalorder %s30, 0
    %s33 = sadd.s32 %s32, 1
    %s34 = scalar_select %p31, %s32, %s33
    %p37 = pneg %p31
    %p38 = scmp.eq.s32.totalorder %s10, 1
    %p39 = por %p37, %p38
    %p40 = scmp.ne.s32.totalorder %s32, %s35
    %p41 = scmp.eq.s32.totalorder %s10, 0
    %p42 = por %p40, %p41
    %p43 = scmp.ne.s32.totalorder %s32, %s35
    %p44 = scmp.eq.s32.totalorder %s15, 1
    %p45 = por %p43, %p44
    %p46 = scmp.ne.s32.totalorder %s35, %s36
    %p47 = scmp.eq.s32.totalorder %s15, 0
    %p48 = por %p46, %p47
    %p49 = scmp.ne.s32.totalorder %s35, %s36
    %p50 = scmp.eq.s32.totalorder %s16, 1
    %p51 = por %p49, %p50
    %p53 = scmp.ne.s32.totalorder %s36, %s52
    %p54 = scmp.eq.s32.totalorder %s16, 0
    %p55 = por %p53, %p54
    %s56 = ssub.s32 %s17, %s29
    %p57 = scmp.eq.s32.totalorder %s56, 0
    %s59 = sadd.s32 %s58, 1
    %s60 = scalar_select %p57, %s58, %s59
    %p63 = pneg %p57
    %p64 = scmp.eq.s32.totalorder %s10, 1
    %p65 = por %p63, %p64
    %p66 = scmp.ne.s32.totalorder %s58, %s61
    %p67 = scmp.eq.s32.totalorder %s10, 0
    %p68 = por %p66, %p67
    %p69 = scmp.ne.s32.totalorder %s58, %s61
    %p70 = scmp.eq.s32.totalorder %s15, 1
    %p71 = por %p69, %p70
    %p72 = scmp.ne.s32.totalorder %s61, %s62
    %p73 = scmp.eq.s32.totalorder %s15, 0
    %p74 = por %p72, %p73
    %p75 = scmp.ne.s32.totalorder %s61, %s62
    %p76 = scmp.eq.s32.totalorder %s16, 1
    %p77 = por %p75, %p76
    %p79 = scmp.ne.s32.totalorder %s62, %s78
    %p80 = scmp.eq.s32.totalorder %s16, 0
    %p81 = por %p79, %p80
    %s82 = ssub.s32 %s17, %s29
    %p83 = scmp.eq.s32.totalorder %s82, 0
    %s85 = sadd.s32 %s84, 1
    %s86 = scalar_select %p83, %s84, %s85
    %p89 = pneg %p83
    %p90 = scmp.eq.s32.totalorder %s10, 1
    %p91 = por %p89, %p90
    %p92 = scmp.ne.s32.totalorder %s84, %s87
    %p93 = scmp.eq.s32.totalorder %s10, 0
    %p94 = por %p92, %p93
    %p95 = scmp.ne.s32.totalorder %s84, %s87
    %p96 = scmp.eq.s32.totalorder %s15, 1
    %p97 = por %p95, %p96
    %p98 = scmp.ne.s32.totalorder %s87, %s88
    %p99 = scmp.eq.s32.totalorder %s15, 0
    %p100 = por %p98, %p99
    %p101 = scmp.ne.s32.totalorder %s87, %s88
    %p102 = scmp.eq.s32.totalorder %s16, 1
    %p103 = por %p101, %p102
    %p105 = scmp.ne.s32.totalorder %s88, %s104
    %p106 = scmp.eq.s32.totalorder %s16, 0
    %p107 = por %p105, %p106
    %s108 = ssub.s32 %s18, %s25
    %s109 = ssub.s32 %s17, %s29
    %s110 = sor.u32 %s108, %s109
    %p111 = scmp.eq.s32.totalorder %s110, 0
    %s113 = sadd.s32 %s112, 1
    %s114 = scalar_select %p111, %s112, %s113
    %p117 = pneg %p111
    %p118 = scmp.eq.s32.totalorder %s10, 1
    %p119 = por %p117, %p118
    %p120 = scmp.ne.s32.totalorder %s112, %s115
    %p121 = scmp.eq.s32.totalorder %s10, 0
    %p122 = por %p120, %p121
    %p123 = scmp.ne.s32.totalorder %s112, %s115
    %p124 = scmp.eq.s32.totalorder %s15, 1
    %p125 = por %p123, %p124
    %p126 = scmp.ne.s32.totalorder %s115, %s116
    %p127 = scmp.eq.s32.totalorder %s15, 0
    %p128 = por %p126, %p127
    %p129 = scmp.ne.s32.totalorder %s115, %s116
    %p130 = scmp.eq.s32.totalorder %s16, 1
    %p131 = por %p129, %p130
    %p133 = scmp.ne.s32.totalorder %s116, %s132
    %p134 = scmp.eq.s32.totalorder %s16, 0
    %p135 = por %p133, %p134
    %s136 = ssub.s32 %s18, %s25
    %s137 = ssub.s32 %s17, %s29
    %s138 = sor.u32 %s136, %s137
    %p139 = scmp.eq.s32.totalorder %s138, 0
    %s141 = sadd.s32 %s140, 1
    %s142 = scalar_select %p139, %s140, %s141
    %p145 = pneg %p139
    %p146 = scmp.eq.s32.totalorder %s10, 1
    %p147 = por %p145, %p146
    %p148 = scmp.ne.s32.totalorder %s140, %s143
    %p149 = scmp.eq.s32.totalorder %s10, 0
    %p150 = por %p148, %p149
    %p151 = scmp.ne.s32.totalorder %s140, %s143
    %p152 = scmp.eq.s32.totalorder %s15, 1
    %p153 = por %p151, %p152
    %p154 = scmp.ne.s32.totalorder %s143, %s144
    %p155 = scmp.eq.s32.totalorder %s15, 0
    %p156 = por %p154, %p155
    %p157 = scmp.ne.s32.totalorder %s143, %s144
    %p158 = scmp.eq.s32.totalorder %s16, 1
    %p159 = por %p157, %p158
    %p161 = scmp.ne.s32.totalorder %s144, %s160
    %p162 = scmp.eq.s32.totalorder %s16, 0
    %p163 = por %p161, %p162
    %p164 = scmp.le.s32.totalorder 1, %s10
    %p165 = scmp.lt.s32.totalorder %s10, 3
    %p166 = pnand %p164, %p165
    %p167 = pneg %p166
    // Predicated region
    $region9: #{bottleneck_forward.5} parent=5 // pred_check
      _
    $region10: #{bottleneck_forward.5} parent=5 // pred_check_branch
      %169 = sbr.rel (%p166) target = $region12
    $region11: #{bottleneck_forward.5} parent=5 // pred_region
      %s170 = ssub.s32 %s10, 1
      // Predicated region
      $region13: #{bottleneck_forward.5} parent=11 // pred_check
        %p171 = pneg %p74
      $region14: #{bottleneck_forward.5} parent=11 // pred_check_branch
        %173 = sbr.rel (%p171) target = $region16
      $region15: #{bottleneck_forward.5} parent=11 // pred_region
        %p174 = scmp.lt.s32.totalorder %s19, 0
        %s175 = scalar_select %p174, %s19, 0
        %s176 = smul.addr %s175, 4
        %s177 = scalar_lea.vmem %s1, %s176
      $region16: #{bottleneck_forward.5} parent=11 // pred_fallthru
        _
      // Predicated region
      $region17: #{bottleneck_forward.5} parent=11 // pred_check
        %p178 = pneg %p100
      $region18: #{bottleneck_forward.5} parent=11 // pred_check_branch
        %180 = sbr.rel (%p178) target = $region20
      $region19: #{bottleneck_forward.5} parent=11 // pred_region
        %p181 = scmp.lt.s32.totalorder %s19, 0
        %s182 = scalar_select %p181, %s19, 0
        %s183 = scalar_lea.vmem %s2, %s182
      $region20: #{bottleneck_forward.5} parent=11 // pred_fallthru
        _
    $region12: #{bottleneck_forward.5} parent=5 // pred_fallthru
      _
    %p184 = scmp.lt.s32.totalorder %s10, 2
    // Predicated region
    $region21: #{bottleneck_forward.5} parent=5 // pred_check
      %p185 = pneg %p184
    $region22: #{bottleneck_forward.5} parent=5 // pred_check_branch
      %187 = sbr.rel (%p185) target = $region24
    $region23: #{bottleneck_forward.5} parent=5 // pred_region
      // Predicated region
      $region25: #{bottleneck_forward.5} parent=23 // pred_check
        %p188 = pneg %p42
      $region26: #{bottleneck_forward.5} parent=23 // pred_check_branch
        %190 = sbr.rel (%p188) target = $region28
      $region27: #{bottleneck_forward.5} parent=23 // pred_region
        %s191 = smul.u32 32, %s18
        %p192 = scmp.lt.s32.totalorder %s191, 63
        %s193 = scalar_select %p192, %s191, 63
        %s194 = smul.addr %s193, 4
        %s195 = scalar_lea.vmem %s0, %s194
        %s196 = smul.u32 32, %s18
      $region28: #{bottleneck_forward.5} parent=23 // pred_fallthru
        _
      // Predicated region
      $region29: #{bottleneck_forward.5} parent=23 // pred_check
        %p197 = pneg %p122
      $region30: #{bottleneck_forward.5} parent=23 // pred_check_branch
        %199 = sbr.rel (%p197) target = $region32
      $region31: #{bottleneck_forward.5} parent=23 // pred_region
        %s200 = smul.u32 32, %s18
        %p201 = scmp.lt.s32.totalorder %s200, 63
        %s202 = scalar_select %p201, %s200, 63
        %p203 = scmp.lt.s32.totalorder %s17, 0
        %s204 = scalar_select %p203, %s17, 0
        %s205 = sadd.s32 %s204, %s202
        %s206 = smul.addr %s205, 4
        %s207 = scalar_lea.vmem %s3, %s206
        %s208 = smul.u32 32, %s18
      $region32: #{bottleneck_forward.5} parent=23 // pred_fallthru
        _
    $region24: #{bottleneck_forward.5} parent=5 // pred_fallthru
      _
    %p209 = scmp.le.s32.totalorder 1, %s10
    %p210 = scmp.lt.s32.totalorder %s10, 3
    %p211 = pnand %p209, %p210
    %p212 = pneg %p211
    // Predicated region
    $region33: #{bottleneck_forward.5} parent=5 // pred_check
      _
    $region34: #{bottleneck_forward.5} parent=5 // pred_check_branch
      %214 = sbr.rel (%p211) target = $region36
    $region35: #{bottleneck_forward.5} parent=5 // pred_region
      %s215 = ssub.s32 %s10, 1
      %s216 = smul.u32 32, %s20
      %p217 = scmp.lt.s32.totalorder %s216, 63
      %s218 = scalar_select %p217, %s216, 63
      %s219 = smul.addr %s218, 4
      %s220 = scalar_lea.vmem %s0, %s219
      %p221 = pneg %p48
      %p222 = pneg %p45
      %p223 = scmp.lt.s32.totalorder %s19, 0
      %s224 = scalar_select %p223, %s19, 0
      %s225 = smul.addr %s224, 4
      %s226 = scalar_lea.vmem %s1, %s225
      %p227 = pneg %p74
      %p228 = pneg %p71
      %p229 = scmp.lt.s32.totalorder %s19, 0
      %s230 = scalar_select %p229, %s19, 0
      %s231 = scalar_lea.vmem %s2, %s230
      %p232 = pneg %p100
      %p233 = pneg %p97
      %s234 = smul.u32 32, %s20
      %p235 = scmp.lt.s32.totalorder %s234, 63
      %s236 = scalar_select %p235, %s234, 63
      %p237 = scmp.lt.s32.totalorder %s19, 0
      %s238 = scalar_select %p237, %s19, 0
      %s239 = sadd.s32 %s238, %s236
      %s240 = smul.addr %s239, 4
      %s241 = scalar_lea.vmem %s3, %s240
      %p242 = pneg %p128
      %p243 = pneg %p125
      %p244 = pneg %p156
      %p245 = pneg %p153
      %s246 = smul.u32 32, %s20
      %p247 = scmp.lt.s32.totalorder %s246, 63
      %s248 = scalar_select %p247, %s246, 63
      %p249 = scmp.lt.s32.totalorder %s19, 0
      %s250 = scalar_select %p249, %s19, 0
      %s251 = sadd.s32 %s250, %s248
      %s252 = smul.addr %s251, 4
      %s253 = scalar_lea.vmem %s4, %s252
      %s254 = smul.u32 32, %s20
      %p255 = scmp.lt.s32.totalorder %s254, 63
      %s256 = scalar_select %p255, %s254, 63
      %s257 = smul.addr %s256, 4
      %s258 = scalar_lea.vmem %s0, %s257
      %s259 = smul.u32 32, %s20
      %p260 = scmp.lt.s32.totalorder %s19, 0
      %s261 = scalar_select %p260, %s19, 0
      %s262 = smul.addr %s261, 4
      %s263 = scalar_lea.vmem %s1, %s262
      %p264 = scmp.lt.s32.totalorder %s19, 0
      %s265 = scalar_select %p264, %s19, 0
      %s266 = scalar_lea.vmem %s2, %s265
      %s267 = smul.u32 32, %s20
      %p268 = scmp.lt.s32.totalorder %s267, 63
      %s269 = scalar_select %p268, %s267, 63
      %p270 = scmp.lt.s32.totalorder %s19, 0
      %s271 = scalar_select %p270, %s19, 0
      %s272 = sadd.s32 %s271, %s269
      %s273 = smul.addr %s272, 4
      %s274 = scalar_lea.vmem %s3, %s273
      %s275 = smul.u32 32, %s20
      %s276 = smul.u32 32, %s20
      %p277 = scmp.lt.s32.totalorder %s276, 63
      %s278 = scalar_select %p277, %s276, 63
      %p279 = scmp.lt.s32.totalorder %s19, 0
      %s280 = scalar_select %p279, %s19, 0
      %s281 = sadd.s32 %s280, %s278
      %s282 = smul.addr %s281, 4
      %s283 = scalar_lea.vmem %s4, %s282
      %s284 = smul.u32 32, %s20
      %v286 = vld [vmem:[%s258] sm:$0xf]
      %v287 = vld [vmem:[%s258 + $0x4] sm:$0xf]
      %v288 = vld [vmem:[%s258 + $0x8] sm:$0xf]
      %v289 = vld [vmem:[%s258 + $0xc] sm:$0xf]
      %v290 = vld [vmem:[%s258 + $0x10] sm:$0xf]
      %v291 = vld [vmem:[%s258 + $0x14] sm:$0xf]
      %v292 = vld [vmem:[%s258 + $0x18] sm:$0xf]
      %v293 = vld [vmem:[%s258 + $0x1c] sm:$0xf]
      %v294 = vld [vmem:[%s258 + $0x20] sm:$0xf]
      %v295 = vld [vmem:[%s258 + $0x24] sm:$0xf]
      %v296 = vld [vmem:[%s258 + $0x28] sm:$0xf]
      %v297 = vld [vmem:[%s258 + $0x2c] sm:$0xf]
      %v298 = vld [vmem:[%s258 + $0x30] sm:$0xf]
      %v299 = vld [vmem:[%s258 + $0x34] sm:$0xf]
      %v300 = vld [vmem:[%s258 + $0x38] sm:$0xf]
      %v301 = vld [vmem:[%s258 + $0x3c] sm:$0xf]
      %v302 = vld [vmem:[%s258 + $0x40] sm:$0xf]
      %v303 = vld [vmem:[%s258 + $0x44] sm:$0xf]
      %v304 = vld [vmem:[%s258 + $0x48] sm:$0xf]
      %v305 = vld [vmem:[%s258 + $0x4c] sm:$0xf]
      %v306 = vld [vmem:[%s258 + $0x50] sm:$0xf]
      %v307 = vld [vmem:[%s258 + $0x54] sm:$0xf]
      %v308 = vld [vmem:[%s258 + $0x58] sm:$0xf]
      %v309 = vld [vmem:[%s258 + $0x5c] sm:$0xf]
      %v310 = vld [vmem:[%s258 + $0x60] sm:$0xf]
      %v311 = vld [vmem:[%s258 + $0x64] sm:$0xf]
      %v312 = vld [vmem:[%s258 + $0x68] sm:$0xf]
      %v313 = vld [vmem:[%s258 + $0x6c] sm:$0xf]
      %v314 = vld [vmem:[%s258 + $0x70] sm:$0xf]
      %v315 = vld [vmem:[%s258 + $0x74] sm:$0xf]
      %v316 = vld [vmem:[%s258 + $0x78] sm:$0xf]
      %v317 = vld [vmem:[%s258 + $0x7c] sm:$0xf]
      %v318 = vld [vmem:[%s263] sm:$0xf]
      %v319 = vld [vmem:[%s263 + $0x4] sm:$0xf]
      %v320 = vld [vmem:[%s263 + $0x8] sm:$0xf]
      %v321 = vld [vmem:[%s263 + $0xc] sm:$0xf]
      %v322 = vld [vmem:[%s266] sm:$0x1]
      %v324 = vlaneseq
      %v325 = vshrl.u32 %v324, 7
      %v326 = vsub.s32 0, %v325
      %v327 = vrot.slane %v322, %v326
      %v361 = vunpack.c.l.b16 %v286
      %v362 = vunpack.c.l.b16 %v287
      %v363 = vunpack.c.l.b16 %v288
      %v364 = vunpack.c.l.b16 %v289
      %v365 = vunpack.c.l.b16 %v290
      %v366 = vunpack.c.l.b16 %v291
      %v367 = vunpack.c.l.b16 %v292
      %v368 = vunpack.c.l.b16 %v293
      %v369 = vunpack.c.l.b16 %v294
      %v370 = vunpack.c.l.b16 %v295
      %v371 = vunpack.c.l.b16 %v296
      %v372 = vunpack.c.l.b16 %v297
      %v373 = vunpack.c.l.b16 %v298
      %v374 = vunpack.c.l.b16 %v299
      %v375 = vunpack.c.l.b16 %v300
      %v376 = vunpack.c.l.b16 %v301
      %v377 = vunpack.c.l.b16 %v302
      %v378 = vunpack.c.l.b16 %v303
      %v379 = vunpack.c.l.b16 %v304
      %v380 = vunpack.c.l.b16 %v305
      %v381 = vunpack.c.l.b16 %v306
      %v382 = vunpack.c.l.b16 %v307
      %v383 = vunpack.c.l.b16 %v308
      %v384 = vunpack.c.l.b16 %v309
      %v385 = vunpack.c.l.b16 %v310
      %v386 = vunpack.c.l.b16 %v311
      %v387 = vunpack.c.l.b16 %v312
      %v388 = vunpack.c.l.b16 %v313
      %v389 = vunpack.c.l.b16 %v314
      %v390 = vunpack.c.l.b16 %v315
      %v391 = vunpack.c.l.b16 %v316
      %v392 = vunpack.c.l.b16 %v317
      %v393 = vpack.c.b16 %v362, %v361
      %v394 = vpack.c.b16 %v364, %v363
      %v395 = vpack.c.b16 %v366, %v365
      %v396 = vpack.c.b16 %v368, %v367
      %v397 = vpack.c.b16 %v370, %v369
      %v398 = vpack.c.b16 %v372, %v371
      %v399 = vpack.c.b16 %v374, %v373
      %v400 = vpack.c.b16 %v376, %v375
      %v401 = vpack.c.b16 %v378, %v377
      %v402 = vpack.c.b16 %v380, %v379
      %v403 = vpack.c.b16 %v382, %v381
      %v404 = vpack.c.b16 %v384, %v383
      %v405 = vpack.c.b16 %v386, %v385
      %v406 = vpack.c.b16 %v388, %v387
      %v407 = vpack.c.b16 %v390, %v389
      %v408 = vpack.c.b16 %v392, %v391
      %v413 = vunpack.c.l.b16 %v318
      %v414 = vunpack.c.l.b16 %v319
      %v415 = vunpack.c.l.b16 %v320
      %v416 = vunpack.c.l.b16 %v321
      %v417 = vpack.c.b16 %v414, %v413
      %v418 = vpack.c.b16 %v416, %v415
      %vm421 = vcmask 261120
      %v423 = vsel %vm421, %v393, 0
      %v426 = vsel %vm421, %v394, 0
      %v429 = vsel %vm421, %v395, 0
      %v432 = vsel %vm421, %v396, 0
      %v435 = vsel %vm421, %v397, 0
      %v438 = vsel %vm421, %v398, 0
      %v441 = vsel %vm421, %v399, 0
      %v444 = vsel %vm421, %v400, 0
      %v447 = vsel %vm421, %v401, 0
      %v450 = vsel %vm421, %v402, 0
      %v453 = vsel %vm421, %v403, 0
      %v456 = vsel %vm421, %v404, 0
      %v459 = vsel %vm421, %v405, 0
      %v462 = vsel %vm421, %v406, 0
      %v465 = vsel %vm421, %v407, 0
      %v468 = vsel %vm421, %v408, 0
      %470 = vmatprep.subr.bf16.mxu0 0
      %471 = vmatpush1.bf16.msra.mxu0 %v417
      %472 = vmatprep.subr.bf16.mxu0 0
      %473 = vmatpush1.bf16.msra.mxu0 %v418
      %474 = vmatprep.subr.bf16.mxu0 0
      %475 = vmatpush1.bf16.msra.mxu0 0
      %476 = vmatprep.subr.bf16.mxu0 0
      %477 = vmatpush1.bf16.msra.mxu0 0
      %478 = vmatprep.subr.bf16.mxu0 0
      %479 = vmatpush1.bf16.msra.mxu0 0
      %480 = vmatprep.subr.bf16.mxu0 0
      %481 = vmatpush1.bf16.msra.mxu0 0
      %482 = vmatprep.subr.bf16.mxu0 0
      %483 = vmatpush1.bf16.msra.mxu0 0
      %484 = vmatprep.subr.bf16.mxu0 0
      %485 = vmatpush1.bf16.msra.mxu0 0
      %486 = vmatprep.subr.bf16.mxu0 0
      %487 = vmatpush1.bf16.msra.mxu0 0
      %488 = vmatprep.subr.bf16.mxu0 0
      %489 = vmatpush1.bf16.msra.mxu0 0
      %490 = vmatprep.subr.bf16.mxu0 0
      %491 = vmatpush1.bf16.msra.mxu0 0
      %492 = vmatprep.subr.bf16.mxu0 0
      %493 = vmatpush1.bf16.msra.mxu0 0
      %494 = vmatprep.subr.bf16.mxu0 0
      %495 = vmatpush1.bf16.msra.mxu0 0
      %496 = vmatprep.subr.bf16.mxu0 0
      %497 = vmatpush1.bf16.msra.mxu0 0
      %498 = vmatprep.subr.bf16.mxu0 0
      %499 = vmatpush1.bf16.msra.mxu0 0
      %500 = vmatprep.subr.bf16.mxu0 0
      %501 = vmatpush1.bf16.msra.mxu0 0
      %502 = vmatprep.mubr.bf16.mxu0 0
      %503 = vmatmul.mubr.bf16.gmra.mrb[0].mxu0 %v423
      %v504 = vpop.f32.mrb[0].mxu0
      %v505 = vadd.f32 %v327, %v504
      %v506 = vpop.f32.mrb[0].mxu0
      %v507 = vpop.f32.mrb[0].mxu0
      %v508 = vadd.f32 %v327, %v507
      %v509 = vpop.f32.mrb[0].mxu0
      %510 = vmatprep.mubr.bf16.mxu0 0
      %511 = vmatmul.mubr.bf16.gmra.mrb[0].mxu0 %v426
      %v512 = vpop.f32.mrb[0].mxu0
      %v513 = vadd.f32 %v327, %v512
      %v514 = vpop.f32.mrb[0].mxu0
      %v515 = vpop.f32.mrb[0].mxu0
      %v516 = vadd.f32 %v327, %v515
      %v517 = vpop.f32.mrb[0].mxu0
      %518 = vmatprep.mubr.bf16.mxu0 0
      %519 = vmatmul.mubr.bf16.gmra.mrb[0].mxu0 %v429
      %v520 = vpop.f32.mrb[0].mxu0
      %v521 = vadd.f32 %v327, %v520
      %v522 = vpop.f32.mrb[0].mxu0
      %v523 = vpop.f32.mrb[0].mxu0
      %v524 = vadd.f32 %v327, %v523
      %v525 = vpop.f32.mrb[0].mxu0
      %526 = vmatprep.mubr.bf16.mxu0 0
      %527 = vmatmul.mubr.bf16.gmra.mrb[0].mxu0 %v432
      %v528 = vpop.f32.mrb[0].mxu0
      %v529 = vadd.f32 %v327, %v528
      %v530 = vpop.f32.mrb[0].mxu0
      %v531 = vpop.f32.mrb[0].mxu0
      %v532 = vadd.f32 %v327, %v531
      %v533 = vpop.f32.mrb[0].mxu0
      %534 = vmatprep.mubr.bf16.mxu0 0
      %535 = vmatmul.mubr.bf16.gmra.mrb[0].mxu0 %v435
      %v536 = vpop.f32.mrb[0].mxu0
      %v537 = vadd.f32 %v327, %v536
      %v538 = vpop.f32.mrb[0].mxu0
      %v539 = vpop.f32.mrb[0].mxu0
      %v540 = vadd.f32 %v327, %v539
      %v541 = vpop.f32.mrb[0].mxu0
      %542 = vmatprep.mubr.bf16.mxu0 0
      %543 = vmatmul.mubr.bf16.gmra.mrb[0].mxu0 %v438
      %v544 = vpop.f32.mrb[0].mxu0
      %v545 = vadd.f32 %v327, %v544
      %v546 = vpop.f32.mrb[0].mxu0
      %v547 = vpop.f32.mrb[0].mxu0
      %v548 = vadd.f32 %v327, %v547
      %v549 = vpop.f32.mrb[0].mxu0
      %550 = vmatprep.mubr.bf16.mxu0 0
      %551 = vmatmul.mubr.bf16.gmra.mrb[0].mxu0 %v441
      %v552 = vpop.f32.mrb[0].mxu0
      %v553 = vadd.f32 %v327, %v552
      %v554 = vpop.f32.mrb[0].mxu0
      %v555 = vpop.f32.mrb[0].mxu0
      %v556 = vadd.f32 %v327, %v555
      %v557 = vpop.f32.mrb[0].mxu0
      %558 = vmatprep.mubr.bf16.mxu0 0
      %559 = vmatmul.mubr.bf16.gmra.mrb[0].mxu0 %v444
      %v560 = vpop.f32.mrb[0].mxu0
      %v561 = vadd.f32 %v327, %v560
      %v562 = vpop.f32.mrb[0].mxu0
      %v563 = vpop.f32.mrb[0].mxu0
      %v564 = vadd.f32 %v327, %v563
      %v565 = vpop.f32.mrb[0].mxu0
      %566 = vmatprep.mubr.bf16.mxu0 0
      %567 = vmatmul.mubr.bf16.gmra.mrb[0].mxu0 %v447
      %v568 = vpop.f32.mrb[0].mxu0
      %v569 = vadd.f32 %v327, %v568
      %v570 = vpop.f32.mrb[0].mxu0
      %v571 = vpop.f32.mrb[0].mxu0
      %v572 = vadd.f32 %v327, %v571
      %v573 = vpop.f32.mrb[0].mxu0
      %574 = vmatprep.mubr.bf16.mxu0 0
      %575 = vmatmul.mubr.bf16.gmra.mrb[0].mxu0 %v450
      %v576 = vpop.f32.mrb[0].mxu0
      %v577 = vadd.f32 %v327, %v576
      %v578 = vpop.f32.mrb[0].mxu0
      %v579 = vpop.f32.mrb[0].mxu0
      %v580 = vadd.f32 %v327, %v579
      %v581 = vpop.f32.mrb[0].mxu0
      %582 = vmatprep.mubr.bf16.mxu0 0
      %583 = vmatmul.mubr.bf16.gmra.mrb[0].mxu0 %v453
      %v584 = vpop.f32.mrb[0].mxu0
      %v585 = vadd.f32 %v327, %v584
      %v586 = vpop.f32.mrb[0].mxu0
      %v587 = vpop.f32.mrb[0].mxu0
      %v588 = vadd.f32 %v327, %v587
      %v589 = vpop.f32.mrb[0].mxu0
      %590 = vmatprep.mubr.bf16.mxu0 0
      %591 = vmatmul.mubr.bf16.gmra.mrb[0].mxu0 %v456
      %v592 = vpop.f32.mrb[0].mxu0
      %v593 = vadd.f32 %v327, %v592
      %v594 = vpop.f32.mrb[0].mxu0
      %v595 = vpop.f32.mrb[0].mxu0
      %v596 = vadd.f32 %v327, %v595
      %v597 = vpop.f32.mrb[0].mxu0
      %598 = vmatprep.mubr.bf16.mxu0 0
      %599 = vmatmul.mubr.bf16.gmra.mrb[0].mxu0 %v459
      %v600 = vpop.f32.mrb[0].mxu0
      %v601 = vadd.f32 %v327, %v600
      %v602 = vpop.f32.mrb[0].mxu0
      %v603 = vpop.f32.mrb[0].mxu0
      %v604 = vadd.f32 %v327, %v603
      %v605 = vpop.f32.mrb[0].mxu0
      %606 = vmatprep.mubr.bf16.mxu0 0
      %607 = vmatmul.mubr.bf16.gmra.mrb[0].mxu0 %v462
      %v608 = vpop.f32.mrb[0].mxu0
      %v609 = vadd.f32 %v327, %v608
      %v610 = vpop.f32.mrb[0].mxu0
      %v611 = vpop.f32.mrb[0].mxu0
      %v612 = vadd.f32 %v327, %v611
      %v613 = vpop.f32.mrb[0].mxu0
      %614 = vmatprep.mubr.bf16.mxu0 0
      %615 = vmatmul.mubr.bf16.gmra.mrb[0].mxu0 %v465
      %v616 = vpop.f32.mrb[0].mxu0
      %v617 = vadd.f32 %v327, %v616
      %v618 = vpop.f32.mrb[0].mxu0
      %v619 = vpop.f32.mrb[0].mxu0
      %v620 = vadd.f32 %v327, %v619
      %v621 = vpop.f32.mrb[0].mxu0
      %622 = vmatprep.mubr.bf16.mxu0 0
      %623 = vmatmul.mubr.bf16.gmra.mrb[0].mxu0 %v468
      %v624 = vpop.f32.mrb[0].mxu0
      %v625 = vadd.f32 %v327, %v624
      %v626 = vpop.f32.mrb[0].mxu0
      %v627 = vpop.f32.mrb[0].mxu0
      %v628 = vadd.f32 %v327, %v627
      %v629 = vpop.f32.mrb[0].mxu0
      %630 = vdwg.mxu0
      %v631 = vld [vmem:[%s274] sm:$0xf]
      %v632 = vld [vmem:[%s274 + $0x4] sm:$0xf]
      %v633 = vld [vmem:[%s274 + $0x8] sm:$0xf]
      %v634 = vld [vmem:[%s274 + $0xc] sm:$0xf]
      %v635 = vld [vmem:[%s274 + $0x10] sm:$0xf]
      %v636 = vld [vmem:[%s274 + $0x14] sm:$0xf]
      %v637 = vld [vmem:[%s274 + $0x18] sm:$0xf]
      %v638 = vld [vmem:[%s274 + $0x1c] sm:$0xf]
      %v639 = vld [vmem:[%s274 + $0x20] sm:$0xf]
      %v640 = vld [vmem:[%s274 + $0x24] sm:$0xf]
      %v641 = vld [vmem:[%s274 + $0x28] sm:$0xf]
      %v642 = vld [vmem:[%s274 + $0x2c] sm:$0xf]
      %v643 = vld [vmem:[%s274 + $0x30] sm:$0xf]
      %v644 = vld [vmem:[%s274 + $0x34] sm:$0xf]
      %v645 = vld [vmem:[%s274 + $0x38] sm:$0xf]
      %v646 = vld [vmem:[%s274 + $0x3c] sm:$0xf]
      %v647 = vld [vmem:[%s274 + $0x40] sm:$0xf]
      %v648 = vld [vmem:[%s274 + $0x44] sm:$0xf]
      %v649 = vld [vmem:[%s274 + $0x48] sm:$0xf]
      %v650 = vld [vmem:[%s274 + $0x4c] sm:$0xf]
      %v651 = vld [vmem:[%s274 + $0x50] sm:$0xf]
      %v652 = vld [vmem:[%s274 + $0x54] sm:$0xf]
      %v653 = vld [vmem:[%s274 + $0x58] sm:$0xf]
      %v654 = vld [vmem:[%s274 + $0x5c] sm:$0xf]
      %v655 = vld [vmem:[%s274 + $0x60] sm:$0xf]
      %v656 = vld [vmem:[%s274 + $0x64] sm:$0xf]
      %v657 = vld [vmem:[%s274 + $0x68] sm:$0xf]
      %v658 = vld [vmem:[%s274 + $0x6c] sm:$0xf]
      %v659 = vld [vmem:[%s274 + $0x70] sm:$0xf]
      %v660 = vld [vmem:[%s274 + $0x74] sm:$0xf]
      %v661 = vld [vmem:[%s274 + $0x78] sm:$0xf]
      %v662 = vld [vmem:[%s274 + $0x7c] sm:$0xf]
      %v663 = vunpack.c.l.bf16 %v631
      %v664 = vunpack.c.l.bf16 %v632
      %v665 = vunpack.c.l.bf16 %v633
      %v666 = vunpack.c.l.bf16 %v634
      %v667 = vunpack.c.l.bf16 %v635
      %v668 = vunpack.c.l.bf16 %v636
      %v669 = vunpack.c.l.bf16 %v637
      %v670 = vunpack.c.l.bf16 %v638
      %v671 = vunpack.c.l.bf16 %v639
      %v672 = vunpack.c.l.bf16 %v640
      %v673 = vunpack.c.l.bf16 %v641
      %v674 = vunpack.c.l.bf16 %v642
      %v675 = vunpack.c.l.bf16 %v643
      %v676 = vunpack.c.l.bf16 %v644
      %v677 = vunpack.c.l.bf16 %v645
      %v678 = vunpack.c.l.bf16 %v646
      %v679 = vunpack.c.l.bf16 %v647
      %v680 = vunpack.c.l.bf16 %v648
      %v681 = vunpack.c.l.bf16 %v649
      %v682 = vunpack.c.l.bf16 %v650
      %v683 = vunpack.c.l.bf16 %v651
      %v684 = vunpack.c.l.bf16 %v652
      %v685 = vunpack.c.l.bf16 %v653
      %v686 = vunpack.c.l.bf16 %v654
      %v687 = vunpack.c.l.bf16 %v655
      %v688 = vunpack.c.l.bf16 %v656
      %v689 = vunpack.c.l.bf16 %v657
      %v690 = vunpack.c.l.bf16 %v658
      %v691 = vunpack.c.l.bf16 %v659
      %v692 = vunpack.c.l.bf16 %v660
      %v693 = vunpack.c.l.bf16 %v661
      %v694 = vunpack.c.l.bf16 %v662
      %v695 = vadd.f32 %v505, %v663
      %v696 = vadd.f32 %v508, %v664
      %v697 = vadd.f32 %v513, %v665
      %v698 = vadd.f32 %v516, %v666
      %v699 = vadd.f32 %v521, %v667
      %v700 = vadd.f32 %v524, %v668
      %v701 = vadd.f32 %v529, %v669
      %v702 = vadd.f32 %v532, %v670
      %v703 = vadd.f32 %v537, %v671
      %v704 = vadd.f32 %v540, %v672
      %v705 = vadd.f32 %v545, %v673
      %v706 = vadd.f32 %v548, %v674
      %v707 = vadd.f32 %v553, %v675
      %v708 = vadd.f32 %v556, %v676
      %v709 = vadd.f32 %v561, %v677
      %v710 = vadd.f32 %v564, %v678
      %v711 = vadd.f32 %v569, %v679
      %v712 = vadd.f32 %v572, %v680
      %v713 = vadd.f32 %v577, %v681
      %v714 = vadd.f32 %v580, %v682
      %v715 = vadd.f32 %v585, %v683
      %v716 = vadd.f32 %v588, %v684
      %v717 = vadd.f32 %v593, %v685
      %v718 = vadd.f32 %v596, %v686
      %v719 = vadd.f32 %v601, %v687
      %v720 = vadd.f32 %v604, %v688
      %v721 = vadd.f32 %v609, %v689
      %v722 = vadd.f32 %v612, %v690
      %v723 = vadd.f32 %v617, %v691
      %v724 = vadd.f32 %v620, %v692
      %v725 = vadd.f32 %v625, %v693
      %v726 = vadd.f32 %v628, %v694
      %v727 = vmax.f32 %v695, 0.0
      %v728 = vmax.f32 %v696, 0.0
      %v729 = vmax.f32 %v697, 0.0
      %v730 = vmax.f32 %v698, 0.0
      %v731 = vmax.f32 %v699, 0.0
      %v732 = vmax.f32 %v700, 0.0
      %v733 = vmax.f32 %v701, 0.0
      %v734 = vmax.f32 %v702, 0.0
      %v735 = vmax.f32 %v703, 0.0
      %v736 = vmax.f32 %v704, 0.0
      %v737 = vmax.f32 %v705, 0.0
      %v738 = vmax.f32 %v706, 0.0
      %v739 = vmax.f32 %v707, 0.0
      %v740 = vmax.f32 %v708, 0.0
      %v741 = vmax.f32 %v709, 0.0
      %v742 = vmax.f32 %v710, 0.0
      %v743 = vmax.f32 %v711, 0.0
      %v744 = vmax.f32 %v712, 0.0
      %v745 = vmax.f32 %v713, 0.0
      %v746 = vmax.f32 %v714, 0.0
      %v747 = vmax.f32 %v715, 0.0
      %v748 = vmax.f32 %v716, 0.0
      %v749 = vmax.f32 %v717, 0.0
      %v750 = vmax.f32 %v718, 0.0
      %v751 = vmax.f32 %v719, 0.0
      %v752 = vmax.f32 %v720, 0.0
      %v753 = vmax.f32 %v721, 0.0
      %v754 = vmax.f32 %v722, 0.0
      %v755 = vmax.f32 %v723, 0.0
      %v756 = vmax.f32 %v724, 0.0
      %v757 = vmax.f32 %v725, 0.0
      %v758 = vmax.f32 %v726, 0.0
      %v759 = vpack.c.bf16 %v728, %v727
      %v760 = vpack.c.bf16 %v730, %v729
      %v761 = vpack.c.bf16 %v732, %v731
      %v762 = vpack.c.bf16 %v734, %v733
      %v763 = vpack.c.bf16 %v736, %v735
      %v764 = vpack.c.bf16 %v738, %v737
      %v765 = vpack.c.bf16 %v740, %v739
      %v766 = vpack.c.bf16 %v742, %v741
      %v767 = vpack.c.bf16 %v744, %v743
      %v768 = vpack.c.bf16 %v746, %v745
      %v769 = vpack.c.bf16 %v748, %v747
      %v770 = vpack.c.bf16 %v750, %v749
      %v771 = vpack.c.bf16 %v752, %v751
      %v772 = vpack.c.bf16 %v754, %v753
      %v773 = vpack.c.bf16 %v756, %v755
      %v774 = vpack.c.bf16 %v758, %v757
      %v791 = vunpack.c.l.b16 %v759
      %v792 = vunpack.c.h.b16 %v759
      %v793 = vunpack.c.l.b16 %v760
      %v794 = vunpack.c.h.b16 %v760
      %v795 = vunpack.c.l.b16 %v761
      %v796 = vunpack.c.h.b16 %v761
      %v797 = vunpack.c.l.b16 %v762
      %v798 = vunpack.c.h.b16 %v762
      %v799 = vunpack.c.l.b16 %v763
      %v800 = vunpack.c.h.b16 %v763
      %v801 = vunpack.c.l.b16 %v764
      %v802 = vunpack.c.h.b16 %v764
      %v803 = vunpack.c.l.b16 %v765
      %v804 = vunpack.c.h.b16 %v765
      %v805 = vunpack.c.l.b16 %v766
      %v806 = vunpack.c.h.b16 %v766
      %v807 = vunpack.c.l.b16 %v767
      %v808 = vunpack.c.h.b16 %v767
      %v809 = vunpack.c.l.b16 %v768
      %v810 = vunpack.c.h.b16 %v768
      %v811 = vunpack.c.l.b16 %v769
      %v812 = vunpack.c.h.b16 %v769
      %v813 = vunpack.c.l.b16 %v770
      %v814 = vunpack.c.h.b16 %v770
      %v815 = vunpack.c.l.b16 %v771
      %v816 = vunpack.c.h.b16 %v771
      %v817 = vunpack.c.l.b16 %v772
      %v818 = vunpack.c.h.b16 %v772
      %v819 = vunpack.c.l.b16 %v773
      %v820 = vunpack.c.h.b16 %v773
      %v821 = vunpack.c.l.b16 %v774
      %v822 = vunpack.c.h.b16 %v774
      %v823 = vpack.c.b16 %v791, %v791
      %v824 = vpack.c.b16 %v792, %v792
      %v825 = vpack.c.b16 %v793, %v793
      %v826 = vpack.c.b16 %v794, %v794
      %v827 = vpack.c.b16 %v795, %v795
      %v828 = vpack.c.b16 %v796, %v796
      %v829 = vpack.c.b16 %v797, %v797
      %v830 = vpack.c.b16 %v798, %v798
      %v831 = vpack.c.b16 %v799, %v799
      %v832 = vpack.c.b16 %v800, %v800
      %v833 = vpack.c.b16 %v801, %v801
      %v834 = vpack.c.b16 %v802, %v802
      %v835 = vpack.c.b16 %v803, %v803
      %v836 = vpack.c.b16 %v804, %v804
      %v837 = vpack.c.b16 %v805, %v805
      %v838 = vpack.c.b16 %v806, %v806
      %v839 = vpack.c.b16 %v807, %v807
      %v840 = vpack.c.b16 %v808, %v808
      %v841 = vpack.c.b16 %v809, %v809
      %v842 = vpack.c.b16 %v810, %v810
      %v843 = vpack.c.b16 %v811, %v811
      %v844 = vpack.c.b16 %v812, %v812
      %v845 = vpack.c.b16 %v813, %v813
      %v846 = vpack.c.b16 %v814, %v814
      %v847 = vpack.c.b16 %v815, %v815
      %v848 = vpack.c.b16 %v816, %v816
      %v849 = vpack.c.b16 %v817, %v817
      %v850 = vpack.c.b16 %v818, %v818
      %v851 = vpack.c.b16 %v819, %v819
      %v852 = vpack.c.b16 %v820, %v820
      %v853 = vpack.c.b16 %v821, %v821
      %v854 = vpack.c.b16 %v822, %v822
      %887 = vst [vmem:[%s283] sm:$0xf] %v823
      %888 = vst [vmem:[%s283 + $0x4] sm:$0xf] %v824
      %889 = vst [vmem:[%s283 + $0x8] sm:$0xf] %v825
      %890 = vst [vmem:[%s283 + $0xc] sm:$0xf] %v826
      %891 = vst [vmem:[%s283 + $0x10] sm:$0xf] %v827
      %892 = vst [vmem:[%s283 + $0x14] sm:$0xf] %v828
      %893 = vst [vmem:[%s283 + $0x18] sm:$0xf] %v829
      %894 = vst [vmem:[%s283 + $0x1c] sm:$0xf] %v830
      %895 = vst [vmem:[%s283 + $0x20] sm:$0xf] %v831
      %896 = vst [vmem:[%s283 + $0x24] sm:$0xf] %v832
      %897 = vst [vmem:[%s283 + $0x28] sm:$0xf] %v833
      %898 = vst [vmem:[%s283 + $0x2c] sm:$0xf] %v834
      %899 = vst [vmem:[%s283 + $0x30] sm:$0xf] %v835
      %900 = vst [vmem:[%s283 + $0x34] sm:$0xf] %v836
      %901 = vst [vmem:[%s283 + $0x38] sm:$0xf] %v837
      %902 = vst [vmem:[%s283 + $0x3c] sm:$0xf] %v838
      %903 = vst [vmem:[%s283 + $0x40] sm:$0xf] %v839
      %904 = vst [vmem:[%s283 + $0x44] sm:$0xf] %v840
      %905 = vst [vmem:[%s283 + $0x48] sm:$0xf] %v841
      %906 = vst [vmem:[%s283 + $0x4c] sm:$0xf] %v842
      %907 = vst [vmem:[%s283 + $0x50] sm:$0xf] %v843
      %908 = vst [vmem:[%s283 + $0x54] sm:$0xf] %v844
      %909 = vst [vmem:[%s283 + $0x58] sm:$0xf] %v845
      %910 = vst [vmem:[%s283 + $0x5c] sm:$0xf] %v846
      %911 = vst [vmem:[%s283 + $0x60] sm:$0xf] %v847
      %912 = vst [vmem:[%s283 + $0x64] sm:$0xf] %v848
      %913 = vst [vmem:[%s283 + $0x68] sm:$0xf] %v849
      %914 = vst [vmem:[%s283 + $0x6c] sm:$0xf] %v850
      %915 = vst [vmem:[%s283 + $0x70] sm:$0xf] %v851
      %916 = vst [vmem:[%s283 + $0x74] sm:$0xf] %v852
      %917 = vst [vmem:[%s283 + $0x78] sm:$0xf] %v853
      %918 = vst [vmem:[%s283 + $0x7c] sm:$0xf] %v854
      %s919 = smul.u32 32, %s20
      %p920 = scmp.lt.s32.totalorder %s919, 63
      %s921 = scalar_select %p920, %s919, 63
      %p922 = scmp.lt.s32.totalorder %s19, 0
      %s923 = scalar_select %p922, %s19, 0
      %s924 = sadd.s32 %s923, %s921
      %s925 = smul.addr %s924, 4
      %s926 = scalar_lea.vmem %s4, %s925
      // Predicated region
      $region37: #{bottleneck_forward.5} parent=35 // pred_check
        %p927 = pneg %p153
      $region38: #{bottleneck_forward.5} parent=35 // pred_check_branch
        %929 = sbr.rel (%p927) target = $region40
      $region39: #{bottleneck_forward.5} parent=35 // pred_region
        %s930 = smul.u32 32, %s20
      $region40: #{bottleneck_forward.5} parent=35 // pred_fallthru
        _
    $region36: #{bottleneck_forward.5} parent=5 // pred_fallthru
      _
    %p931 = scmp.le.s32.totalorder 2, %s10
    // Predicated region
    $region41: #{bottleneck_forward.5} parent=5 // pred_check
      %p932 = pneg %p931
    $region42: #{bottleneck_forward.5} parent=5 // pred_check_branch
      %934 = sbr.rel (%p932) target = $region44
    $region43: #{bottleneck_forward.5} parent=5 // pred_region
      %s935 = ssub.s32 %s10, 2
      // Predicated region
      $region45: #{bottleneck_forward.5} parent=43 // pred_check
        %p936 = pneg %p159
      $region46: #{bottleneck_forward.5} parent=43 // pred_check_branch
        %938 = sbr.rel (%p936) target = $region48
      $region47: #{bottleneck_forward.5} parent=43 // pred_region
        %s939 = smul.u32 32, %s22
        %p940 = scmp.lt.s32.totalorder %s939, 63
        %s941 = scalar_select %p940, %s939, 63
        %p942 = scmp.lt.s32.totalorder %s21, 0
        %s943 = scalar_select %p942, %s21, 0
        %s944 = sadd.s32 %s943, %s941
        %s945 = smul.addr %s944, 4
        %s946 = scalar_lea.vmem %s4, %s945
      $region48: #{bottleneck_forward.5} parent=43 // pred_fallthru
        _
    $region44: #{bottleneck_forward.5} parent=5 // pred_fallthru
      _
  $region6: #{bottleneck_forward.5} parent=0 // loop_footer
    %s14 = sadd.s32 1, %s10
  $region7: #{bottleneck_forward.5} parent=0 // loop_footer_branch
    %9 = sbr.rel target = $region3
  $region8: #{bottleneck_forward.5} parent=0 // loop_exit
    _

// kernel: bottleneck_forward.4
$region0: #{bottleneck_forward.4}
  #allocation0 [shape = 'u32[]', space=smem, size = 0x4, offset = 0x4, fixed_abs, tag = 'smem constant byte address 0x4 - core index']
  #allocation1 [shape = 'u32[144,128]{1,0:T(1,128)}', space=vmem, size = 0x12000, scoped, tag = 'internal scratch']
  #allocation2 [shape = 'bf16[10,16,32]{2,1,0:T(16,128)(2,1)}', space=vmem, size = 0xa000, scoped, tag = 'scratch operand']
  #allocation3 [shape = 'f32[128,32]{1,0:T(8,128)}', space=vmem, size = 0x10000, scoped, tag = 'scratch operand']
  %s0 = inlined_call_operand.vmem [shape: bf16[2,16,16,32], index: 0, kind: input, shape index: {}]
  %s1 = inlined_call_operand.vmem [shape: bf16[3,3,32,32], index: 1, kind: input, shape index: {}]
  %s2 = inlined_call_operand.vmem [shape: f32[1,32], index: 2, kind: input, shape index: {}]
  %s3 = inlined_call_operand.vmem [shape: bf16[2,16,16,32], index: 3, kind: output, shape index: {}]
  %s4 = sld [smem:[#allocation0]]
  $region45: #{bottleneck_forward.4} parent=0
    _
  %s6 = ssub.s32 1, %s4
  %s7 = scalar_select 0, %s6, %s4
  loop: start=0, step=1, limit=6
  $region2: #{bottleneck_forward.4} parent=0 // loop_pre_header
    _
  $region3: #{bottleneck_forward.4} parent=0 // loop_header
    %s9 = sphi 0, %s13
    %p10 = scmp.ge.s32.totalorder %s9, 6
    %s16 = sphi 0, %s28
    %s17 = sphi 0, %s24
    %s18 = sphi 0, %s16
    %s19 = sphi 0, %s17
    %s20 = sphi 0, %s18
    %s21 = sphi 0, %s19
    %s31 = sphi 0, %s33
    %s34 = sphi 0, %s31
    %s35 = sphi 0, %s34
    %s51 = sphi 0, %s35
    %s55 = sphi 0, %s55
    %s57 = sphi 0, %s55
    %s58 = sphi 0, %s57
    %s72 = sphi 0, %s58
    %s76 = sphi 0, %s76
    %s78 = sphi 0, %s76
    %s79 = sphi 0, %s78
    %s93 = sphi 0, %s79
    %s101 = sphi 0, %s103
    %s104 = sphi 0, %s101
    %s105 = sphi 0, %s104
    %s121 = sphi 0, %s105
  $region4: #{bottleneck_forward.4} parent=0 // loop_header_branch
    %12 = sbr.rel (%p10) target = $region8
  $region5: #{bottleneck_forward.4} parent=0 // loop_body
    %s14 = ssub.s32 %s9, 1
    %s15 = ssub.s32 %s9, 2
    %s22 = sadd.s32 1, %s17
    %p23 = scmp.ge.s32.totalorder %s22, 2
    %s24 = scalar_select %p23, 0, %s22
    %s25 = sadd.s32 1, %s16
    %s26 = scalar_select %p23, %s25, %s16
    %p27 = scmp.ge.s32.totalorder %s26, 2
    %s28 = scalar_select %p27, 0, %s26
    %s29 = ssub.s32 %s16, %s28
    %p30 = scmp.eq.s32.totalorder %s29, 0
    %s32 = sadd.s32 %s31, 1
    %s33 = scalar_select %p30, %s31, %s32
    %p36 = pneg %p30
    %p37 = scmp.eq.s32.totalorder %s9, 3
    %p38 = por %p36, %p37
    %p39 = scmp.ne.s32.totalorder %s31, %s34
    %p40 = scmp.eq.s32.totalorder %s9, 0
    %p41 = por %p39, %p40
    %p42 = scmp.ne.s32.totalorder %s31, %s34
    %p43 = scmp.eq.s32.totalorder %s14, 3
    %p44 = por %p42, %p43
    %p45 = scmp.ne.s32.totalorder %s34, %s35
    %p46 = scmp.eq.s32.totalorder %s14, 0
    %p47 = por %p45, %p46
    %p48 = scmp.ne.s32.totalorder %s34, %s35
    %p49 = scmp.eq.s32.totalorder %s15, 3
    %p50 = por %p48, %p49
    %p52 = scmp.ne.s32.totalorder %s35, %s51
    %p53 = scmp.eq.s32.totalorder %s15, 0
    %p54 = por %p52, %p53
    %s56 = sadd.s32 %s55, 1
    %p59 = scmp.eq.s32.totalorder %s9, 3
    %p60 = scmp.ne.s32.totalorder %s55, %s57
    %p61 = scmp.eq.s32.totalorder %s9, 0
    %p62 = por %p60, %p61
    %p63 = scmp.ne.s32.totalorder %s55, %s57
    %p64 = scmp.eq.s32.totalorder %s14, 3
    %p65 = por %p63, %p64
    %p66 = scmp.ne.s32.totalorder %s57, %s58
    %p67 = scmp.eq.s32.totalorder %s14, 0
    %p68 = por %p66, %p67
    %p69 = scmp.ne.s32.totalorder %s57, %s58
    %p70 = scmp.eq.s32.totalorder %s15, 3
    %p71 = por %p69, %p70
    %p73 = scmp.ne.s32.totalorder %s58, %s72
    %p74 = scmp.eq.s32.totalorder %s15, 0
    %p75 = por %p73, %p74
    %s77 = sadd.s32 %s76, 1
    %p80 = scmp.eq.s32.totalorder %s9, 3
    %p81 = scmp.ne.s32.totalorder %s76, %s78
    %p82 = scmp.eq.s32.totalorder %s9, 0
    %p83 = por %p81, %p82
    %p84 = scmp.ne.s32.totalorder %s76, %s78
    %p85 = scmp.eq.s32.totalorder %s14, 3
    %p86 = por %p84, %p85
    %p87 = scmp.ne.s32.totalorder %s78, %s79
    %p88 = scmp.eq.s32.totalorder %s14, 0
    %p89 = por %p87, %p88
    %p90 = scmp.ne.s32.totalorder %s78, %s79
    %p91 = scmp.eq.s32.totalorder %s15, 3
    %p92 = por %p90, %p91
    %p94 = scmp.ne.s32.totalorder %s79, %s93
    %p95 = scmp.eq.s32.totalorder %s15, 0
    %p96 = por %p94, %p95
    %s97 = ssub.s32 %s16, %s28
    %s98 = ssub.s32 %s17, %s24
    %s99 = sor.u32 %s97, %s98
    %p100 = scmp.eq.s32.totalorder %s99, 0
    %s102 = sadd.s32 %s101, 1
    %s103 = scalar_select %p100, %s101, %s102
    %p106 = pneg %p100
    %p107 = scmp.eq.s32.totalorder %s9, 3
    %p108 = por %p106, %p107
    %p109 = scmp.ne.s32.totalorder %s101, %s104
    %p110 = scmp.eq.s32.totalorder %s9, 0
    %p111 = por %p109, %p110
    %p112 = scmp.ne.s32.totalorder %s101, %s104
    %p113 = scmp.eq.s32.totalorder %s14, 3
    %p114 = por %p112, %p113
    %p115 = scmp.ne.s32.totalorder %s104, %s105
    %p116 = scmp.eq.s32.totalorder %s14, 0
    %p117 = por %p115, %p116
    %p118 = scmp.ne.s32.totalorder %s104, %s105
    %p119 = scmp.eq.s32.totalorder %s15, 3
    %p120 = por %p118, %p119
    %p122 = scmp.ne.s32.totalorder %s105, %s121
    %p123 = scmp.eq.s32.totalorder %s15, 0
    %p124 = por %p122, %p123
    %p125 = scmp.le.s32.totalorder 1, %s9
    %p126 = scmp.lt.s32.totalorder %s9, 5
    %p127 = pnand %p125, %p126
    %p128 = pneg %p127
    // Predicated region
    $region9: #{bottleneck_forward.4} parent=5 // pred_check
      _
    $region10: #{bottleneck_forward.4} parent=5 // pred_check_branch
      %130 = sbr.rel (%p127) target = $region12
    $region11: #{bottleneck_forward.4} parent=5 // pred_region
      %s131 = ssub.s32 %s9, 1
      // Predicated region
      $region13: #{bottleneck_forward.4} parent=11 // pred_check
        %p132 = pneg %p68
      $region14: #{bottleneck_forward.4} parent=11 // pred_check_branch
        %134 = sbr.rel (%p132) target = $region16
      $region15: #{bottleneck_forward.4} parent=11 // pred_region
        _
      $region16: #{bottleneck_forward.4} parent=11 // pred_fallthru
        _
      // Predicated region
      $region17: #{bottleneck_forward.4} parent=11 // pred_check
        %p135 = pneg %p89
      $region18: #{bottleneck_forward.4} parent=11 // pred_check_branch
        %137 = sbr.rel (%p135) target = $region20
      $region19: #{bottleneck_forward.4} parent=11 // pred_region
        _
      $region20: #{bottleneck_forward.4} parent=11 // pred_fallthru
        _
    $region12: #{bottleneck_forward.4} parent=5 // pred_fallthru
      _
    %p138 = scmp.lt.s32.totalorder %s9, 4
    // Predicated region
    $region21: #{bottleneck_forward.4} parent=5 // pred_check
      %p139 = pneg %p138
    $region22: #{bottleneck_forward.4} parent=5 // pred_check_branch
      %141 = sbr.rel (%p139) target = $region24
    $region23: #{bottleneck_forward.4} parent=5 // pred_region
      // Predicated region
      $region25: #{bottleneck_forward.4} parent=23 // pred_check
        %p142 = pneg %p41
      $region26: #{bottleneck_forward.4} parent=23 // pred_check_branch
        %144 = sbr.rel (%p142) target = $region28
      $region27: #{bottleneck_forward.4} parent=23 // pred_region
        %p145 = scmp.lt.s32.totalorder %s16, 1
        %s146 = scalar_select %p145, %s16, 1
        %s147 = smul.addr %s146, 32
        %s148 = smul.addr %s147, 4
        %s149 = scalar_lea.vmem %s0, %s148
      $region28: #{bottleneck_forward.4} parent=23 // pred_fallthru
        _
    $region24: #{bottleneck_forward.4} parent=5 // pred_fallthru
      _
    %p150 = scmp.le.s32.totalorder 1, %s9
    %p151 = scmp.lt.s32.totalorder %s9, 5
    %p152 = pnand %p150, %p151
    %p153 = pneg %p152
    // Predicated region
    $region29: #{bottleneck_forward.4} parent=5 // pred_check
      _
    $region30: #{bottleneck_forward.4} parent=5 // pred_check_branch
      %155 = sbr.rel (%p152) target = $region32
    $region31: #{bottleneck_forward.4} parent=5 // pred_region
      %s156 = ssub.s32 %s9, 1
      %p157 = scmp.lt.s32.totalorder %s18, 1
      %s158 = scalar_select %p157, %s18, 1
      %s159 = smul.addr %s158, 32
      %s160 = smul.addr %s159, 4
      %s161 = scalar_lea.vmem %s0, %s160
      %p162 = pneg %p47
      %p163 = pneg %p44
      %p164 = pneg %p68
      %p165 = pneg %p65
      %p166 = pneg %p89
      %p167 = pneg %p86
      %p168 = pneg %p117
      %p169 = pneg %p114
      %s170 = smul.u32 8, %s19
      %p171 = scmp.lt.s32.totalorder %s18, 1
      %s172 = scalar_select %p171, %s18, 1
      %p173 = scmp.lt.s32.totalorder %s170, 15
      %s174 = scalar_select %p173, %s170, 15
      %s175 = smul.addr %s174, 2
      %s176 = smul.addr %s172, 32
      %s177 = sadd.s32 %s175, %s176
      %s178 = smul.addr %s177, 4
      %s179 = scalar_lea.vmem %s3, %s178
      %p180 = scmp.lt.s32.totalorder %s18, 1
      %s181 = scalar_select %p180, %s18, 1
      %s182 = smul.addr %s181, 32
      %s183 = smul.addr %s182, 4
      %s184 = scalar_lea.vmem %s0, %s183
      %s185 = smul.u32 8, %s19
      %p186 = scmp.lt.s32.totalorder %s18, 1
      %s187 = scalar_select %p186, %s18, 1
      %p188 = scmp.lt.s32.totalorder %s185, 15
      %s189 = scalar_select %p188, %s185, 15
      %s190 = smul.addr %s189, 2
      %s191 = smul.addr %s187, 32
      %s192 = sadd.s32 %s190, %s191
      %s193 = smul.addr %s192, 4
      %s194 = scalar_lea.vmem %s3, %s193
      %s195 = smul.u32 8, %s19
      %s197 = smul.u32 %s19, 8
      %s198 = smul.u32 %s197, 2
      %s199 = smul.addr %s198, 4
      %s200 = scalar_lea.vmem %s184, %s199
      %v201 = vld [vmem:[%s200] sm:$0xf]
      %v202 = vld [vmem:[%s200 + $0x4] sm:$0xf]
      %v203 = vld [vmem:[%s200 + $0x8] sm:$0xf]
      %v204 = vld [vmem:[%s200 + $0xc] sm:$0xf]
      %v205 = vld [vmem:[%s200 + $0x10] sm:$0xf]
      %v206 = vld [vmem:[%s200 + $0x14] sm:$0xf]
      %v207 = vld [vmem:[%s200 + $0x18] sm:$0xf]
      %v208 = vld [vmem:[%s200 + $0x1c] sm:$0xf]
      %v209 = vld [vmem:[%s200 + $0x20] sm:$0xf]
      %v210 = vld [vmem:[%s200 + $0x24] sm:$0xf]
      %v211 = vld [vmem:[%s200 + $0x28] sm:$0xf]
      %v212 = vld [vmem:[%s200 + $0x2c] sm:$0xf]
      %v213 = vld [vmem:[%s200 + $0x30] sm:$0xf]
      %v214 = vld [vmem:[%s200 + $0x34] sm:$0xf]
      %v215 = vld [vmem:[%s200 + $0x38] sm:$0xf]
      %v216 = vld [vmem:[%s200 + $0x3c] sm:$0xf]
      %v233 = vunpack.c.l.b16 %v201
      %v234 = vunpack.c.l.b16 %v202
      %v235 = vunpack.c.l.b16 %v203
      %v236 = vunpack.c.l.b16 %v204
      %v237 = vunpack.c.l.b16 %v205
      %v238 = vunpack.c.l.b16 %v206
      %v239 = vunpack.c.l.b16 %v207
      %v240 = vunpack.c.l.b16 %v208
      %v241 = vunpack.c.l.b16 %v209
      %v242 = vunpack.c.l.b16 %v210
      %v243 = vunpack.c.l.b16 %v211
      %v244 = vunpack.c.l.b16 %v212
      %v245 = vunpack.c.l.b16 %v213
      %v246 = vunpack.c.l.b16 %v214
      %v247 = vunpack.c.l.b16 %v215
      %v248 = vunpack.c.l.b16 %v216
      %v249 = vpack.c.b16 %v234, %v233
      %v250 = vpack.c.b16 %v236, %v235
      %v251 = vpack.c.b16 %v238, %v237
      %v252 = vpack.c.b16 %v240, %v239
      %v253 = vpack.c.b16 %v242, %v241
      %v254 = vpack.c.b16 %v244, %v243
      %v255 = vpack.c.b16 %v246, %v245
      %v256 = vpack.c.b16 %v248, %v247
      %s265 = scalar_lea.vmem [#allocation2], 8
      %vm266 = vcmask 261120
      %267 = vst.msk [vmem:[%s265] sm:$0xff] %vm266, %v249
      %268 = vst.msk [vmem:[%s265 + $0x8] sm:$0xff] %vm266, %v250
      %269 = vst.msk [vmem:[%s265 + $0x10] sm:$0xff] %vm266, %v251
      %270 = vst.msk [vmem:[%s265 + $0x18] sm:$0xff] %vm266, %v252
      %271 = vst.msk [vmem:[%s265 + $0x20] sm:$0xff] %vm266, %v253
      %272 = vst.msk [vmem:[%s265 + $0x28] sm:$0xff] %vm266, %v254
      %273 = vst.msk [vmem:[%s265 + $0x30] sm:$0xff] %vm266, %v255
      %274 = vst.msk [vmem:[%s265 + $0x38] sm:$0xff] %vm266, %v256
      %s275 = ssub.s32 %s197, 1
      %p276 = scmp.gt.s32.totalorder %s275, 0
      %s277 = scalar_select %p276, %s275, 0
      %s278 = smul.u32 %s277, 2
      %s279 = smul.addr %s278, 4
      %s280 = scalar_lea.vmem %s184, %s279
      %v281 = vld [vmem:[%s280] sm:$0xf]
      %v282 = vld [vmem:[%s280 + $0x4] sm:$0xf]
      %p283 = scmp.gt.s32.totalorder %s19, 0
      %s284 = scalar_select %p283, 1, 0
      %v285 = vstv %s284
      %vm286 = vcmp.eq.s32.totalorder %v285, 1
      %v287 = vsel %vm286, %v281, 0
      %v288 = vsel %vm286, %v282, 0
      %v291 = vunpack.c.l.b16 %v287
      %v292 = vunpack.c.l.b16 %v288
      %v293 = vpack.c.b16 %v292, %v291
      %295 = vst.msk [vmem:[#allocation2] sm:$0xff] %vm266, %v293
      %s296 = sadd.s32 %s197, 8
      %p297 = scmp.lt.s32.totalorder %s296, 15
      %s298 = scalar_select %p297, %s296, 15
      %s299 = smul.u32 %s298, 2
      %s300 = smul.addr %s299, 4
      %s301 = scalar_lea.vmem %s184, %s300
      %v302 = vld [vmem:[%s301] sm:$0xf]
      %v303 = vld [vmem:[%s301 + $0x4] sm:$0xf]
      %p304 = scmp.lt.s32.totalorder %s19, 1
      %s305 = scalar_select %p304, 1, 0
      %v306 = vstv %s305
      %vm307 = vcmp.eq.s32.totalorder %v306, 1
      %v308 = vsel %vm307, %v302, 0
      %v309 = vsel %vm307, %v303, 0
      %v312 = vunpack.c.l.b16 %v308
      %v313 = vunpack.c.l.b16 %v309
      %v314 = vpack.c.b16 %v313, %v312
      %s316 = scalar_lea.vmem [#allocation2], 72
      %317 = vst.msk [vmem:[%s316] sm:$0xff] %vm266, %v314
      %v318 = vld [vmem:[#allocation2] sm:$0xff]
      %v319 = vld [vmem:[#allocation2 + $0x8] sm:$0xff]
      %v320 = vld [vmem:[#allocation2 + $0x10] sm:$0xff]
      %v321 = vld [vmem:[#allocation2 + $0x18] sm:$0xff]
      %v322 = vld [vmem:[#allocation2 + $0x20] sm:$0xff]
      %v323 = vld [vmem:[#allocation2 + $0x28] sm:$0xff]
      %v324 = vld [vmem:[#allocation2 + $0x30] sm:$0xff]
      %v325 = vld [vmem:[#allocation2 + $0x38] sm:$0xff]
      %v326 = vld [vmem:[#allocation2 + $0x40] sm:$0xff]
      %v327 = vld [vmem:[#allocation2 + $0x48] sm:$0xff]
      %v329 = vshrl.u32 %v318, 16
      %v331 = vrot.slane %v329, 7
      %v332 = vshll.u32 %v318, 16
      %v334 = vor.u32 %v331, %v332
      %v336 = vshrl.u32 %v319, 16
      %v338 = vrot.slane %v336, 7
      %v339 = vshll.u32 %v319, 16
      %v341 = vor.u32 %v338, %v339
      %v343 = vshrl.u32 %v320, 16
      %v345 = vrot.slane %v343, 7
      %v346 = vshll.u32 %v320, 16
      %v348 = vor.u32 %v345, %v346
      %v350 = vshrl.u32 %v321, 16
      %v352 = vrot.slane %v350, 7
      %v353 = vshll.u32 %v321, 16
      %v355 = vor.u32 %v352, %v353
      %v357 = vshrl.u32 %v322, 16
      %v359 = vrot.slane %v357, 7
      %v360 = vshll.u32 %v322, 16
      %v362 = vor.u32 %v359, %v360
      %v364 = vshrl.u32 %v323, 16
      %v366 = vrot.slane %v364, 7
      %v367 = vshll.u32 %v323, 16
      %v369 = vor.u32 %v366, %v367
      %v371 = vshrl.u32 %v324, 16
      %v373 = vrot.slane %v371, 7
      %v374 = vshll.u32 %v324, 16
      %v376 = vor.u32 %v373, %v374
      %v378 = vshrl.u32 %v325, 16
      %v380 = vrot.slane %v378, 7
      %v381 = vshll.u32 %v325, 16
      %v383 = vor.u32 %v380, %v381
      %v385 = vshrl.u32 %v326, 16
      %v387 = vrot.slane %v385, 7
      %v388 = vshll.u32 %v326, 16
      %v390 = vor.u32 %v387, %v388
      %v392 = vshrl.u32 %v327, 16
      %v394 = vrot.slane %v392, 7
      %v395 = vshll.u32 %v327, 16
      %v397 = vor.u32 %v394, %v395
      %vm408 = vcmask 1040384
      %vm409 = vsmask.f32 256
      %vm410 = vmand %vm408, %vm409
      %v411 = vsel %vm410, 0, %v334
      %v412 = vsel %vm410, 0, %v341
      %v413 = vsel %vm410, 0, %v348
      %v414 = vsel %vm410, 0, %v355
      %v415 = vsel %vm410, 0, %v362
      %v416 = vsel %vm410, 0, %v369
      %v417 = vsel %vm410, 0, %v376
      %v418 = vsel %vm410, 0, %v383
      %v419 = vsel %vm410, 0, %v390
      %v420 = vsel %vm410, 0, %v397
      %v421 = vrot.slane %v332, 1
      %v422 = vor.u32 %v329, %v421
      %v423 = vrot.slane %v339, 1
      %v424 = vor.u32 %v336, %v423
      %v425 = vrot.slane %v346, 1
      %v426 = vor.u32 %v343, %v425
      %v427 = vrot.slane %v353, 1
      %v428 = vor.u32 %v350, %v427
      %v429 = vrot.slane %v360, 1
      %v430 = vor.u32 %v357, %v429
      %v431 = vrot.slane %v367, 1
      %v432 = vor.u32 %v364, %v431
      %v433 = vrot.slane %v374, 1
      %v434 = vor.u32 %v371, %v433
      %v435 = vrot.slane %v381, 1
      %v436 = vor.u32 %v378, %v435
      %v437 = vrot.slane %v388, 1
      %v438 = vor.u32 %v385, %v437
      %v439 = vrot.slane %v395, 1
      %v440 = vor.u32 %v392, %v439
      %vm451 = vcmask 1047552
      %vm452 = vsmask.f32 7424
      %vm453 = vmand %vm451, %vm452
      %v454 = vsel %vm453, %v422, 0
      %v455 = vsel %vm453, %v424, 0
      %v456 = vsel %vm453, %v426, 0
      %v457 = vsel %vm453, %v428, 0
      %v458 = vsel %vm453, %v430, 0
      %v459 = vsel %vm453, %v432, 0
      %v460 = vsel %vm453, %v434, 0
      %v461 = vsel %vm453, %v436, 0
      %v462 = vsel %vm453, %v438, 0
      %v463 = vsel %vm453, %v440, 0
      %v464 = vld [vmem:[%s1] sm:$0xf]
      %v465 = vld [vmem:[%s1 + $0x4] sm:$0xf]
      %v466 = vld [vmem:[%s1 + $0x8] sm:$0xf]
      %v467 = vld [vmem:[%s1 + $0xc] sm:$0xf]
      %s468 = scalar_lea.vmem %s1, 16
      %v469 = vld [vmem:[%s468] sm:$0xf]
      %v470 = vld [vmem:[%s468 + $0x4] sm:$0xf]
      %v471 = vld [vmem:[%s468 + $0x8] sm:$0xf]
      %v472 = vld [vmem:[%s468 + $0xc] sm:$0xf]
      %v477 = vunpack.c.l.b16 %v469
      %v478 = vunpack.c.l.b16 %v470
      %v479 = vunpack.c.l.b16 %v471
      %v480 = vunpack.c.l.b16 %v472
      %v481 = vpack.c.b16 %v478, %v477
      %v482 = vpack.c.b16 %v480, %v479
      %v485 = vsel %vm266, %v318, 0
      %v487 = vsel %vm266, %v319, 0
      %v489 = vsel %vm266, %v320, 0
      %v491 = vsel %vm266, %v321, 0
      %v493 = vsel %vm266, %v322, 0
      %v495 = vsel %vm266, %v323, 0
      %v497 = vsel %vm266, %v324, 0
      %v499 = vsel %vm266, %v325, 0
      %501 = vmatprep.subr.bf16.mxu0 0
      %502 = vmatpush1.bf16.msra.mxu0 %v481
      %503 = vmatprep.subr.bf16.mxu0 0
      %504 = vmatpush1.bf16.msra.mxu0 %v482
      %505 = vmatprep.subr.bf16.mxu0 0
      %506 = vmatpush1.bf16.msra.mxu0 0
      %507 = vmatprep.subr.bf16.mxu0 0
      %508 = vmatpush1.bf16.msra.mxu0 0
      %509 = vmatprep.subr.bf16.mxu0 0
      %510 = vmatpush1.bf16.msra.mxu0 0
      %511 = vmatprep.subr.bf16.mxu0 0
      %512 = vmatpush1.bf16.msra.mxu0 0
      %513 = vmatprep.subr.bf16.mxu0 0
      %514 = vmatpush1.bf16.msra.mxu0 0
      %515 = vmatprep.subr.bf16.mxu0 0
      %516 = vmatpush1.bf16.msra.mxu0 0
      %517 = vmatprep.subr.bf16.mxu0 0
      %518 = vmatpush1.bf16.msra.mxu0 0
      %519 = vmatprep.subr.bf16.mxu0 0
      %520 = vmatpush1.bf16.msra.mxu0 0
      %521 = vmatprep.subr.bf16.mxu0 0
      %522 = vmatpush1.bf16.msra.mxu0 0
      %523 = vmatprep.subr.bf16.mxu0 0
      %524 = vmatpush1.bf16.msra.mxu0 0
      %525 = vmatprep.subr.bf16.mxu0 0
      %526 = vmatpush1.bf16.msra.mxu0 0
      %527 = vmatprep.subr.bf16.mxu0 0
      %528 = vmatpush1.bf16.msra.mxu0 0
      %529 = vmatprep.subr.bf16.mxu0 0
      %530 = vmatpush1.bf16.msra.mxu0 0
      %531 = vmatprep.subr.bf16.mxu0 0
      %532 = vmatpush1.bf16.msra.mxu0 0
      %533 = vmatprep.mubr.bf16.mxu0 0
      %534 = vmatmul.mubr.bf16.gmra.mrb[0].mxu0 %v485
      %v535 = vpop.f32.mrb[0].mxu0
      %v536 = vadd.f32 0.0, %v535
      %v537 = vpop.f32.mrb[0].mxu0
      %v538 = vpop.f32.mrb[0].mxu0
      %v539 = vadd.f32 0.0, %v538
      %v540 = vpop.f32.mrb[0].mxu0
      %541 = vmatprep.mubr.bf16.mxu0 0
      %542 = vmatmul.mubr.bf16.gmra.mrb[0].mxu0 %v487
      %v543 = vpop.f32.mrb[0].mxu0
      %v544 = vadd.f32 0.0, %v543
      %v545 = vpop.f32.mrb[0].mxu0
      %v546 = vpop.f32.mrb[0].mxu0
      %v547 = vadd.f32 0.0, %v546
      %v548 = vpop.f32.mrb[0].mxu0
      %549 = vmatprep.mubr.bf16.mxu0 0
      %550 = vmatmul.mubr.bf16.gmra.mrb[0].mxu0 %v489
      %v551 = vpop.f32.mrb[0].mxu0
      %v552 = vadd.f32 0.0, %v551
      %v553 = vpop.f32.mrb[0].mxu0
      %v554 = vpop.f32.mrb[0].mxu0
      %v555 = vadd.f32 0.0, %v554
      %v556 = vpop.f32.mrb[0].mxu0
      %557 = vmatprep.mubr.bf16.mxu0 0
      %558 = vmatmul.mubr.bf16.gmra.mrb[0].mxu0 %v491
      %v559 = vpop.f32.mrb[0].mxu0
      %v560 = vadd.f32 0.0, %v559
      %v561 = vpop.f32.mrb[0].mxu0
      %v562 = vpop.f32.mrb[0].mxu0
      %v563 = vadd.f32 0.0, %v562
      %v564 = vpop.f32.mrb[0].mxu0
      %565 = vmatprep.mubr.bf16.mxu0 0
      %566 = vmatmul.mubr.bf16.gmra.mrb[0].mxu0 %v493
      %v567 = vpop.f32.mrb[0].mxu0
      %v568 = vadd.f32 0.0, %v567
      %v569 = vpop.f32.mrb[0].mxu0
      %v570 = vpop.f32.mrb[0].mxu0
      %v571 = vadd.f32 0.0, %v570
      %v572 = vpop.f32.mrb[0].mxu0
      %573 = vmatprep.mubr.bf16.mxu0 0
      %574 = vmatmul.mubr.bf16.gmra.mrb[0].mxu0 %v495
      %v575 = vpop.f32.mrb[0].mxu0
      %v576 = vadd.f32 0.0, %v575
      %v577 = vpop.f32.mrb[0].mxu0
      %v578 = vpop.f32.mrb[0].mxu0
      %v579 = vadd.f32 0.0, %v578
      %v580 = vpop.f32.mrb[0].mxu0
      %581 = vmatprep.mubr.bf16.mxu0 0
      %582 = vmatmul.mubr.bf16.gmra.mrb[0].mxu0 %v497
      %v583 = vpop.f32.mrb[0].mxu0
      %v584 = vadd.f32 0.0, %v583
      %v585 = vpop.f32.mrb[0].mxu0
      %v586 = vpop.f32.mrb[0].mxu0
      %v587 = vadd.f32 0.0, %v586
      %v588 = vpop.f32.mrb[0].mxu0
      %589 = vmatprep.mubr.bf16.mxu0 0
      %590 = vmatmul.mubr.bf16.gmra.mrb[0].mxu0 %v499
      %v591 = vpop.f32.mrb[0].mxu0
      %v592 = vadd.f32 0.0, %v591
      %v593 = vpop.f32.mrb[0].mxu0
      %v594 = vpop.f32.mrb[0].mxu0
      %v595 = vadd.f32 0.0, %v594
      %v596 = vpop.f32.mrb[0].mxu0
      %597 = vdwg.mxu0
      %v602 = vunpack.c.l.b16 %v464
      %v603 = vunpack.c.l.b16 %v465
      %v604 = vunpack.c.l.b16 %v466
      %v605 = vunpack.c.l.b16 %v467
      %v606 = vpack.c.b16 %v603, %v602
      %v607 = vpack.c.b16 %v605, %v604
      %v611 = vsel %vm266, %v411, 0
      %v614 = vsel %vm266, %v412, 0
      %v617 = vsel %vm266, %v413, 0
      %v620 = vsel %vm266, %v414, 0
      %v623 = vsel %vm266, %v415, 0
      %v626 = vsel %vm266, %v416, 0
      %v629 = vsel %vm266, %v417, 0
      %v632 = vsel %vm266, %v418, 0
      %634 = vmatprep.subr.bf16.mxu0 0
      %635 = vmatpush1.bf16.msra.mxu0 %v606
      %636 = vmatprep.subr.bf16.mxu0 0
      %637 = vmatpush1.bf16.msra.mxu0 %v607
      %638 = vmatprep.subr.bf16.mxu0 0
      %639 = vmatpush1.bf16.msra.mxu0 0
      %640 = vmatprep.subr.bf16.mxu0 0
      %641 = vmatpush1.bf16.msra.mxu0 0
      %642 = vmatprep.subr.bf16.mxu0 0
      %643 = vmatpush1.bf16.msra.mxu0 0
      %644 = vmatprep.subr.bf16.mxu0 0
      %645 = vmatpush1.bf16.msra.mxu0 0
      %646 = vmatprep.subr.bf16.mxu0 0
      %647 = vmatpush1.bf16.msra.mxu0 0
      %648 = vmatprep.subr.bf16.mxu0 0
      %649 = vmatpush1.bf16.msra.mxu0 0
      %650 = vmatprep.subr.bf16.mxu0 0
      %651 = vmatpush1.bf16.msra.mxu0 0
      %652 = vmatprep.subr.bf16.mxu0 0
      %653 = vmatpush1.bf16.msra.mxu0 0
      %654 = vmatprep.subr.bf16.mxu0 0
      %655 = vmatpush1.bf16.msra.mxu0 0
      %656 = vmatprep.subr.bf16.mxu0 0
      %657 = vmatpush1.bf16.msra.mxu0 0
      %658 = vmatprep.subr.bf16.mxu0 0
      %659 = vmatpush1.bf16.msra.mxu0 0
      %660 = vmatprep.subr.bf16.mxu0 0
      %661 = vmatpush1.bf16.msra.mxu0 0
      %662 = vmatprep.subr.bf16.mxu0 0
      %663 = vmatpush1.bf16.msra.mxu0 0
      %664 = vmatprep.subr.bf16.mxu0 0
      %665 = vmatpush1.bf16.msra.mxu0 0
      %666 = vmatprep.mubr.bf16.mxu0 0
      %667 = vmatmul.mubr.bf16.gmra.mrb[0].mxu0 %v611
      %v668 = vpop.f32.mrb[0].mxu0
      %v669 = vadd.f32 %v536, %v668
      %v670 = vpop.f32.mrb[0].mxu0
      %v671 = vpop.f32.mrb[0].mxu0
      %v672 = vadd.f32 %v539, %v671
      %v673 = vpop.f32.mrb[0].mxu0
      %674 = vmatprep.mubr.bf16.mxu0 0
      %675 = vmatmul.mubr.bf16.gmra.mrb[0].mxu0 %v614
      %v676 = vpop.f32.mrb[0].mxu0
      %v677 = vadd.f32 %v544, %v676
      %v678 = vpop.f32.mrb[0].mxu0
      %v679 = vpop.f32.mrb[0].mxu0
      %v680 = vadd.f32 %v547, %v679
      %v681 = vpop.f32.mrb[0].mxu0
      %682 = vmatprep.mubr.bf16.mxu0 0
      %683 = vmatmul.mubr.bf16.gmra.mrb[0].mxu0 %v617
      %v684 = vpop.f32.mrb[0].mxu0
      %v685 = vadd.f32 %v552, %v684
      %v686 = vpop.f32.mrb[0].mxu0
      %v687 = vpop.f32.mrb[0].mxu0
      %v688 = vadd.f32 %v555, %v687
      %v689 = vpop.f32.mrb[0].mxu0
      %690 = vmatprep.mubr.bf16.mxu0 0
      %691 = vmatmul.mubr.bf16.gmra.mrb[0].mxu0 %v620
      %v692 = vpop.f32.mrb[0].mxu0
      %v693 = vadd.f32 %v560, %v692
      %v694 = vpop.f32.mrb[0].mxu0
      %v695 = vpop.f32.mrb[0].mxu0
      %v696 = vadd.f32 %v563, %v695
      %v697 = vpop.f32.mrb[0].mxu0
      %698 = vmatprep.mubr.bf16.mxu0 0
      %699 = vmatmul.mubr.bf16.gmra.mrb[0].mxu0 %v623
      %v700 = vpop.f32.mrb[0].mxu0
      %v701 = vadd.f32 %v568, %v700
      %v702 = vpop.f32.mrb[0].mxu0
      %v703 = vpop.f32.mrb[0].mxu0
      %v704 = vadd.f32 %v571, %v703
      %v705 = vpop.f32.mrb[0].mxu0
      %706 = vmatprep.mubr.bf16.mxu0 0
      %707 = vmatmul.mubr.bf16.gmra.mrb[0].mxu0 %v626
      %v708 = vpop.f32.mrb[0].mxu0
      %v709 = vadd.f32 %v576, %v708
      %v710 = vpop.f32.mrb[0].mxu0
      %v711 = vpop.f32.mrb[0].mxu0
      %v712 = vadd.f32 %v579, %v711
      %v713 = vpop.f32.mrb[0].mxu0
      %714 = vmatprep.mubr.bf16.mxu0 0
      %715 = vmatmul.mubr.bf16.gmra.mrb[0].mxu0 %v629
      %v716 = vpop.f32.mrb[0].mxu0
      %v717 = vadd.f32 %v584, %v716
      %v718 = vpop.f32.mrb[0].mxu0
      %v719 = vpop.f32.mrb[0].mxu0
      %v720 = vadd.f32 %v587, %v719
      %v721 = vpop.f32.mrb[0].mxu0
      %722 = vmatprep.mubr.bf16.mxu0 0
      %723 = vmatmul.mubr.bf16.gmra.mrb[0].mxu0 %v632
      %v724 = vpop.f32.mrb[0].mxu0
      %v725 = vadd.f32 %v592, %v724
      %v726 = vpop.f32.mrb[0].mxu0
      %v727 = vpop.f32.mrb[0].mxu0
      %v728 = vadd.f32 %v595, %v727
      %v729 = vpop.f32.mrb[0].mxu0
      %730 = vdwg.mxu0
      %s731 = scalar_lea.vmem %s1, 32
      %v732 = vld [vmem:[%s731] sm:$0xf]
      %v733 = vld [vmem:[%s731 + $0x4] sm:$0xf]
      %v734 = vld [vmem:[%s731 + $0x8] sm:$0xf]
      %v735 = vld [vmem:[%s731 + $0xc] sm:$0xf]
      %v740 = vunpack.c.l.b16 %v732
      %v741 = vunpack.c.l.b16 %v733
      %v742 = vunpack.c.l.b16 %v734
      %v743 = vunpack.c.l.b16 %v735
      %v744 = vpack.c.b16 %v741, %v740
      %v745 = vpack.c.b16 %v743, %v742
      %v749 = vsel %vm266, %v454, 0
      %v752 = vsel %vm266, %v455, 0
      %v755 = vsel %vm266, %v456, 0
      %v758 = vsel %vm266, %v457, 0
      %v761 = vsel %vm266, %v458, 0
      %v764 = vsel %vm266, %v459, 0
      %v767 = vsel %vm266, %v460, 0
      %v770 = vsel %vm266, %v461, 0
      %772 = vmatprep.subr.bf16.mxu0 0
      %773 = vmatpush1.bf16.msra.mxu0 %v744
      %774 = vmatprep.subr.bf16.mxu0 0
      %775 = vmatpush1.bf16.msra.mxu0 %v745
      %776 = vmatprep.subr.bf16.mxu0 0
      %777 = vmatpush1.bf16.msra.mxu0 0
      %778 = vmatprep.subr.bf16.mxu0 0
      %779 = vmatpush1.bf16.msra.mxu0 0
      %780 = vmatprep.subr.bf16.mxu0 0
      %781 = vmatpush1.bf16.msra.mxu0 0
      %782 = vmatprep.subr.bf16.mxu0 0
      %783 = vmatpush1.bf16.msra.mxu0 0
      %784 = vmatprep.subr.bf16.mxu0 0
      %785 = vmatpush1.bf16.msra.mxu0 0
      %786 = vmatprep.subr.bf16.mxu0 0
      %787 = vmatpush1.bf16.msra.mxu0 0
      %788 = vmatprep.subr.bf16.mxu0 0
      %789 = vmatpush1.bf16.msra.mxu0 0
      %790 = vmatprep.subr.bf16.mxu0 0
      %791 = vmatpush1.bf16.msra.mxu0 0
      %792 = vmatprep.subr.bf16.mxu0 0
      %793 = vmatpush1.bf16.msra.mxu0 0
      %794 = vmatprep.subr.bf16.mxu0 0
      %795 = vmatpush1.bf16.msra.mxu0 0
      %796 = vmatprep.subr.bf16.mxu0 0
      %797 = vmatpush1.bf16.msra.mxu0 0
      %798 = vmatprep.subr.bf16.mxu0 0
      %799 = vmatpush1.bf16.msra.mxu0 0
      %800 = vmatprep.subr.bf16.mxu0 0
      %801 = vmatpush1.bf16.msra.mxu0 0
      %802 = vmatprep.subr.bf16.mxu0 0
      %803 = vmatpush1.bf16.msra.mxu0 0
      %804 = vmatprep.mubr.bf16.mxu0 0
      %805 = vmatmul.mubr.bf16.gmra.mrb[0].mxu0 %v749
      %v806 = vpop.f32.mrb[0].mxu0
      %v807 = vadd.f32 0.0, %v806
      %v808 = vpop.f32.mrb[0].mxu0
      %v809 = vpop.f32.mrb[0].mxu0
      %v810 = vadd.f32 0.0, %v809
      %v811 = vpop.f32.mrb[0].mxu0
      %812 = vmatprep.mubr.bf16.mxu0 0
      %813 = vmatmul.mubr.bf16.gmra.mrb[0].mxu0 %v752
      %v814 = vpop.f32.mrb[0].mxu0
      %v815 = vadd.f32 0.0, %v814
      %v816 = vpop.f32.mrb[0].mxu0
      %v817 = vpop.f32.mrb[0].mxu0
      %v818 = vadd.f32 0.0, %v817
      %v819 = vpop.f32.mrb[0].mxu0
      %820 = vmatprep.mubr.bf16.mxu0 0
      %821 = vmatmul.mubr.bf16.gmra.mrb[0].mxu0 %v755
      %v822 = vpop.f32.mrb[0].mxu0
      %v823 = vadd.f32 0.0, %v822
      %v824 = vpop.f32.mrb[0].mxu0
      %v825 = vpop.f32.mrb[0].mxu0
      %v826 = vadd.f32 0.0, %v825
      %v827 = vpop.f32.mrb[0].mxu0
      %828 = vmatprep.mubr.bf16.mxu0 0
      %829 = vmatmul.mubr.bf16.gmra.mrb[0].mxu0 %v758
      %v830 = vpop.f32.mrb[0].mxu0
      %v831 = vadd.f32 0.0, %v830
      %v832 = vpop.f32.mrb[0].mxu0
      %v833 = vpop.f32.mrb[0].mxu0
      %v834 = vadd.f32 0.0, %v833
      %v835 = vpop.f32.mrb[0].mxu0
      %836 = vmatprep.mubr.bf16.mxu0 0
      %837 = vmatmul.mubr.bf16.gmra.mrb[0].mxu0 %v761
      %v838 = vpop.f32.mrb[0].mxu0
      %v839 = vadd.f32 0.0, %v838
      %v840 = vpop.f32.mrb[0].mxu0
      %v841 = vpop.f32.mrb[0].mxu0
      %v842 = vadd.f32 0.0, %v841
      %v843 = vpop.f32.mrb[0].mxu0
      %844 = vmatprep.mubr.bf16.mxu0 0
      %845 = vmatmul.mubr.bf16.gmra.mrb[0].mxu0 %v764
      %v846 = vpop.f32.mrb[0].mxu0
      %v847 = vadd.f32 0.0, %v846
      %v848 = vpop.f32.mrb[0].mxu0
      %v849 = vpop.f32.mrb[0].mxu0
      %v850 = vadd.f32 0.0, %v849
      %v851 = vpop.f32.mrb[0].mxu0
      %852 = vmatprep.mubr.bf16.mxu0 0
      %853 = vmatmul.mubr.bf16.gmra.mrb[0].mxu0 %v767
      %v854 = vpop.f32.mrb[0].mxu0
      %v855 = vadd.f32 0.0, %v854
      %v856 = vpop.f32.mrb[0].mxu0
      %v857 = vpop.f32.mrb[0].mxu0
      %v858 = vadd.f32 0.0, %v857
      %v859 = vpop.f32.mrb[0].mxu0
      %860 = vmatprep.mubr.bf16.mxu0 0
      %861 = vmatmul.mubr.bf16.gmra.mrb[0].mxu0 %v770
      %v862 = vpop.f32.mrb[0].mxu0
      %v863 = vadd.f32 0.0, %v862
      %v864 = vpop.f32.mrb[0].mxu0
      %v865 = vpop.f32.mrb[0].mxu0
      %v866 = vadd.f32 0.0, %v865
      %v867 = vpop.f32.mrb[0].mxu0
      %868 = vdwg.mxu0
      %v869 = vadd.f32 %v669, %v807
      %v870 = vadd.f32 %v672, %v810
      %v871 = vadd.f32 %v677, %v815
      %v872 = vadd.f32 %v680, %v818
      %v873 = vadd.f32 %v685, %v823
      %v874 = vadd.f32 %v688, %v826
      %v875 = vadd.f32 %v693, %v831
      %v876 = vadd.f32 %v696, %v834
      %v877 = vadd.f32 %v701, %v839
      %v878 = vadd.f32 %v704, %v842
      %v879 = vadd.f32 %v709, %v847
      %v880 = vadd.f32 %v712, %v850
      %v881 = vadd.f32 %v717, %v855
      %v882 = vadd.f32 %v720, %v858
      %v883 = vadd.f32 %v725, %v863
      %v884 = vadd.f32 %v728, %v866
      %885 = vst.msk [vmem:[#allocation3] sm:$0xff] %vm266, %v869
      %886 = vst.msk [vmem:[#allocation3 + $0x8] sm:$0xff] %vm266, %v870
      %887 = vst.msk [vmem:[#allocation3 + $0x10] sm:$0xff] %vm266, %v871
      %888 = vst.msk [vmem:[#allocation3 + $0x18] sm:$0xff] %vm266, %v872
      %889 = vst.msk [vmem:[#allocation3 + $0x20] sm:$0xff] %vm266, %v873
      %890 = vst.msk [vmem:[#allocation3 + $0x28] sm:$0xff] %vm266, %v874
      %891 = vst.msk [vmem:[#allocation3 + $0x30] sm:$0xff] %vm266, %v875
      %892 = vst.msk [vmem:[#allocation3 + $0x38] sm:$0xff] %vm266, %v876
      %893 = vst.msk [vmem:[#allocation3 + $0x40] sm:$0xff] %vm266, %v877
      %894 = vst.msk [vmem:[#allocation3 + $0x48] sm:$0xff] %vm266, %v878
      %895 = vst.msk [vmem:[#allocation3 + $0x50] sm:$0xff] %vm266, %v879
      %896 = vst.msk [vmem:[#allocation3 + $0x58] sm:$0xff] %vm266, %v880
      %897 = vst.msk [vmem:[#allocation3 + $0x60] sm:$0xff] %vm266, %v881
      %898 = vst.msk [vmem:[#allocation3 + $0x68] sm:$0xff] %vm266, %v882
      %899 = vst.msk [vmem:[#allocation3 + $0x70] sm:$0xff] %vm266, %v883
      %900 = vst.msk [vmem:[#allocation3 + $0x78] sm:$0xff] %vm266, %v884
      %s901 = scalar_lea.vmem %s1, 48
      %v902 = vld [vmem:[%s901] sm:$0xf]
      %v903 = vld [vmem:[%s901 + $0x4] sm:$0xf]
      %v904 = vld [vmem:[%s901 + $0x8] sm:$0xf]
      %v905 = vld [vmem:[%s901 + $0xc] sm:$0xf]
      %s906 = scalar_lea.vmem %s1, 64
      %v907 = vld [vmem:[%s906] sm:$0xf]
      %v908 = vld [vmem:[%s906 + $0x4] sm:$0xf]
      %v909 = vld [vmem:[%s906 + $0x8] sm:$0xf]
      %v910 = vld [vmem:[%s906 + $0xc] sm:$0xf]
      %v915 = vunpack.c.l.b16 %v907
      %v916 = vunpack.c.l.b16 %v908
      %v917 = vunpack.c.l.b16 %v909
      %v918 = vunpack.c.l.b16 %v910
      %v919 = vpack.c.b16 %v916, %v915
      %v920 = vpack.c.b16 %v918, %v917
      %v923 = vsel %vm266, %v326, 0
      %925 = vmatprep.subr.bf16.mxu0 0
      %926 = vmatpush1.bf16.msra.mxu0 %v919
      %927 = vmatprep.subr.bf16.mxu0 0
      %928 = vmatpush1.bf16.msra.mxu0 %v920
      %929 = vmatprep.subr.bf16.mxu0 0
      %930 = vmatpush1.bf16.msra.mxu0 0
      %931 = vmatprep.subr.bf16.mxu0 0
      %932 = vmatpush1.bf16.msra.mxu0 0
      %933 = vmatprep.subr.bf16.mxu0 0
      %934 = vmatpush1.bf16.msra.mxu0 0
      %935 = vmatprep.subr.bf16.mxu0 0
      %936 = vmatpush1.bf16.msra.mxu0 0
      %937 = vmatprep.subr.bf16.mxu0 0
      %938 = vmatpush1.bf16.msra.mxu0 0
      %939 = vmatprep.subr.bf16.mxu0 0
      %940 = vmatpush1.bf16.msra.mxu0 0
      %941 = vmatprep.subr.bf16.mxu0 0
      %942 = vmatpush1.bf16.msra.mxu0 0
      %943 = vmatprep.subr.bf16.mxu0 0
      %944 = vmatpush1.bf16.msra.mxu0 0
      %945 = vmatprep.subr.bf16.mxu0 0
      %946 = vmatpush1.bf16.msra.mxu0 0
      %947 = vmatprep.subr.bf16.mxu0 0
      %948 = vmatpush1.bf16.msra.mxu0 0
      %949 = vmatprep.subr.bf16.mxu0 0
      %950 = vmatpush1.bf16.msra.mxu0 0
      %951 = vmatprep.subr.bf16.mxu0 0
      %952 = vmatpush1.bf16.msra.mxu0 0
      %953 = vmatprep.subr.bf16.mxu0 0
      %954 = vmatpush1.bf16.msra.mxu0 0
      %955 = vmatprep.subr.bf16.mxu0 0
      %956 = vmatpush1.bf16.msra.mxu0 0
      %957 = vmatprep.mubr.bf16.mxu0 0
      %958 = vmatmul.mubr.bf16.gmra.mrb[0].mxu0 %v487
      %v959 = vpop.f32.mrb[0].mxu0
      %v960 = vadd.f32 0.0, %v959
      %v961 = vpop.f32.mrb[0].mxu0
      %v962 = vpop.f32.mrb[0].mxu0
      %v963 = vadd.f32 0.0, %v962
      %v964 = vpop.f32.mrb[0].mxu0
      %965 = vmatprep.mubr.bf16.mxu0 0
      %966 = vmatmul.mubr.bf16.gmra.mrb[0].mxu0 %v489
      %v967 = vpop.f32.mrb[0].mxu0
      %v968 = vadd.f32 0.0, %v967
      %v969 = vpop.f32.mrb[0].mxu0
      %v970 = vpop.f32.mrb[0].mxu0
      %v971 = vadd.f32 0.0, %v970
      %v972 = vpop.f32.mrb[0].mxu0
      %973 = vmatprep.mubr.bf16.mxu0 0
      %974 = vmatmul.mubr.bf16.gmra.mrb[0].mxu0 %v491
      %v975 = vpop.f32.mrb[0].mxu0
      %v976 = vadd.f32 0.0, %v975
      %v977 = vpop.f32.mrb[0].mxu0
      %v978 = vpop.f32.mrb[0].mxu0
      %v979 = vadd.f32 0.0, %v978
      %v980 = vpop.f32.mrb[0].mxu0
      %981 = vmatprep.mubr.bf16.mxu0 0
      %982 = vmatmul.mubr.bf16.gmra.mrb[0].mxu0 %v493
      %v983 = vpop.f32.mrb[0].mxu0
      %v984 = vadd.f32 0.0, %v983
      %v985 = vpop.f32.mrb[0].mxu0
      %v986 = vpop.f32.mrb[0].mxu0
      %v987 = vadd.f32 0.0, %v986
      %v988 = vpop.f32.mrb[0].mxu0
      %989 = vmatprep.mubr.bf16.mxu0 0
      %990 = vmatmul.mubr.bf16.gmra.mrb[0].mxu0 %v495
      %v991 = vpop.f32.mrb[0].mxu0
      %v992 = vadd.f32 0.0, %v991
      %v993 = vpop.f32.mrb[0].mxu0
      %v994 = vpop.f32.mrb[0].mxu0
      %v995 = vadd.f32 0.0, %v994
      %v996 = vpop.f32.mrb[0].mxu0
      %997 = vmatprep.mubr.bf16.mxu0 0
      %998 = vmatmul.mubr.bf16.gmra.mrb[0].mxu0 %v497
      %v999 = vpop.f32.mrb[0].mxu0
      %v1000 = vadd.f32 0.0, %v999
      %v1001 = vpop.f32.mrb[0].mxu0
      %v1002 = vpop.f32.mrb[0].mxu0
      %v1003 = vadd.f32 0.0, %v1002
      %v1004 = vpop.f32.mrb[0].mxu0
      %1005 = vmatprep.mubr.bf16.mxu0 0
      %1006 = vmatmul.mubr.bf16.gmra.mrb[0].mxu0 %v499
      %v1007 = vpop.f32.mrb[0].mxu0
      %v1008 = vadd.f32 0.0, %v1007
      %v1009 = vpop.f32.mrb[0].mxu0
      %v1010 = vpop.f32.mrb[0].mxu0
      %v1011 = vadd.f32 0.0, %v1010
      %v1012 = vpop.f32.mrb[0].mxu0
      %1013 = vmatprep.mubr.bf16.mxu0 0
      %1014 = vmatmul.mubr.bf16.gmra.mrb[0].mxu0 %v923
      %v1015 = vpop.f32.mrb[0].mxu0
      %v1016 = vadd.f32 0.0, %v1015
      %v1017 = vpop.f32.mrb[0].mxu0
      %v1018 = vpop.f32.mrb[0].mxu0
      %v1019 = vadd.f32 0.0, %v1018
      %v1020 = vpop.f32.mrb[0].mxu0
      %1021 = vdwg.mxu0
      %v1026 = vunpack.c.l.b16 %v902
      %v1027 = vunpack.c.l.b16 %v903
      %v1028 = vunpack.c.l.b16 %v904
      %v1029 = vunpack.c.l.b16 %v905
      %v1030 = vpack.c.b16 %v1027, %v1026
      %v1031 = vpack.c.b16 %v1029, %v1028
      %v1035 = vsel %vm266, %v419, 0
      %1037 = vmatprep.subr.bf16.mxu0 0
      %1038 = vmatpush1.bf16.msra.mxu0 %v1030
      %1039 = vmatprep.subr.bf16.mxu0 0
      %1040 = vmatpush1.bf16.msra.mxu0 %v1031
      %1041 = vmatprep.subr.bf16.mxu0 0
      %1042 = vmatpush1.bf16.msra.mxu0 0
      %1043 = vmatprep.subr.bf16.mxu0 0
      %1044 = vmatpush1.bf16.msra.mxu0 0
      %1045 = vmatprep.subr.bf16.mxu0 0
      %1046 = vmatpush1.bf16.msra.mxu0 0
      %1047 = vmatprep.subr.bf16.mxu0 0
      %1048 = vmatpush1.bf16.msra.mxu0 0
      %1049 = vmatprep.subr.bf16.mxu0 0
      %1050 = vmatpush1.bf16.msra.mxu0 0
      %1051 = vmatprep.subr.bf16.mxu0 0
      %1052 = vmatpush1.bf16.msra.mxu0 0
      %1053 = vmatprep.subr.bf16.mxu0 0
      %1054 = vmatpush1.bf16.msra.mxu0 0
      %1055 = vmatprep.subr.bf16.mxu0 0
      %1056 = vmatpush1.bf16.msra.mxu0 0
      %1057 = vmatprep.subr.bf16.mxu0 0
      %1058 = vmatpush1.bf16.msra.mxu0 0
      %1059 = vmatprep.subr.bf16.mxu0 0
      %1060 = vmatpush1.bf16.msra.mxu0 0
      %1061 = vmatprep.subr.bf16.mxu0 0
      %1062 = vmatpush1.bf16.msra.mxu0 0
      %1063 = vmatprep.subr.bf16.mxu0 0
      %1064 = vmatpush1.bf16.msra.mxu0 0
      %1065 = vmatprep.subr.bf16.mxu0 0
      %1066 = vmatpush1.bf16.msra.mxu0 0
      %1067 = vmatprep.subr.bf16.mxu0 0
      %1068 = vmatpush1.bf16.msra.mxu0 0
      %1069 = vmatprep.mubr.bf16.mxu0 0
      %1070 = vmatmul.mubr.bf16.gmra.mrb[0].mxu0 %v614
      %v1071 = vpop.f32.mrb[0].mxu0
      %v1072 = vadd.f32 %v960, %v1071
      %v1073 = vpop.f32.mrb[0].mxu0
      %v1074 = vpop.f32.mrb[0].mxu0
      %v1075 = vadd.f32 %v963, %v1074
      %v1076 = vpop.f32.mrb[0].mxu0
      %1077 = vmatprep.mubr.bf16.mxu0 0
      %1078 = vmatmul.mubr.bf16.gmra.mrb[0].mxu0 %v617
      %v1079 = vpop.f32.mrb[0].mxu0
      %v1080 = vadd.f32 %v968, %v1079
      %v1081 = vpop.f32.mrb[0].mxu0
      %v1082 = vpop.f32.mrb[0].mxu0
      %v1083 = vadd.f32 %v971, %v1082
      %v1084 = vpop.f32.mrb[0].mxu0
      %1085 = vmatprep.mubr.bf16.mxu0 0
      %1086 = vmatmul.mubr.bf16.gmra.mrb[0].mxu0 %v620
      %v1087 = vpop.f32.mrb[0].mxu0
      %v1088 = vadd.f32 %v976, %v1087
      %v1089 = vpop.f32.mrb[0].mxu0
      %v1090 = vpop.f32.mrb[0].mxu0
      %v1091 = vadd.f32 %v979, %v1090
      %v1092 = vpop.f32.mrb[0].mxu0
      %1093 = vmatprep.mubr.bf16.mxu0 0
      %1094 = vmatmul.mubr.bf16.gmra.mrb[0].mxu0 %v623
      %v1095 = vpop.f32.mrb[0].mxu0
      %v1096 = vadd.f32 %v984, %v1095
      %v1097 = vpop.f32.mrb[0].mxu0
      %v1098 = vpop.f32.mrb[0].mxu0
      %v1099 = vadd.f32 %v987, %v1098
      %v1100 = vpop.f32.mrb[0].mxu0
      %1101 = vmatprep.mubr.bf16.mxu0 0
      %1102 = vmatmul.mubr.bf16.gmra.mrb[0].mxu0 %v626
      %v1103 = vpop.f32.mrb[0].mxu0
      %v1104 = vadd.f32 %v992, %v1103
      %v1105 = vpop.f32.mrb[0].mxu0
      %v1106 = vpop.f32.mrb[0].mxu0
      %v1107 = vadd.f32 %v995, %v1106
      %v1108 = vpop.f32.mrb[0].mxu0
      %1109 = vmatprep.mubr.bf16.mxu0 0
      %1110 = vmatmul.mubr.bf16.gmra.mrb[0].mxu0 %v629
      %v1111 = vpop.f32.mrb[0].mxu0
      %v1112 = vadd.f32 %v1000, %v1111
      %v1113 = vpop.f32.mrb[0].mxu0
      %v1114 = vpop.f32.mrb[0].mxu0
      %v1115 = vadd.f32 %v1003, %v1114
      %v1116 = vpop.f32.mrb[0].mxu0
      %1117 = vmatprep.mubr.bf16.mxu0 0
      %1118 = vmatmul.mubr.bf16.gmra.mrb[0].mxu0 %v632
      %v1119 = vpop.f32.mrb[0].mxu0
      %v1120 = vadd.f32 %v1008, %v1119
      %v1121 = vpop.f32.mrb[0].mxu0
      %v1122 = vpop.f32.mrb[0].mxu0
      %v1123 = vadd.f32 %v1011, %v1122
      %v1124 = vpop.f32.mrb[0].mxu0
      %1125 = vmatprep.mubr.bf16.mxu0 0
      %1126 = vmatmul.mubr.bf16.gmra.mrb[0].mxu0 %v1035
      %v1127 = vpop.f32.mrb[0].mxu0
      %v1128 = vadd.f32 %v1016, %v1127
      %v1129 = vpop.f32.mrb[0].mxu0
      %v1130 = vpop.f32.mrb[0].mxu0
      %v1131 = vadd.f32 %v1019, %v1130
      %v1132 = vpop.f32.mrb[0].mxu0
      %1133 = vdwg.mxu0
      %s1134 = scalar_lea.vmem %s1, 80
      %v1135 = vld [vmem:[%s1134] sm:$0xf]
      %v1136 = vld [vmem:[%s1134 + $0x4] sm:$0xf]
      %v1137 = vld [vmem:[%s1134 + $0x8] sm:$0xf]
      %v1138 = vld [vmem:[%s1134 + $0xc] sm:$0xf]
      %v1143 = vunpack.c.l.b16 %v1135
      %v1144 = vunpack.c.l.b16 %v1136
      %v1145 = vunpack.c.l.b16 %v1137
      %v1146 = vunpack.c.l.b16 %v1138
      %v1147 = vpack.c.b16 %v1144, %v1143
      %v1148 = vpack.c.b16 %v1146, %v1145
      %v1152 = vsel %vm266, %v462, 0
      %1154 = vmatprep.subr.bf16.mxu0 0
      %1155 = vmatpush1.bf16.msra.mxu0 %v1147
      %1156 = vmatprep.subr.bf16.mxu0 0
      %1157 = vmatpush1.bf16.msra.mxu0 %v1148
      %1158 = vmatprep.subr.bf16.mxu0 0
      %1159 = vmatpush1.bf16.msra.mxu0 0
      %1160 = vmatprep.subr.bf16.mxu0 0
      %1161 = vmatpush1.bf16.msra.mxu0 0
      %1162 = vmatprep.subr.bf16.mxu0 0
      %1163 = vmatpush1.bf16.msra.mxu0 0
      %1164 = vmatprep.subr.bf16.mxu0 0
      %1165 = vmatpush1.bf16.msra.mxu0 0
      %1166 = vmatprep.subr.bf16.mxu0 0
      %1167 = vmatpush1.bf16.msra.mxu0 0
      %1168 = vmatprep.subr.bf16.mxu0 0
      %1169 = vmatpush1.bf16.msra.mxu0 0
      %1170 = vmatprep.subr.bf16.mxu0 0
      %1171 = vmatpush1.bf16.msra.mxu0 0
      %1172 = vmatprep.subr.bf16.mxu0 0
      %1173 = vmatpush1.bf16.msra.mxu0 0
      %1174 = vmatprep.subr.bf16.mxu0 0
      %1175 = vmatpush1.bf16.msra.mxu0 0
      %1176 = vmatprep.subr.bf16.mxu0 0
      %1177 = vmatpush1.bf16.msra.mxu0 0
      %1178 = vmatprep.subr.bf16.mxu0 0
      %1179 = vmatpush1.bf16.msra.mxu0 0
      %1180 = vmatprep.subr.bf16.mxu0 0
      %1181 = vmatpush1.bf16.msra.mxu0 0
      %1182 = vmatprep.subr.bf16.mxu0 0
      %1183 = vmatpush1.bf16.msra.mxu0 0
      %1184 = vmatprep.subr.bf16.mxu0 0
      %1185 = vmatpush1.bf16.msra.mxu0 0
      %1186 = vmatprep.mubr.bf16.mxu0 0
      %1187 = vmatmul.mubr.bf16.gmra.mrb[0].mxu0 %v752
      %v1188 = vpop.f32.mrb[0].mxu0
      %v1189 = vadd.f32 0.0, %v1188
      %v1190 = vpop.f32.mrb[0].mxu0
      %v1191 = vpop.f32.mrb[0].mxu0
      %v1192 = vadd.f32 0.0, %v1191
      %v1193 = vpop.f32.mrb[0].mxu0
      %1194 = vmatprep.mubr.bf16.mxu0 0
      %1195 = vmatmul.mubr.bf16.gmra.mrb[0].mxu0 %v755
      %v1196 = vpop.f32.mrb[0].mxu0
      %v1197 = vadd.f32 0.0, %v1196
      %v1198 = vpop.f32.mrb[0].mxu0
      %v1199 = vpop.f32.mrb[0].mxu0
      %v1200 = vadd.f32 0.0, %v1199
      %v1201 = vpop.f32.mrb[0].mxu0
      %1202 = vmatprep.mubr.bf16.mxu0 0
      %1203 = vmatmul.mubr.bf16.gmra.mrb[0].mxu0 %v758
      %v1204 = vpop.f32.mrb[0].mxu0
      %v1205 = vadd.f32 0.0, %v1204
      %v1206 = vpop.f32.mrb[0].mxu0
      %v1207 = vpop.f32.mrb[0].mxu0
      %v1208 = vadd.f32 0.0, %v1207
      %v1209 = vpop.f32.mrb[0].mxu0
      %1210 = vmatprep.mubr.bf16.mxu0 0
      %1211 = vmatmul.mubr.bf16.gmra.mrb[0].mxu0 %v761
      %v1212 = vpop.f32.mrb[0].mxu0
      %v1213 = vadd.f32 0.0, %v1212
      %v1214 = vpop.f32.mrb[0].mxu0
      %v1215 = vpop.f32.mrb[0].mxu0
      %v1216 = vadd.f32 0.0, %v1215
      %v1217 = vpop.f32.mrb[0].mxu0
      %1218 = vmatprep.mubr.bf16.mxu0 0
      %1219 = vmatmul.mubr.bf16.gmra.mrb[0].mxu0 %v764
      %v1220 = vpop.f32.mrb[0].mxu0
      %v1221 = vadd.f32 0.0, %v1220
      %v1222 = vpop.f32.mrb[0].mxu0
      %v1223 = vpop.f32.mrb[0].mxu0
      %v1224 = vadd.f32 0.0, %v1223
      %v1225 = vpop.f32.mrb[0].mxu0
      %1226 = vmatprep.mubr.bf16.mxu0 0
      %1227 = vmatmul.mubr.bf16.gmra.mrb[0].mxu0 %v767
      %v1228 = vpop.f32.mrb[0].mxu0
      %v1229 = vadd.f32 0.0, %v1228
      %v1230 = vpop.f32.mrb[0].mxu0
      %v1231 = vpop.f32.mrb[0].mxu0
      %v1232 = vadd.f32 0.0, %v1231
      %v1233 = vpop.f32.mrb[0].mxu0
      %1234 = vmatprep.mubr.bf16.mxu0 0
      %1235 = vmatmul.mubr.bf16.gmra.mrb[0].mxu0 %v770
      %v1236 = vpop.f32.mrb[0].mxu0
      %v1237 = vadd.f32 0.0, %v1236
      %v1238 = vpop.f32.mrb[0].mxu0
      %v1239 = vpop.f32.mrb[0].mxu0
      %v1240 = vadd.f32 0.0, %v1239
      %v1241 = vpop.f32.mrb[0].mxu0
      %1242 = vmatprep.mubr.bf16.mxu0 0
      %1243 = vmatmul.mubr.bf16.gmra.mrb[0].mxu0 %v1152
      %v1244 = vpop.f32.mrb[0].mxu0
      %v1245 = vadd.f32 0.0, %v1244
      %v1246 = vpop.f32.mrb[0].mxu0
      %v1247 = vpop.f32.mrb[0].mxu0
      %v1248 = vadd.f32 0.0, %v1247
      %v1249 = vpop.f32.mrb[0].mxu0
      %1250 = vdwg.mxu0
      %v1251 = vadd.f32 %v1072, %v1189
      %v1252 = vadd.f32 %v1075, %v1192
      %v1253 = vadd.f32 %v1080, %v1197
      %v1254 = vadd.f32 %v1083, %v1200
      %v1255 = vadd.f32 %v1088, %v1205
      %v1256 = vadd.f32 %v1091, %v1208
      %v1257 = vadd.f32 %v1096, %v1213
      %v1258 = vadd.f32 %v1099, %v1216
      %v1259 = vadd.f32 %v1104, %v1221
      %v1260 = vadd.f32 %v1107, %v1224
      %v1261 = vadd.f32 %v1112, %v1229
      %v1262 = vadd.f32 %v1115, %v1232
      %v1263 = vadd.f32 %v1120, %v1237
      %v1264 = vadd.f32 %v1123, %v1240
      %v1265 = vadd.f32 %v1128, %v1245
      %v1266 = vadd.f32 %v1131, %v1248
      %v1267 = vld [vmem:[#allocation3] sm:$0xff]
      %v1268 = vld [vmem:[#allocation3 + $0x8] sm:$0xff]
      %v1269 = vld [vmem:[#allocation3 + $0x10] sm:$0xff]
      %v1270 = vld [vmem:[#allocation3 + $0x18] sm:$0xff]
      %v1271 = vld [vmem:[#allocation3 + $0x20] sm:$0xff]
      %v1272 = vld [vmem:[#allocation3 + $0x28] sm:$0xff]
      %v1273 = vld [vmem:[#allocation3 + $0x30] sm:$0xff]
      %v1274 = vld [vmem:[#allocation3 + $0x38] sm:$0xff]
      %v1275 = vld [vmem:[#allocation3 + $0x40] sm:$0xff]
      %v1276 = vld [vmem:[#allocation3 + $0x48] sm:$0xff]
      %v1277 = vld [vmem:[#allocation3 + $0x50] sm:$0xff]
      %v1278 = vld [vmem:[#allocation3 + $0x58] sm:$0xff]
      %v1279 = vld [vmem:[#allocation3 + $0x60] sm:$0xff]
      %v1280 = vld [vmem:[#allocation3 + $0x68] sm:$0xff]
      %v1281 = vld [vmem:[#allocation3 + $0x70] sm:$0xff]
      %v1282 = vld [vmem:[#allocation3 + $0x78] sm:$0xff]
      %v1283 = vadd.f32 %v1267, %v1251
      %v1284 = vadd.f32 %v1268, %v1252
      %v1285 = vadd.f32 %v1269, %v1253
      %v1286 = vadd.f32 %v1270, %v1254
      %v1287 = vadd.f32 %v1271, %v1255
      %v1288 = vadd.f32 %v1272, %v1256
      %v1289 = vadd.f32 %v1273, %v1257
      %v1290 = vadd.f32 %v1274, %v1258
      %v1291 = vadd.f32 %v1275, %v1259
      %v1292 = vadd.f32 %v1276, %v1260
      %v1293 = vadd.f32 %v1277, %v1261
      %v1294 = vadd.f32 %v1278, %v1262
      %v1295 = vadd.f32 %v1279, %v1263
      %v1296 = vadd.f32 %v1280, %v1264
      %v1297 = vadd.f32 %v1281, %v1265
      %v1298 = vadd.f32 %v1282, %v1266
      %1299 = vst.msk [vmem:[#allocation3] sm:$0xff] %vm266, %v1283
      %1300 = vst.msk [vmem:[#allocation3 + $0x8] sm:$0xff] %vm266, %v1284
      %1301 = vst.msk [vmem:[#allocation3 + $0x10] sm:$0xff] %vm266, %v1285
      %1302 = vst.msk [vmem:[#allocation3 + $0x18] sm:$0xff] %vm266, %v1286
      %1303 = vst.msk [vmem:[#allocation3 + $0x20] sm:$0xff] %vm266, %v1287
      %1304 = vst.msk [vmem:[#allocation3 + $0x28] sm:$0xff] %vm266, %v1288
      %1305 = vst.msk [vmem:[#allocation3 + $0x30] sm:$0xff] %vm266, %v1289
      %1306 = vst.msk [vmem:[#allocation3 + $0x38] sm:$0xff] %vm266, %v1290
      %1307 = vst.msk [vmem:[#allocation3 + $0x40] sm:$0xff] %vm266, %v1291
      %1308 = vst.msk [vmem:[#allocation3 + $0x48] sm:$0xff] %vm266, %v1292
      %1309 = vst.msk [vmem:[#allocation3 + $0x50] sm:$0xff] %vm266, %v1293
      %1310 = vst.msk [vmem:[#allocation3 + $0x58] sm:$0xff] %vm266, %v1294
      %1311 = vst.msk [vmem:[#allocation3 + $0x60] sm:$0xff] %vm266, %v1295
      %1312 = vst.msk [vmem:[#allocation3 + $0x68] sm:$0xff] %vm266, %v1296
      %1313 = vst.msk [vmem:[#allocation3 + $0x70] sm:$0xff] %vm266, %v1297
      %1314 = vst.msk [vmem:[#allocation3 + $0x78] sm:$0xff] %vm266, %v1298
      %s1315 = scalar_lea.vmem %s1, 96
      %v1316 = vld [vmem:[%s1315] sm:$0xf]
      %v1317 = vld [vmem:[%s1315 + $0x4] sm:$0xf]
      %v1318 = vld [vmem:[%s1315 + $0x8] sm:$0xf]
      %v1319 = vld [vmem:[%s1315 + $0xc] sm:$0xf]
      %s1320 = scalar_lea.vmem %s1, 112
      %v1321 = vld [vmem:[%s1320] sm:$0xf]
      %v1322 = vld [vmem:[%s1320 + $0x4] sm:$0xf]
      %v1323 = vld [vmem:[%s1320 + $0x8] sm:$0xf]
      %v1324 = vld [vmem:[%s1320 + $0xc] sm:$0xf]
      %v1329 = vunpack.c.l.b16 %v1321
      %v1330 = vunpack.c.l.b16 %v1322
      %v1331 = vunpack.c.l.b16 %v1323
      %v1332 = vunpack.c.l.b16 %v1324
      %v1333 = vpack.c.b16 %v1330, %v1329
      %v1334 = vpack.c.b16 %v1332, %v1331
      %v1337 = vsel %vm266, %v327, 0
      %1339 = vmatprep.subr.bf16.mxu0 0
      %1340 = vmatpush1.bf16.msra.mxu0 %v1333
      %1341 = vmatprep.subr.bf16.mxu0 0
      %1342 = vmatpush1.bf16.msra.mxu0 %v1334
      %1343 = vmatprep.subr.bf16.mxu0 0
      %1344 = vmatpush1.bf16.msra.mxu0 0
      %1345 = vmatprep.subr.bf16.mxu0 0
      %1346 = vmatpush1.bf16.msra.mxu0 0
      %1347 = vmatprep.subr.bf16.mxu0 0
      %1348 = vmatpush1.bf16.msra.mxu0 0
      %1349 = vmatprep.subr.bf16.mxu0 0
      %1350 = vmatpush1.bf16.msra.mxu0 0
      %1351 = vmatprep.subr.bf16.mxu0 0
      %1352 = vmatpush1.bf16.msra.mxu0 0
      %1353 = vmatprep.subr.bf16.mxu0 0
      %1354 = vmatpush1.bf16.msra.mxu0 0
      %1355 = vmatprep.subr.bf16.mxu0 0
      %1356 = vmatpush1.bf16.msra.mxu0 0
      %1357 = vmatprep.subr.bf16.mxu0 0
      %1358 = vmatpush1.bf16.msra.mxu0 0
      %1359 = vmatprep.subr.bf16.mxu0 0
      %1360 = vmatpush1.bf16.msra.mxu0 0
      %1361 = vmatprep.subr.bf16.mxu0 0
      %1362 = vmatpush1.bf16.msra.mxu0 0
      %1363 = vmatprep.subr.bf16.mxu0 0
      %1364 = vmatpush1.bf16.msra.mxu0 0
      %1365 = vmatprep.subr.bf16.mxu0 0
      %1366 = vmatpush1.bf16.msra.mxu0 0
      %1367 = vmatprep.subr.bf16.mxu0 0
      %1368 = vmatpush1.bf16.msra.mxu0 0
      %1369 = vmatprep.subr.bf16.mxu0 0
      %1370 = vmatpush1.bf16.msra.mxu0 0
      %1371 = vmatprep.mubr.bf16.mxu0 0
      %1372 = vmatmul.mubr.bf16.gmra.mrb[0].mxu0 %v489
      %v1373 = vpop.f32.mrb[0].mxu0
      %v1374 = vadd.f32 0.0, %v1373
      %v1375 = vpop.f32.mrb[0].mxu0
      %v1376 = vpop.f32.mrb[0].mxu0
      %v1377 = vadd.f32 0.0, %v1376
      %v1378 = vpop.f32.mrb[0].mxu0
      %1379 = vmatprep.mubr.bf16.mxu0 0
      %1380 = vmatmul.mubr.bf16.gmra.mrb[0].mxu0 %v491
      %v1381 = vpop.f32.mrb[0].mxu0
      %v1382 = vadd.f32 0.0, %v1381
      %v1383 = vpop.f32.mrb[0].mxu0
      %v1384 = vpop.f32.mrb[0].mxu0
      %v1385 = vadd.f32 0.0, %v1384
      %v1386 = vpop.f32.mrb[0].mxu0
      %1387 = vmatprep.mubr.bf16.mxu0 0
      %1388 = vmatmul.mubr.bf16.gmra.mrb[0].mxu0 %v493
      %v1389 = vpop.f32.mrb[0].mxu0
      %v1390 = vadd.f32 0.0, %v1389
      %v1391 = vpop.f32.mrb[0].mxu0
      %v1392 = vpop.f32.mrb[0].mxu0
      %v1393 = vadd.f32 0.0, %v1392
      %v1394 = vpop.f32.mrb[0].mxu0
      %1395 = vmatprep.mubr.bf16.mxu0 0
      %1396 = vmatmul.mubr.bf16.gmra.mrb[0].mxu0 %v495
      %v1397 = vpop.f32.mrb[0].mxu0
      %v1398 = vadd.f32 0.0, %v1397
      %v1399 = vpop.f32.mrb[0].mxu0
      %v1400 = vpop.f32.mrb[0].mxu0
      %v1401 = vadd.f32 0.0, %v1400
      %v1402 = vpop.f32.mrb[0].mxu0
      %1403 = vmatprep.mubr.bf16.mxu0 0
      %1404 = vmatmul.mubr.bf16.gmra.mrb[0].mxu0 %v497
      %v1405 = vpop.f32.mrb[0].mxu0
      %v1406 = vadd.f32 0.0, %v1405
      %v1407 = vpop.f32.mrb[0].mxu0
      %v1408 = vpop.f32.mrb[0].mxu0
      %v1409 = vadd.f32 0.0, %v1408
      %v1410 = vpop.f32.mrb[0].mxu0
      %1411 = vmatprep.mubr.bf16.mxu0 0
      %1412 = vmatmul.mubr.bf16.gmra.mrb[0].mxu0 %v499
      %v1413 = vpop.f32.mrb[0].mxu0
      %v1414 = vadd.f32 0.0, %v1413
      %v1415 = vpop.f32.mrb[0].mxu0
      %v1416 = vpop.f32.mrb[0].mxu0
      %v1417 = vadd.f32 0.0, %v1416
      %v1418 = vpop.f32.mrb[0].mxu0
      %1419 = vmatprep.mubr.bf16.mxu0 0
      %1420 = vmatmul.mubr.bf16.gmra.mrb[0].mxu0 %v923
      %v1421 = vpop.f32.mrb[0].mxu0
      %v1422 = vadd.f32 0.0, %v1421
      %v1423 = vpop.f32.mrb[0].mxu0
      %v1424 = vpop.f32.mrb[0].mxu0
      %v1425 = vadd.f32 0.0, %v1424
      %v1426 = vpop.f32.mrb[0].mxu0
      %1427 = vmatprep.mubr.bf16.mxu0 0
      %1428 = vmatmul.mubr.bf16.gmra.mrb[0].mxu0 %v1337
      %v1429 = vpop.f32.mrb[0].mxu0
      %v1430 = vadd.f32 0.0, %v1429
      %v1431 = vpop.f32.mrb[0].mxu0
      %v1432 = vpop.f32.mrb[0].mxu0
      %v1433 = vadd.f32 0.0, %v1432
      %v1434 = vpop.f32.mrb[0].mxu0
      %1435 = vdwg.mxu0
      %v1440 = vunpack.c.l.b16 %v1316
      %v1441 = vunpack.c.l.b16 %v1317
      %v1442 = vunpack.c.l.b16 %v1318
      %v1443 = vunpack.c.l.b16 %v1319
      %v1444 = vpack.c.b16 %v1441, %v1440
      %v1445 = vpack.c.b16 %v1443, %v1442
      %v1449 = vsel %vm266, %v420, 0
      %1451 = vmatprep.subr.bf16.mxu0 0
      %1452 = vmatpush1.bf16.msra.mxu0 %v1444
      %1453 = vmatprep.subr.bf16.mxu0 0
      %1454 = vmatpush1.bf16.msra.mxu0 %v1445
      %1455 = vmatprep.subr.bf16.mxu0 0
      %1456 = vmatpush1.bf16.msra.mxu0 0
      %1457 = vmatprep.subr.bf16.mxu0 0
      %1458 = vmatpush1.bf16.msra.mxu0 0
      %1459 = vmatprep.subr.bf16.mxu0 0
      %1460 = vmatpush1.bf16.msra.mxu0 0
      %1461 = vmatprep.subr.bf16.mxu0 0
      %1462 = vmatpush1.bf16.msra.mxu0 0
      %1463 = vmatprep.subr.bf16.mxu0 0
      %1464 = vmatpush1.bf16.msra.mxu0 0
      %1465 = vmatprep.subr.bf16.mxu0 0
      %1466 = vmatpush1.bf16.msra.mxu0 0
      %1467 = vmatprep.subr.bf16.mxu0 0
      %1468 = vmatpush1.bf16.msra.mxu0 0
      %1469 = vmatprep.subr.bf16.mxu0 0
      %1470 = vmatpush1.bf16.msra.mxu0 0
      %1471 = vmatprep.subr.bf16.mxu0 0
      %1472 = vmatpush1.bf16.msra.mxu0 0
      %1473 = vmatprep.subr.bf16.mxu0 0
      %1474 = vmatpush1.bf16.msra.mxu0 0
      %1475 = vmatprep.subr.bf16.mxu0 0
      %1476 = vmatpush1.bf16.msra.mxu0 0
      %1477 = vmatprep.subr.bf16.mxu0 0
      %1478 = vmatpush1.bf16.msra.mxu0 0
      %1479 = vmatprep.subr.bf16.mxu0 0
      %1480 = vmatpush1.bf16.msra.mxu0 0
      %1481 = vmatprep.subr.bf16.mxu0 0
      %1482 = vmatpush1.bf16.msra.mxu0 0
      %1483 = vmatprep.mubr.bf16.mxu0 0
      %1484 = vmatmul.mubr.bf16.gmra.mrb[0].mxu0 %v617
      %v1485 = vpop.f32.mrb[0].mxu0
      %v1486 = vadd.f32 %v1374, %v1485
      %v1487 = vpop.f32.mrb[0].mxu0
      %v1488 = vpop.f32.mrb[0].mxu0
      %v1489 = vadd.f32 %v1377, %v1488
      %v1490 = vpop.f32.mrb[0].mxu0
      %1491 = vmatprep.mubr.bf16.mxu0 0
      %1492 = vmatmul.mubr.bf16.gmra.mrb[0].mxu0 %v620
      %v1493 = vpop.f32.mrb[0].mxu0
      %v1494 = vadd.f32 %v1382, %v1493
      %v1495 = vpop.f32.mrb[0].mxu0
      %v1496 = vpop.f32.mrb[0].mxu0
      %v1497 = vadd.f32 %v1385, %v1496
      %v1498 = vpop.f32.mrb[0].mxu0
      %1499 = vmatprep.mubr.bf16.mxu0 0
      %1500 = vmatmul.mubr.bf16.gmra.mrb[0].mxu0 %v623
      %v1501 = vpop.f32.mrb[0].mxu0
      %v1502 = vadd.f32 %v1390, %v1501
      %v1503 = vpop.f32.mrb[0].mxu0
      %v1504 = vpop.f32.mrb[0].mxu0
      %v1505 = vadd.f32 %v1393, %v1504
      %v1506 = vpop.f32.mrb[0].mxu0
      %1507 = vmatprep.mubr.bf16.mxu0 0
      %1508 = vmatmul.mubr.bf16.gmra.mrb[0].mxu0 %v626
      %v1509 = vpop.f32.mrb[0].mxu0
      %v1510 = vadd.f32 %v1398, %v1509
      %v1511 = vpop.f32.mrb[0].mxu0
      %v1512 = vpop.f32.mrb[0].mxu0
      %v1513 = vadd.f32 %v1401, %v1512
      %v1514 = vpop.f32.mrb[0].mxu0
      %1515 = vmatprep.mubr.bf16.mxu0 0
      %1516 = vmatmul.mubr.bf16.gmra.mrb[0].mxu0 %v629
      %v1517 = vpop.f32.mrb[0].mxu0
      %v1518 = vadd.f32 %v1406, %v1517
      %v1519 = vpop.f32.mrb[0].mxu0
      %v1520 = vpop.f32.mrb[0].mxu0
      %v1521 = vadd.f32 %v1409, %v1520
      %v1522 = vpop.f32.mrb[0].mxu0
      %1523 = vmatprep.mubr.bf16.mxu0 0
      %1524 = vmatmul.mubr.bf16.gmra.mrb[0].mxu0 %v632
      %v1525 = vpop.f32.mrb[0].mxu0
      %v1526 = vadd.f32 %v1414, %v1525
      %v1527 = vpop.f32.mrb[0].mxu0
      %v1528 = vpop.f32.mrb[0].mxu0
      %v1529 = vadd.f32 %v1417, %v1528
      %v1530 = vpop.f32.mrb[0].mxu0
      %1531 = vmatprep.mubr.bf16.mxu0 0
      %1532 = vmatmul.mubr.bf16.gmra.mrb[0].mxu0 %v1035
      %v1533 = vpop.f32.mrb[0].mxu0
      %v1534 = vadd.f32 %v1422, %v1533
      %v1535 = vpop.f32.mrb[0].mxu0
      %v1536 = vpop.f32.mrb[0].mxu0
      %v1537 = vadd.f32 %v1425, %v1536
      %v1538 = vpop.f32.mrb[0].mxu0
      %1539 = vmatprep.mubr.bf16.mxu0 0
      %1540 = vmatmul.mubr.bf16.gmra.mrb[0].mxu0 %v1449
      %v1541 = vpop.f32.mrb[0].mxu0
      %v1542 = vadd.f32 %v1430, %v1541
      %v1543 = vpop.f32.mrb[0].mxu0
      %v1544 = vpop.f32.mrb[0].mxu0
      %v1545 = vadd.f32 %v1433, %v1544
      %v1546 = vpop.f32.mrb[0].mxu0
      %1547 = vdwg.mxu0
      %s1548 = scalar_lea.vmem %s1, 128
      %v1549 = vld [vmem:[%s1548] sm:$0xf]
      %v1550 = vld [vmem:[%s1548 + $0x4] sm:$0xf]
      %v1551 = vld [vmem:[%s1548 + $0x8] sm:$0xf]
      %v1552 = vld [vmem:[%s1548 + $0xc] sm:$0xf]
      %v1557 = vunpack.c.l.b16 %v1549
      %v1558 = vunpack.c.l.b16 %v1550
      %v1559 = vunpack.c.l.b16 %v1551
      %v1560 = vunpack.c.l.b16 %v1552
      %v1561 = vpack.c.b16 %v1558, %v1557
      %v1562 = vpack.c.b16 %v1560, %v1559
      %v1566 = vsel %vm266, %v463, 0
      %1568 = vmatprep.subr.bf16.mxu0 0
      %1569 = vmatpush1.bf16.msra.mxu0 %v1561
      %1570 = vmatprep.subr.bf16.mxu0 0
      %1571 = vmatpush1.bf16.msra.mxu0 %v1562
      %1572 = vmatprep.subr.bf16.mxu0 0
      %1573 = vmatpush1.bf16.msra.mxu0 0
      %1574 = vmatprep.subr.bf16.mxu0 0
      %1575 = vmatpush1.bf16.msra.mxu0 0
      %1576 = vmatprep.subr.bf16.mxu0 0
      %1577 = vmatpush1.bf16.msra.mxu0 0
      %1578 = vmatprep.subr.bf16.mxu0 0
      %1579 = vmatpush1.bf16.msra.mxu0 0
      %1580 = vmatprep.subr.bf16.mxu0 0
      %1581 = vmatpush1.bf16.msra.mxu0 0
      %1582 = vmatprep.subr.bf16.mxu0 0
      %1583 = vmatpush1.bf16.msra.mxu0 0
      %1584 = vmatprep.subr.bf16.mxu0 0
      %1585 = vmatpush1.bf16.msra.mxu0 0
      %1586 = vmatprep.subr.bf16.mxu0 0
      %1587 = vmatpush1.bf16.msra.mxu0 0
      %1588 = vmatprep.subr.bf16.mxu0 0
      %1589 = vmatpush1.bf16.msra.mxu0 0
      %1590 = vmatprep.subr.bf16.mxu0 0
      %1591 = vmatpush1.bf16.msra.mxu0 0
      %1592 = vmatprep.subr.bf16.mxu0 0
      %1593 = vmatpush1.bf16.msra.mxu0 0
      %1594 = vmatprep.subr.bf16.mxu0 0
      %1595 = vmatpush1.bf16.msra.mxu0 0
      %1596 = vmatprep.subr.bf16.mxu0 0
      %1597 = vmatpush1.bf16.msra.mxu0 0
      %1598 = vmatprep.subr.bf16.mxu0 0
      %1599 = vmatpush1.bf16.msra.mxu0 0
      %1600 = vmatprep.mubr.bf16.mxu0 0
      %1601 = vmatmul.mubr.bf16.gmra.mrb[0].mxu0 %v755
      %v1602 = vpop.f32.mrb[0].mxu0
      %v1603 = vadd.f32 0.0, %v1602
      %v1604 = vpop.f32.mrb[0].mxu0
      %v1605 = vpop.f32.mrb[0].mxu0
      %v1606 = vadd.f32 0.0, %v1605
      %v1607 = vpop.f32.mrb[0].mxu0
      %1608 = vmatprep.mubr.bf16.mxu0 0
      %1609 = vmatmul.mubr.bf16.gmra.mrb[0].mxu0 %v758
      %v1610 = vpop.f32.mrb[0].mxu0
      %v1611 = vadd.f32 0.0, %v1610
      %v1612 = vpop.f32.mrb[0].mxu0
      %v1613 = vpop.f32.mrb[0].mxu0
      %v1614 = vadd.f32 0.0, %v1613
      %v1615 = vpop.f32.mrb[0].mxu0
      %1616 = vmatprep.mubr.bf16.mxu0 0
      %1617 = vmatmul.mubr.bf16.gmra.mrb[0].mxu0 %v761
      %v1618 = vpop.f32.mrb[0].mxu0
      %v1619 = vadd.f32 0.0, %v1618
      %v1620 = vpop.f32.mrb[0].mxu0
      %v1621 = vpop.f32.mrb[0].mxu0
      %v1622 = vadd.f32 0.0, %v1621
      %v1623 = vpop.f32.mrb[0].mxu0
      %1624 = vmatprep.mubr.bf16.mxu0 0
      %1625 = vmatmul.mubr.bf16.gmra.mrb[0].mxu0 %v764
      %v1626 = vpop.f32.mrb[0].mxu0
      %v1627 = vadd.f32 0.0, %v1626
      %v1628 = vpop.f32.mrb[0].mxu0
      %v1629 = vpop.f32.mrb[0].mxu0
      %v1630 = vadd.f32 0.0, %v1629
      %v1631 = vpop.f32.mrb[0].mxu0
      %1632 = vmatprep.mubr.bf16.mxu0 0
      %1633 = vmatmul.mubr.bf16.gmra.mrb[0].mxu0 %v767
      %v1634 = vpop.f32.mrb[0].mxu0
      %v1635 = vadd.f32 0.0, %v1634
      %v1636 = vpop.f32.mrb[0].mxu0
      %v1637 = vpop.f32.mrb[0].mxu0
      %v1638 = vadd.f32 0.0, %v1637
      %v1639 = vpop.f32.mrb[0].mxu0
      %1640 = vmatprep.mubr.bf16.mxu0 0
      %1641 = vmatmul.mubr.bf16.gmra.mrb[0].mxu0 %v770
      %v1642 = vpop.f32.mrb[0].mxu0
      %v1643 = vadd.f32 0.0, %v1642
      %v1644 = vpop.f32.mrb[0].mxu0
      %v1645 = vpop.f32.mrb[0].mxu0
      %v1646 = vadd.f32 0.0, %v1645
      %v1647 = vpop.f32.mrb[0].mxu0
      %1648 = vmatprep.mubr.bf16.mxu0 0
      %1649 = vmatmul.mubr.bf16.gmra.mrb[0].mxu0 %v1152
      %v1650 = vpop.f32.mrb[0].mxu0
      %v1651 = vadd.f32 0.0, %v1650
      %v1652 = vpop.f32.mrb[0].mxu0
      %v1653 = vpop.f32.mrb[0].mxu0
      %v1654 = vadd.f32 0.0, %v1653
      %v1655 = vpop.f32.mrb[0].mxu0
      %1656 = vmatprep.mubr.bf16.mxu0 0
      %1657 = vmatmul.mubr.bf16.gmra.mrb[0].mxu0 %v1566
      %v1658 = vpop.f32.mrb[0].mxu0
      %v1659 = vadd.f32 0.0, %v1658
      %v1660 = vpop.f32.mrb[0].mxu0
      %v1661 = vpop.f32.mrb[0].mxu0
      %v1662 = vadd.f32 0.0, %v1661
      %v1663 = vpop.f32.mrb[0].mxu0
      %1664 = vdwg.mxu0
      %v1665 = vadd.f32 %v1486, %v1603
      %v1666 = vadd.f32 %v1489, %v1606
      %v1667 = vadd.f32 %v1494, %v1611
      %v1668 = vadd.f32 %v1497, %v1614
      %v1669 = vadd.f32 %v1502, %v1619
      %v1670 = vadd.f32 %v1505, %v1622
      %v1671 = vadd.f32 %v1510, %v1627
      %v1672 = vadd.f32 %v1513, %v1630
      %v1673 = vadd.f32 %v1518, %v1635
      %v1674 = vadd.f32 %v1521, %v1638
      %v1675 = vadd.f32 %v1526, %v1643
      %v1676 = vadd.f32 %v1529, %v1646
      %v1677 = vadd.f32 %v1534, %v1651
      %v1678 = vadd.f32 %v1537, %v1654
      %v1679 = vadd.f32 %v1542, %v1659
      %v1680 = vadd.f32 %v1545, %v1662
      %v1681 = vld [vmem:[#allocation3] sm:$0xff]
      %v1682 = vld [vmem:[#allocation3 + $0x8] sm:$0xff]
      %v1683 = vld [vmem:[#allocation3 + $0x10] sm:$0xff]
      %v1684 = vld [vmem:[#allocation3 + $0x18] sm:$0xff]
      %v1685 = vld [vmem:[#allocation3 + $0x20] sm:$0xff]
      %v1686 = vld [vmem:[#allocation3 + $0x28] sm:$0xff]
      %v1687 = vld [vmem:[#allocation3 + $0x30] sm:$0xff]
      %v1688 = vld [vmem:[#allocation3 + $0x38] sm:$0xff]
      %v1689 = vld [vmem:[#allocation3 + $0x40] sm:$0xff]
      %v1690 = vld [vmem:[#allocation3 + $0x48] sm:$0xff]
      %v1691 = vld [vmem:[#allocation3 + $0x50] sm:$0xff]
      %v1692 = vld [vmem:[#allocation3 + $0x58] sm:$0xff]
      %v1693 = vld [vmem:[#allocation3 + $0x60] sm:$0xff]
      %v1694 = vld [vmem:[#allocation3 + $0x68] sm:$0xff]
      %v1695 = vld [vmem:[#allocation3 + $0x70] sm:$0xff]
      %v1696 = vld [vmem:[#allocation3 + $0x78] sm:$0xff]
      %v1697 = vadd.f32 %v1681, %v1665
      %v1698 = vadd.f32 %v1682, %v1666
      %v1699 = vadd.f32 %v1683, %v1667
      %v1700 = vadd.f32 %v1684, %v1668
      %v1701 = vadd.f32 %v1685, %v1669
      %v1702 = vadd.f32 %v1686, %v1670
      %v1703 = vadd.f32 %v1687, %v1671
      %v1704 = vadd.f32 %v1688, %v1672
      %v1705 = vadd.f32 %v1689, %v1673
      %v1706 = vadd.f32 %v1690, %v1674
      %v1707 = vadd.f32 %v1691, %v1675
      %v1708 = vadd.f32 %v1692, %v1676
      %v1709 = vadd.f32 %v1693, %v1677
      %v1710 = vadd.f32 %v1694, %v1678
      %v1711 = vadd.f32 %v1695, %v1679
      %v1712 = vadd.f32 %v1696, %v1680
      %1713 = vst.msk [vmem:[#allocation3] sm:$0xff] %vm266, %v1697
      %1714 = vst.msk [vmem:[#allocation3 + $0x8] sm:$0xff] %vm266, %v1698
      %1715 = vst.msk [vmem:[#allocation3 + $0x10] sm:$0xff] %vm266, %v1699
      %1716 = vst.msk [vmem:[#allocation3 + $0x18] sm:$0xff] %vm266, %v1700
      %1717 = vst.msk [vmem:[#allocation3 + $0x20] sm:$0xff] %vm266, %v1701
      %1718 = vst.msk [vmem:[#allocation3 + $0x28] sm:$0xff] %vm266, %v1702
      %1719 = vst.msk [vmem:[#allocation3 + $0x30] sm:$0xff] %vm266, %v1703
      %1720 = vst.msk [vmem:[#allocation3 + $0x38] sm:$0xff] %vm266, %v1704
      %1721 = vst.msk [vmem:[#allocation3 + $0x40] sm:$0xff] %vm266, %v1705
      %1722 = vst.msk [vmem:[#allocation3 + $0x48] sm:$0xff] %vm266, %v1706
      %1723 = vst.msk [vmem:[#allocation3 + $0x50] sm:$0xff] %vm266, %v1707
      %1724 = vst.msk [vmem:[#allocation3 + $0x58] sm:$0xff] %vm266, %v1708
      %1725 = vst.msk [vmem:[#allocation3 + $0x60] sm:$0xff] %vm266, %v1709
      %1726 = vst.msk [vmem:[#allocation3 + $0x68] sm:$0xff] %vm266, %v1710
      %1727 = vst.msk [vmem:[#allocation3 + $0x70] sm:$0xff] %vm266, %v1711
      %1728 = vst.msk [vmem:[#allocation3 + $0x78] sm:$0xff] %vm266, %v1712
      %v1729 = vld [vmem:[#allocation3] sm:$0xff]
      %v1730 = vld [vmem:[#allocation3 + $0x8] sm:$0xff]
      %v1731 = vld [vmem:[#allocation3 + $0x10] sm:$0xff]
      %v1732 = vld [vmem:[#allocation3 + $0x18] sm:$0xff]
      %v1733 = vld [vmem:[#allocation3 + $0x20] sm:$0xff]
      %v1734 = vld [vmem:[#allocation3 + $0x28] sm:$0xff]
      %v1735 = vld [vmem:[#allocation3 + $0x30] sm:$0xff]
      %v1736 = vld [vmem:[#allocation3 + $0x38] sm:$0xff]
      %v1737 = vld [vmem:[#allocation3 + $0x40] sm:$0xff]
      %v1738 = vld [vmem:[#allocation3 + $0x48] sm:$0xff]
      %v1739 = vld [vmem:[#allocation3 + $0x50] sm:$0xff]
      %v1740 = vld [vmem:[#allocation3 + $0x58] sm:$0xff]
      %v1741 = vld [vmem:[#allocation3 + $0x60] sm:$0xff]
      %v1742 = vld [vmem:[#allocation3 + $0x68] sm:$0xff]
      %v1743 = vld [vmem:[#allocation3 + $0x70] sm:$0xff]
      %v1744 = vld [vmem:[#allocation3 + $0x78] sm:$0xff]
      %v1745 = vld [vmem:[%s2] sm:$0x1]
      %v1747 = vlaneseq
      %v1748 = vshrl.u32 %v1747, 7
      %v1749 = vsub.s32 0, %v1748
      %v1750 = vrot.slane %v1745, %v1749
      %v1752 = vadd.f32 %v1729, %v1750
      %v1753 = vadd.f32 %v1730, %v1750
      %v1754 = vadd.f32 %v1731, %v1750
      %v1755 = vadd.f32 %v1732, %v1750
      %v1756 = vadd.f32 %v1733, %v1750
      %v1757 = vadd.f32 %v1734, %v1750
      %v1758 = vadd.f32 %v1735, %v1750
      %v1759 = vadd.f32 %v1736, %v1750
      %v1760 = vadd.f32 %v1737, %v1750
      %v1761 = vadd.f32 %v1738, %v1750
      %v1762 = vadd.f32 %v1739, %v1750
      %v1763 = vadd.f32 %v1740, %v1750
      %v1764 = vadd.f32 %v1741, %v1750
      %v1765 = vadd.f32 %v1742, %v1750
      %v1766 = vadd.f32 %v1743, %v1750
      %v1767 = vadd.f32 %v1744, %v1750
      %v1768 = vmax.f32 %v1752, 0.0
      %v1769 = vmax.f32 %v1753, 0.0
      %v1770 = vmax.f32 %v1754, 0.0
      %v1771 = vmax.f32 %v1755, 0.0
      %v1772 = vmax.f32 %v1756, 0.0
      %v1773 = vmax.f32 %v1757, 0.0
      %v1774 = vmax.f32 %v1758, 0.0
      %v1775 = vmax.f32 %v1759, 0.0
      %v1776 = vmax.f32 %v1760, 0.0
      %v1777 = vmax.f32 %v1761, 0.0
      %v1778 = vmax.f32 %v1762, 0.0
      %v1779 = vmax.f32 %v1763, 0.0
      %v1780 = vmax.f32 %v1764, 0.0
      %v1781 = vmax.f32 %v1765, 0.0
      %v1782 = vmax.f32 %v1766, 0.0
      %v1783 = vmax.f32 %v1767, 0.0
      %v1784 = vpack.c.bf16 %v1769, %v1768
      %v1785 = vpack.c.bf16 %v1771, %v1770
      %v1786 = vpack.c.bf16 %v1773, %v1772
      %v1787 = vpack.c.bf16 %v1775, %v1774
      %v1788 = vpack.c.bf16 %v1777, %v1776
      %v1789 = vpack.c.bf16 %v1779, %v1778
      %v1790 = vpack.c.bf16 %v1781, %v1780
      %v1791 = vpack.c.bf16 %v1783, %v1782
      %v1800 = vunpack.c.l.b16 %v1784
      %v1801 = vunpack.c.h.b16 %v1784
      %v1802 = vunpack.c.l.b16 %v1785
      %v1803 = vunpack.c.h.b16 %v1785
      %v1804 = vunpack.c.l.b16 %v1786
      %v1805 = vunpack.c.h.b16 %v1786
      %v1806 = vunpack.c.l.b16 %v1787
      %v1807 = vunpack.c.h.b16 %v1787
      %v1808 = vunpack.c.l.b16 %v1788
      %v1809 = vunpack.c.h.b16 %v1788
      %v1810 = vunpack.c.l.b16 %v1789
      %v1811 = vunpack.c.h.b16 %v1789
      %v1812 = vunpack.c.l.b16 %v1790
      %v1813 = vunpack.c.h.b16 %v1790
      %v1814 = vunpack.c.l.b16 %v1791
      %v1815 = vunpack.c.h.b16 %v1791
      %v1816 = vpack.c.b16 %v1800, %v1800
      %v1817 = vpack.c.b16 %v1801, %v1801
      %v1818 = vpack.c.b16 %v1802, %v1802
      %v1819 = vpack.c.b16 %v1803, %v1803
      %v1820 = vpack.c.b16 %v1804, %v1804
      %v1821 = vpack.c.b16 %v1805, %v1805
      %v1822 = vpack.c.b16 %v1806, %v1806
      %v1823 = vpack.c.b16 %v1807, %v1807
      %v1824 = vpack.c.b16 %v1808, %v1808
      %v1825 = vpack.c.b16 %v1809, %v1809
      %v1826 = vpack.c.b16 %v1810, %v1810
      %v1827 = vpack.c.b16 %v1811, %v1811
      %v1828 = vpack.c.b16 %v1812, %v1812
      %v1829 = vpack.c.b16 %v1813, %v1813
      %v1830 = vpack.c.b16 %v1814, %v1814
      %v1831 = vpack.c.b16 %v1815, %v1815
      %vm1848 = vcmask 257024
      %1849 = vst.msk [vmem:[%s194] sm:$0xf] %vm1848, %v1816
      %1850 = vst.msk [vmem:[%s194 + $0x4] sm:$0xf] %vm1848, %v1817
      %1851 = vst.msk [vmem:[%s194 + $0x8] sm:$0xf] %vm1848, %v1818
      %1852 = vst.msk [vmem:[%s194 + $0xc] sm:$0xf] %vm1848, %v1819
      %1853 = vst.msk [vmem:[%s194 + $0x10] sm:$0xf] %vm1848, %v1820
      %1854 = vst.msk [vmem:[%s194 + $0x14] sm:$0xf] %vm1848, %v1821
      %1855 = vst.msk [vmem:[%s194 + $0x18] sm:$0xf] %vm1848, %v1822
      %1856 = vst.msk [vmem:[%s194 + $0x1c] sm:$0xf] %vm1848, %v1823
      %1857 = vst.msk [vmem:[%s194 + $0x20] sm:$0xf] %vm1848, %v1824
      %1858 = vst.msk [vmem:[%s194 + $0x24] sm:$0xf] %vm1848, %v1825
      %1859 = vst.msk [vmem:[%s194 + $0x28] sm:$0xf] %vm1848, %v1826
      %1860 = vst.msk [vmem:[%s194 + $0x2c] sm:$0xf] %vm1848, %v1827
      %1861 = vst.msk [vmem:[%s194 + $0x30] sm:$0xf] %vm1848, %v1828
      %1862 = vst.msk [vmem:[%s194 + $0x34] sm:$0xf] %vm1848, %v1829
      %1863 = vst.msk [vmem:[%s194 + $0x38] sm:$0xf] %vm1848, %v1830
      %1864 = vst.msk [vmem:[%s194 + $0x3c] sm:$0xf] %vm1848, %v1831
      %s1865 = smul.u32 8, %s19
      %p1866 = scmp.lt.s32.totalorder %s18, 1
      %s1867 = scalar_select %p1866, %s18, 1
      %p1868 = scmp.lt.s32.totalorder %s1865, 15
      %s1869 = scalar_select %p1868, %s1865, 15
      %s1870 = smul.addr %s1869, 2
      %s1871 = smul.addr %s1867, 32
      %s1872 = sadd.s32 %s1870, %s1871
      %s1873 = smul.addr %s1872, 4
      %s1874 = scalar_lea.vmem %s3, %s1873
      // Predicated region
      $region33: #{bottleneck_forward.4} parent=31 // pred_check
        %p1875 = pneg %p114
      $region34: #{bottleneck_forward.4} parent=31 // pred_check_branch
        %1877 = sbr.rel (%p1875) target = $region36
      $region35: #{bottleneck_forward.4} parent=31 // pred_region
        %s1878 = smul.u32 8, %s19
      $region36: #{bottleneck_forward.4} parent=31 // pred_fallthru
        _
    $region32: #{bottleneck_forward.4} parent=5 // pred_fallthru
      _
    %p1879 = scmp.le.s32.totalorder 2, %s9
    // Predicated region
    $region37: #{bottleneck_forward.4} parent=5 // pred_check
      %p1880 = pneg %p1879
    $region38: #{bottleneck_forward.4} parent=5 // pred_check_branch
      %1882 = sbr.rel (%p1880) target = $region40
    $region39: #{bottleneck_forward.4} parent=5 // pred_region
      %s1883 = ssub.s32 %s9, 2
      // Predicated region
      $region41: #{bottleneck_forward.4} parent=39 // pred_check
        %p1884 = pneg %p120
      $region42: #{bottleneck_forward.4} parent=39 // pred_check_branch
        %1886 = sbr.rel (%p1884) target = $region44
      $region43: #{bottleneck_forward.4} parent=39 // pred_region
        %s1887 = smul.u32 8, %s21
        %p1888 = scmp.lt.s32.totalorder %s20, 1
        %s1889 = scalar_select %p1888, %s20, 1
        %p1890 = scmp.lt.s32.totalorder %s1887, 15
        %s1891 = scalar_select %p1890, %s1887, 15
        %s1892 = smul.addr %s1891, 2
        %s1893 = smul.addr %s1889, 32
        %s1894 = sadd.s32 %s1892, %s1893
        %s1895 = smul.addr %s1894, 4
        %s1896 = scalar_lea.vmem %s3, %s1895
      $region44: #{bottleneck_forward.4} parent=39 // pred_fallthru
        _
    $region40: #{bottleneck_forward.4} parent=5 // pred_fallthru
      _
  $region6: #{bottleneck_forward.4} parent=0 // loop_footer
    %s13 = sadd.s32 1, %s9
  $region7: #{bottleneck_forward.4} parent=0 // loop_footer_branch
    %8 = sbr.rel target = $region3
  $region8: #{bottleneck_forward.4} parent=0 // loop_exit
    _

</llo_original>
